<compile_context>
chip_gen: v5e
topology: v5e:2x2
jax: 0.10.0
libtpu: 0.0.40
codegen_flags: <defaults>
</compile_context>

<pallas_src>
import functools

import jax
import jax.numpy as jnp
from jax.experimental import pallas as pl
from jax.experimental.pallas import tpu as pltpu

F32 = jnp.float32
BF16 = jnp.bfloat16


def _round_up(x, m):
    return ((x + m - 1) // m) * m


def _ln(x, g, b, eps=1e-5):
    mu = jnp.mean(x, axis=-1, keepdims=True)
    var = jnp.mean(jnp.square(x - mu), axis=-1, keepdims=True)
    return (x - mu) * jax.lax.rsqrt(var + eps) * g + b


# ------------------- Kernel 1: conv stem (im2col matmul) + ReLU ----------------
def conv_stem_kernel(p_ref, w_ref, b_ref, o_ref):
    acc = jnp.dot(p_ref[...], w_ref[...], preferred_element_type=F32) + b_ref[...]
    o_ref[...] = jnp.maximum(acc, 0.0).astype(o_ref.dtype)


def conv_stem(patches, w, b, tile_rows=256):
    m, kdim = patches.shape
    cout = w.shape[1]
    mp = _round_up(m, tile_rows)
    if mp != m:
        patches = jnp.pad(patches, ((0, mp - m), (0, 0)))
    nr = mp // tile_rows
    out = pl.pallas_call(
        conv_stem_kernel,
        out_shape=jax.ShapeDtypeStruct((mp, cout), BF16),
        grid=(nr,),
        in_specs=[
            pl.BlockSpec((tile_rows, kdim), lambda i: (i, 0)),
            pl.BlockSpec((kdim, cout), lambda i: (0, 0)),
            pl.BlockSpec((1, cout), lambda i: (0, 0)),
        ],
        out_specs=pl.BlockSpec((tile_rows, cout), lambda i: (i, 0)),
        compiler_params=pltpu.CompilerParams(
            dimension_semantics=("parallel",)),
    )(patches, w, b)
    return out[:m]


# ---------- Kernel 2: img_proj = Linear(K-tiled) + LayerNorm + ReLU (+pos) -----
def img_proj_kernel(f_ref, w_ref, b_ref, g_ref, be_ref, pos_ref, o_ref, acc):
    k = pl.program_id(0)
    nk = pl.num_programs(0)

    @pl.when(k == 0)
    def _():
        acc[...] = jnp.zeros_like(acc)

    acc[...] += jnp.dot(f_ref[...], w_ref[...], preferred_element_type=F32)

    @pl.when(k == nk - 1)
    def _():
        h = acc[...] + b_ref[...]
        h = _ln(h, g_ref[...], be_ref[...])
        h = jnp.maximum(h, 0.0)           # ReLU; Dropout(0.1) identity at eval
        o_ref[...] = h + pos_ref[...]


def img_proj(feats, w, b, g, be, pos, tk=2048):
    bsz, kdim = feats.shape
    d = w.shape[1]
    tk = min(tk, _round_up(kdim, 128))
    kp = _round_up(kdim, tk)
    if kp != kdim:
        feats = jnp.pad(feats, ((0, 0), (0, kp - kdim)))
        w = jnp.pad(w, ((0, kp - kdim), (0, 0)))
    nk = kp // tk
    return pl.pallas_call(
        img_proj_kernel,
        out_shape=jax.ShapeDtypeStruct((bsz, d), F32),
        grid=(nk,),
        in_specs=[
            pl.BlockSpec((bsz, tk), lambda k: (0, k)),
            pl.BlockSpec((tk, d), lambda k: (k, 0)),
            pl.BlockSpec((1, d), lambda k: (0, 0)),
            pl.BlockSpec((1, d), lambda k: (0, 0)),
            pl.BlockSpec((1, d), lambda k: (0, 0)),
            pl.BlockSpec((1, d), lambda k: (0, 0)),
        ],
        out_specs=pl.BlockSpec((bsz, d), lambda k: (0, 0)),
        scratch_shapes=[pltpu.VMEM((bsz, d), F32)],
        compiler_params=pltpu.CompilerParams(
            dimension_semantics=("arbitrary",)),
    )(feats, w, b, g, be, pos)


# --------- Kernel 3: fused GPT-2 transformer stack (grid = layer x batch) ------
def gpt_stack_kernel(x_ref, ln1g, ln1b, wqkv, bqkv, wo, bo, ln2g, ln2b,
                     wfc, bfc, wpj, bpj, o_ref, x_scr, *, n_head):
    l = pl.program_id(0)
    b = pl.program_id(1)

    @pl.when(l == 0)
    def _():
        x_scr[b] = x_ref[...]            # activation becomes VMEM-resident

    x = x_scr[b]                         # (T, D) f32
    T, D = x.shape
    hd = D // n_head
    scale = 1.0 / (hd ** 0.5)

    # ---- attention: fused QKV projection, per-head scores, fused out-proj ----
    h = _ln(x, ln1g[...], ln1b[...]).astype(BF16)
    qkv = jnp.dot(h, wqkv[...], preferred_element_type=F32) + bqkv[...]  # (T,3D)

    row = jax.lax.broadcasted_iota(jnp.int32, (T, T), 0)
    col = jax.lax.broadcasted_iota(jnp.int32, (T, T), 1)
    causal_bias = jnp.where(col <= row, 0.0, -1e30).astype(F32)   # in-kernel mask

    ctx_heads = []
    for hh in range(n_head):
        q_h = qkv[:, hh * hd:(hh + 1) * hd].astype(BF16)
        k_h = qkv[:, D + hh * hd:D + (hh + 1) * hd].astype(BF16)
        v_h = qkv[:, 2 * D + hh * hd:2 * D + (hh + 1) * hd].astype(BF16)
        s = jnp.einsum('qd,kd->qk', q_h, k_h,
                       preferred_element_type=F32) * scale + causal_bias
        s = s - jnp.max(s, axis=-1, keepdims=True)
        p = jnp.exp(s)
        p = p * pl.reciprocal(jnp.sum(p, axis=-1, keepdims=True), approx=False)
        ctx_heads.append(jnp.dot(p.astype(BF16), v_h,
                                 preferred_element_type=F32))     # (T, hd)
    ctx = jnp.concatenate(ctx_heads, axis=-1)                     # (T, D)
    attn_out = jnp.dot(ctx.astype(BF16), wo[...],
                       preferred_element_type=F32) + bo[...]      # (T, D)
    x = x + attn_out

    # ---- MLP ----
    h2 = _ln(x, ln2g[...], ln2b[...]).astype(BF16)
    f = jnp.dot(h2, wfc[...], preferred_element_type=F32) + bfc[...]
    f = jax.nn.gelu(f, approximate=True)                          # GPT-2 gelu_new
    mlp_out = jnp.dot(f.astype(BF16), wpj[...],
                      preferred_element_type=F32) + bpj[...]
    x = x + mlp_out

    x_scr[b] = x
    o_ref[...] = x                       # block written back each step; last wins


def gpt_stack(x, blk, n_head):
    B, T, D = x.shape
    n_layer = blk['wqkv'].shape[0]

    weights = (blk['ln1g'], blk['ln1b'], blk['wqkv'], blk['bqkv'],
               blk['wo'], blk['bo'], blk['ln2g'], blk['ln2b'],
               blk['wfc'], blk['bfc'], blk['wpj'], blk['bpj'])

    def lspec(shape):
        nd = len(shape)
        return pl.BlockSpec((None,) + tuple(shape[1:]),
                            lambda l, b, _nd=nd: (l,) + (0,) * (_nd - 1))

    in_specs = [pl.BlockSpec((None, T, D), lambda l, b: (b, 0, 0))]
    in_specs += [lspec(w.shape) for w in weights]

    return pl.pallas_call(
        functools.partial(gpt_stack_kernel, n_head=n_head),
        out_shape=jax.ShapeDtypeStruct((B, T, D), F32),
        grid=(n_layer, B),               # layer OUTER, batch INNER: weights stay resident
        in_specs=in_specs,
        out_specs=pl.BlockSpec((None, T, D), lambda l, b: (b, 0, 0)),
        scratch_shapes=[pltpu.VMEM((B, T, D), F32)],
        compiler_params=pltpu.CompilerParams(
            dimension_semantics=("arbitrary", "arbitrary"),
            vmem_limit_bytes=64 * 1024 * 1024),
    )(x, *weights)


# ----- Kernel 4: ln_f + tied lm_head (vocab-tiled) + online-LSE CE loss --------
def lm_head_kernel(x_ref, gf, bf, wt_ref, tgt_ref, logits_ref, nll_ref,
                   h_scr, m_scr, l_scr, p_scr, *, vocab, tv):
    v = pl.program_id(1)
    nv = pl.num_programs(1)

    @pl.when(v == 0)
    def _():
        h_scr[...] = _ln(x_ref[...].astype(F32), gf[...], bf[...]).astype(BF16)
        m_scr[...] = jnp.full_like(m_scr, -jnp.inf)
        l_scr[...] = jnp.zeros_like(l_scr)
        p_scr[...] = jnp.zeros_like(p_scr)

    logits = jnp.dot(h_scr[...], wt_ref[...], preferred_element_type=F32)
    vocab_idx = v * tv + jax.lax.broadcasted_iota(jnp.int32, logits.shape, 1)
    logits = jnp.where(vocab_idx < vocab, logits, -1e30)   # mask padded vocab cols
    logits_ref[...] = logits.astype(logits_ref.dtype)

    # online log-sum-exp over vocab tiles
    m_prev = m_scr[...]
    m_new = jnp.maximum(m_prev, jnp.max(logits, axis=-1, keepdims=True))
    l_scr[...] = (l_scr[...] * jnp.exp(m_prev - m_new)
                  + jnp.sum(jnp.exp(logits - m_new), axis=-1, keepdims=True))
    m_scr[...] = m_new

    # picked logit without a full-vocab one-hot
    tgt = tgt_ref[...]                                      # (tr, 1) int32
    hit = (vocab_idx == tgt)
    p_scr[...] += jnp.sum(jnp.where(hit, logits, 0.0), axis=-1, keepdims=True)

    @pl.when(v == nv - 1)
    def _():
        valid = (tgt_ref[...] != -100)
        lse = m_scr[...] + jnp.log(l_scr[...])
        nll_ref[...] = jnp.where(valid, lse - p_scr[...], 0.0)


def lm_head_loss(x2d, gf, bf, wte_t, targets):
    BT, D = x2d.shape
    V = wte_t.shape[1]

    tr = 256 if BT >= 256 else _round_up(BT, 16)
    BTp = _round_up(BT, tr)
    if V >= 512:
        tv = 512
        Vp = _round_up(V, tv)
    else:
        tv = V
        Vp = V

    if BTp != BT:
        x2d = jnp.pad(x2d, ((0, BTp - BT), (0, 0)))
        targets = jnp.pad(targets, ((0, BTp - BT), (0, 0)), constant_values=-100)
    if Vp != V:
        wte_t = jnp.pad(wte_t, ((0, 0), (0, Vp - V)))

    nr, nv = BTp // tr, Vp // tv
    logits, nll = pl.pallas_call(
        functools.partial(lm_head_kernel, vocab=V, tv=tv),
        out_shape=(jax.ShapeDtypeStruct((BTp, Vp), BF16),
                   jax.ShapeDtypeStruct((BTp, 1), F32)),
        grid=(nr, nv),
        in_specs=[
            pl.BlockSpec((tr, D), lambda r, v: (r, 0)),
            pl.BlockSpec((1, D), lambda r, v: (0, 0)),
            pl.BlockSpec((1, D), lambda r, v: (0, 0)),
            pl.BlockSpec((D, tv), lambda r, v: (0, v)),
            pl.BlockSpec((tr, 1), lambda r, v: (r, 0)),
        ],
        out_specs=(pl.BlockSpec((tr, tv), lambda r, v: (r, v)),
                   pl.BlockSpec((tr, 1), lambda r, v: (r, 0))),
        scratch_shapes=[pltpu.VMEM((tr, D), BF16),
                        pltpu.VMEM((tr, 1), F32),
                        pltpu.VMEM((tr, 1), F32),
                        pltpu.VMEM((tr, 1), F32)],
        compiler_params=pltpu.CompilerParams(
            dimension_semantics=("parallel", "arbitrary"),
            vmem_limit_bytes=64 * 1024 * 1024),
    )(x2d, gf, bf, wte_t, targets)
    return logits[:BT, :V], nll[:BT]


# --------------------------------- glue ----------------------------------------
def init_params(key, cin, cout, ksize, feat_dim, d, vocab, n_layer, n_head,
                max_pos):
    ki = iter(jax.random.split(key, 32))

    def nrm(shape, std=0.02, dtype=F32):
        return (jax.random.normal(next(ki), shape, dtype=F32) * std).astype(dtype)

    params = {
        'conv_w': nrm((cin * ksize * ksize, cout), 0.05, BF16),
        'conv_b': jnp.zeros((1, cout), F32),
        'proj_w': nrm((feat_dim, d), 0.02, BF16),
        'proj_b': jnp.zeros((1, d), F32),
        'proj_g': jnp.ones((1, d), F32),
        'proj_be': jnp.zeros((1, d), F32),
        'img_pos': jax.random.normal(next(ki), (1, d), dtype=F32),
        'wte': nrm((vocab, d), 0.02),
        'wpe': nrm((max_pos, d), 0.01),
        'lnf_g': jnp.ones((1, d), F32),
        'lnf_b': jnp.zeros((1, d), F32),
    }
    # tied lm_head weight, pre-transposed (D, V) so V sits on the lane axis
    params['wte_t'] = params['wte'].T.astype(BF16)
    L = n_layer
    params['blocks'] = {
        'ln1g': jnp.ones((L, 1, d), F32), 'ln1b': jnp.zeros((L, 1, d), F32),
        'wqkv': nrm((L, d, 3 * d), 0.02, BF16),
        'bqkv': jnp.zeros((L, 1, 3 * d), F32),
        'wo': nrm((L, d, d), 0.02, BF16),
        'bo': jnp.zeros((L, 1, d), F32),
        'ln2g': jnp.ones((L, 1, d), F32), 'ln2b': jnp.zeros((L, 1, d), F32),
        'wfc': nrm((L, d, 4 * d), 0.02, BF16),
        'bfc': jnp.zeros((L, 1, 4 * d), F32),
        'wpj': nrm((L, 4 * d, d), 0.02, BF16),
        'bpj': jnp.zeros((L, 1, d), F32),
    }
    return params


def cxr_forward(params, images, input_ids, labels, ksize=4, n_head=4):
    B, C, H, W = images.shape
    S = ksize
    Ho, Wo = H // S, W // S

    # CNN stem (stand-in for frozen ResNet50 trunk, torch.no_grad in reference)
    patches = images.reshape(B, C, Ho, S, Wo, S).transpose(0, 2, 4, 1, 3, 5)
    patches = patches.reshape(B * Ho * Wo, C * S * S).astype(BF16)
    conv_out = conv_stem(patches, params['conv_w'], params['conv_b'])
    cout = params['conv_w'].shape[1]
    feats = conv_out.reshape(B, Ho, Wo, cout).transpose(0, 3, 1, 2).reshape(B, -1)

    # img_proj(feats).unsqueeze(1) + img_pos
    img_token = img_proj(feats, params['proj_w'], params['proj_b'],
                         params['proj_g'], params['proj_be'], params['img_pos'])

    # wte(input_ids), concat image token, + position embeddings (GPT-2 semantics)
    txt_embeds = params['wte'][input_ids]
    x = jnp.concatenate([img_token[:, None, :], txt_embeds], axis=1)
    T_tot = x.shape[1]
    x = x + params['wpe'][None, :T_tot, :]

    # transformer stack (single pallas_call, weights resident across batch)
    x = gpt_stack(x.astype(F32), params['blocks'], n_head)

    # labels = cat([full(-100), labels], 1); shifted CE => per-row next-token tgt
    dummy = jnp.full((labels.shape[0], 1), -100, dtype=jnp.int32)
    full_labels = jnp.concatenate([dummy, labels.astype(jnp.int32)], axis=1)
    targets = jnp.concatenate(
        [full_labels[:, 1:], jnp.full((B, 1), -100, jnp.int32)], axis=1)

    D = x.shape[-1]
    x2d = x.reshape(B * T_tot, D).astype(BF16)
    tgt2d = targets.reshape(B * T_tot, 1)
    logits2d, nll = lm_head_loss(x2d, params['lnf_g'], params['lnf_b'],
                                 params['wte_t'], tgt2d)
    logits = logits2d.reshape(B, T_tot, -1)

    valid = jnp.sum((tgt2d != -100).astype(F32))
    loss = jnp.sum(nll) / jnp.maximum(valid, 1.0)   # trivial scalar reduction
    return loss, logits


if __name__ == "__main__":
    key = jax.random.PRNGKey(0)
    k_img, k_ids, k_lbl, k_par = jax.random.split(key, 4)

    B, C, H, W = 2, 3, 16, 16
    T = 7
    vocab, d, n_layer, n_head = 256, 128, 2, 4
    ksize, cout = 4, 128
    Ho, Wo = H // ksize, W // ksize
    feat_dim = cout * Ho * Wo            # analogue of 2048*7*7 flatten

    images = jax.random.normal(k_img, (B, C, H, W), dtype=F32)
    input_ids = jax.random.randint(k_ids, (B, T), 0, vocab, dtype=jnp.int32)
    labels = jax.random.randint(k_lbl, (B, T), 0, vocab, dtype=jnp.int32)

    params = init_params(k_par, C, cout, ksize, feat_dim, d, vocab,
                         n_layer, n_head, max_pos=T + 1)

    fwd = jax.jit(functools.partial(cxr_forward, ksize=ksize, n_head=n_head))
    loss, logits = fwd(params, images, input_ids, labels)
    jax.block_until_ready((loss, logits))

    assert logits.shape == (B, T + 1, vocab), logits.shape
    assert bool(jnp.isfinite(loss)), loss
    print("KERNEL_OK")
</pallas_src>

<mosaic_0001>
module attributes {stable_mosaic.version = 11 : i64} {
  func.func @img_proj_kernel(%arg0: i32, %arg1: memref<2x2048xbf16, #tpu.memory_space<vmem>>, %arg2: memref<2048x128xbf16, #tpu.memory_space<vmem>>, %arg3: memref<1x128xf32, #tpu.memory_space<vmem>>, %arg4: memref<1x128xf32, #tpu.memory_space<vmem>>, %arg5: memref<1x128xf32, #tpu.memory_space<vmem>>, %arg6: memref<1x128xf32, #tpu.memory_space<vmem>>, %arg7: memref<2x128xf32, #tpu.memory_space<vmem>>, %arg8: memref<2x128xf32, #tpu.memory_space<vmem>>) attributes {dimension_semantics = [#tpu.dimension_semantics<arbitrary>], iteration_bounds = array<i64: 1>, scalar_prefetch = 0 : i64, scratch_operands = 1 : i64, tpu.core_type = #tpu.core_type<tc>, window_params = [{transform_indices = @transform_0, window_bounds = array<i64: 2, 2048>}, {transform_indices = @transform_1, window_bounds = array<i64: 2048, 128>}, {pipeline_mode = #tpu.pipeline_mode<synchronous>, transform_indices = @transform_2, window_bounds = array<i64: 1, 128>}, {pipeline_mode = #tpu.pipeline_mode<synchronous>, transform_indices = @transform_3, window_bounds = array<i64: 1, 128>}, {pipeline_mode = #tpu.pipeline_mode<synchronous>, transform_indices = @transform_4, window_bounds = array<i64: 1, 128>}, {pipeline_mode = #tpu.pipeline_mode<synchronous>, transform_indices = @transform_5, window_bounds = array<i64: 1, 128>}, {pipeline_mode = #tpu.pipeline_mode<synchronous>, transform_indices = @transform_6, window_bounds = array<i64: 2, 128>}]} {
    %c0_i32 = arith.constant 0 : i32
    %0 = arith.cmpi eq, %arg0, %c0_i32 : i32
    %1 = arith.extui %0 : i1 to i32
    %c0_i32_0 = arith.constant 0 : i32
    %2 = arith.cmpi ne, %1, %c0_i32_0 : i32
    scf.if %2 {
      %cst_10 = arith.constant 0.000000e+00 : f32
      %12 = vector.broadcast %cst_10 : f32 to vector<2x128xf32>
      %c0_11 = arith.constant 0 : index
      %c0_12 = arith.constant 0 : index
      %13 = vector.load %arg8[%c0_11, %c0_12] : memref<2x128xf32, #tpu.memory_space<vmem>>, vector<2x128xf32>
      tpu.vector_store %arg8[%c0_11, %c0_12], %12 {strides = array<i32>} : memref<2x128xf32, #tpu.memory_space<vmem>>, vector<2x128xf32>,
    } else {
    }
    %c0 = arith.constant 0 : index
    %c0_1 = arith.constant 0 : index
    %3 = vector.load %arg8[%c0, %c0_1] : memref<2x128xf32, #tpu.memory_space<vmem>>, vector<2x128xf32>
    %c0_2 = arith.constant 0 : index
    %c0_3 = arith.constant 0 : index
    %4 = vector.load %arg1[%c0_2, %c0_3] : memref<2x2048xbf16, #tpu.memory_space<vmem>>, vector<2x2048xbf16>
    %c0_4 = arith.constant 0 : index
    %c0_5 = arith.constant 0 : index
    %5 = vector.load %arg2[%c0_4, %c0_5] : memref<2048x128xbf16, #tpu.memory_space<vmem>>, vector<2048x128xbf16>
    %cst = arith.constant dense<0.000000e+00> : vector<2x128xf32>
    %6 = tpu.matmul %4, %5, %cst {dimension_numbers = #tpu.dot_dimension_numbers<[1], [0], [0], [1], [0, 0, 1, 1], [], []>} : vector<2x2048xbf16>, vector<2048x128xbf16>, vector<2x128xf32> -> vector<2x128xf32>
    %7 = arith.addf %3, %6 : vector<2x128xf32>
    %c0_6 = arith.constant 0 : index
    %c0_7 = arith.constant 0 : index
    %8 = vector.load %arg8[%c0_6, %c0_7] : memref<2x128xf32, #tpu.memory_space<vmem>>, vector<2x128xf32>
    tpu.vector_store %arg8[%c0_6, %c0_7], %7 {strides = array<i32>} : memref<2x128xf32, #tpu.memory_space<vmem>>, vector<2x128xf32>,
    %c0_i32_8 = arith.constant 0 : i32
    %9 = arith.cmpi eq, %arg0, %c0_i32_8 : i32
    %10 = arith.extui %9 : i1 to i32
    %c0_i32_9 = arith.constant 0 : i32
    %11 = arith.cmpi ne, %10, %c0_i32_9 : i32
    scf.if %11 {
      %c0_10 = arith.constant 0 : index
      %c0_11 = arith.constant 0 : index
      %12 = vector.load %arg8[%c0_10, %c0_11] : memref<2x128xf32, #tpu.memory_space<vmem>>, vector<2x128xf32>
      %c0_12 = arith.constant 0 : index
      %c0_13 = arith.constant 0 : index
      %13 = vector.load %arg3[%c0_12, %c0_13] : memref<1x128xf32, #tpu.memory_space<vmem>>, vector<1x128xf32>
      %14 = vector.broadcast %13 : vector<1x128xf32> to vector<2x128xf32>
      %15 = arith.addf %12, %14 : vector<2x128xf32>
      %c0_14 = arith.constant 0 : index
      %c0_15 = arith.constant 0 : index
      %16 = vector.load %arg4[%c0_14, %c0_15] : memref<1x128xf32, #tpu.memory_space<vmem>>, vector<1x128xf32>
      %c0_16 = arith.constant 0 : index
      %c0_17 = arith.constant 0 : index
      %17 = vector.load %arg5[%c0_16, %c0_17] : memref<1x128xf32, #tpu.memory_space<vmem>>, vector<1x128xf32>
      %cst_18 = arith.constant dense<0.000000e+00> : vector<2xf32>
      %18 = vector.multi_reduction <add>, %15, %cst_18 [1] : vector<2x128xf32> to vector<2xf32>
      %19 = vector.shape_cast %18 : vector<2xf32> to vector<2x1xf32>
      %cst_19 = arith.constant 1.280000e+02 : f32
      %20 = vector.broadcast %cst_19 : f32 to vector<2x1xf32>
      %21 = arith.divf %19, %20 : vector<2x1xf32>
      %22 = vector.broadcast %21 : vector<2x1xf32> to vector<2x128xf32>
      %23 = arith.subf %15, %22 : vector<2x128xf32>
      %24 = arith.mulf %23, %23 : vector<2x128xf32>
      %cst_20 = arith.constant dense<0.000000e+00> : vector<2xf32>
      %25 = vector.multi_reduction <add>, %24, %cst_20 [1] : vector<2x128xf32> to vector<2xf32>
      %26 = vector.shape_cast %25 : vector<2xf32> to vector<2x1xf32>
      %cst_21 = arith.constant 1.280000e+02 : f32
      %27 = vector.broadcast %cst_21 : f32 to vector<2x1xf32>
      %28 = arith.divf %26, %27 : vector<2x1xf32>
      %29 = vector.broadcast %21 : vector<2x1xf32> to vector<2x128xf32>
      %30 = arith.subf %15, %29 : vector<2x128xf32>
      %cst_22 = arith.constant 9.99999974E-6 : f32
      %31 = vector.broadcast %cst_22 : f32 to vector<2x1xf32>
      %32 = arith.addf %28, %31 : vector<2x1xf32>
      %33 = math.rsqrt %32 : vector<2x1xf32>
      %34 = vector.broadcast %33 : vector<2x1xf32> to vector<2x128xf32>
      %35 = arith.mulf %30, %34 : vector<2x128xf32>
      %36 = vector.broadcast %16 : vector<1x128xf32> to vector<2x128xf32>
      %37 = arith.mulf %35, %36 : vector<2x128xf32>
      %38 = vector.broadcast %17 : vector<1x128xf32> to vector<2x128xf32>
      %39 = arith.addf %37, %38 : vector<2x128xf32>
      %cst_23 = arith.constant 0.000000e+00 : f32
      %40 = vector.broadcast %cst_23 : f32 to vector<2x128xf32>
      %41 = arith.maximumf %39, %40 : vector<2x128xf32>
      %c0_24 = arith.constant 0 : index
      %c0_25 = arith.constant 0 : index
      %42 = vector.load %arg6[%c0_24, %c0_25] : memref<1x128xf32, #tpu.memory_space<vmem>>, vector<1x128xf32>
      %43 = vector.broadcast %42 : vector<1x128xf32> to vector<2x128xf32>
      %44 = arith.addf %41, %43 : vector<2x128xf32>
      %c0_26 = arith.constant 0 : index
      %c0_27 = arith.constant 0 : index
      %45 = vector.load %arg7[%c0_26, %c0_27] : memref<2x128xf32, #tpu.memory_space<vmem>>, vector<2x128xf32>
      tpu.vector_store %arg7[%c0_26, %c0_27], %44 {strides = array<i32>} : memref<2x128xf32, #tpu.memory_space<vmem>>, vector<2x128xf32>,
    } else {
    }
    return
  }
  func.func @transform_0(%arg0: i32) -> (i32, i32) {
    %c0_i32 = arith.constant 0 : i32
    %c0_i32_0 = arith.constant 0 : i32
    return %c0_i32, %arg0 : i32, i32
  }
  func.func @transform_1(%arg0: i32) -> (i32, i32) {
    %c0_i32 = arith.constant 0 : i32
    %c0_i32_0 = arith.constant 0 : i32
    return %arg0, %c0_i32 : i32, i32
  }
  func.func @transform_2(%arg0: i32) -> (i32, i32) {
    %c0_i32 = arith.constant 0 : i32
    %c0_i32_0 = arith.constant 0 : i32
    %c0_i32_1 = arith.constant 0 : i32
    return %c0_i32, %c0_i32_0 : i32, i32
  }
  func.func @transform_3(%arg0: i32) -> (i32, i32) {
    %c0_i32 = arith.constant 0 : i32
    %c0_i32_0 = arith.constant 0 : i32
    %c0_i32_1 = arith.constant 0 : i32
    return %c0_i32, %c0_i32_0 : i32, i32
  }
  func.func @transform_4(%arg0: i32) -> (i32, i32) {
    %c0_i32 = arith.constant 0 : i32
    %c0_i32_0 = arith.constant 0 : i32
    %c0_i32_1 = arith.constant 0 : i32
    return %c0_i32, %c0_i32_0 : i32, i32
  }
  func.func @transform_5(%arg0: i32) -> (i32, i32) {
    %c0_i32 = arith.constant 0 : i32
    %c0_i32_0 = arith.constant 0 : i32
    %c0_i32_1 = arith.constant 0 : i32
    return %c0_i32, %c0_i32_0 : i32, i32
  }
  func.func @transform_6(%arg0: i32) -> (i32, i32) {
    %c0_i32 = arith.constant 0 : i32
    %c0_i32_0 = arith.constant 0 : i32
    %c0_i32_1 = arith.constant 0 : i32
    return %c0_i32, %c0_i32_0 : i32, i32
  }
}

module attributes {stable_mosaic.version = 11 : i64} {
  func.func @conv_stem_kernel(%arg0: i32, %arg1: memref<256x48xbf16, #tpu.memory_space<vmem>>, %arg2: memref<48x128xbf16, #tpu.memory_space<vmem>>, %arg3: memref<1x128xf32, #tpu.memory_space<vmem>>, %arg4: memref<256x128xbf16, #tpu.memory_space<vmem>>) attributes {dimension_semantics = [#tpu.dimension_semantics<parallel>], iteration_bounds = array<i64: 1>, scalar_prefetch = 0 : i64, scratch_operands = 0 : i64, tpu.core_type = #tpu.core_type<tc>, window_params = [{transform_indices = @transform_0, window_bounds = array<i64: 256, 48>}, {pipeline_mode = #tpu.pipeline_mode<synchronous>, transform_indices = @transform_1, window_bounds = array<i64: 48, 128>}, {pipeline_mode = #tpu.pipeline_mode<synchronous>, transform_indices = @transform_2, window_bounds = array<i64: 1, 128>}, {transform_indices = @transform_3, window_bounds = array<i64: 256, 128>}]} {
    %c0 = arith.constant 0 : index
    %c0_0 = arith.constant 0 : index
    %0 = vector.load %arg1[%c0, %c0_0] : memref<256x48xbf16, #tpu.memory_space<vmem>>, vector<256x48xbf16>
    %c0_1 = arith.constant 0 : index
    %c0_2 = arith.constant 0 : index
    %1 = vector.load %arg2[%c0_1, %c0_2] : memref<48x128xbf16, #tpu.memory_space<vmem>>, vector<48x128xbf16>
    %cst = arith.constant dense<0.000000e+00> : vector<256x128xf32>
    %2 = tpu.matmul %0, %1, %cst {dimension_numbers = #tpu.dot_dimension_numbers<[1], [0], [0], [1], [0, 0, 1, 1], [], []>} : vector<256x48xbf16>, vector<48x128xbf16>, vector<256x128xf32> -> vector<256x128xf32>
    %c0_3 = arith.constant 0 : index
    %c0_4 = arith.constant 0 : index
    %3 = vector.load %arg3[%c0_3, %c0_4] : memref<1x128xf32, #tpu.memory_space<vmem>>, vector<1x128xf32>
    %4 = vector.broadcast %3 : vector<1x128xf32> to vector<256x128xf32>
    %5 = arith.addf %2, %4 : vector<256x128xf32>
    %cst_5 = arith.constant 0.000000e+00 : f32
    %6 = vector.broadcast %cst_5 : f32 to vector<256x128xf32>
    %7 = arith.maximumf %5, %6 : vector<256x128xf32>
    %8 = arith.truncf %7 : vector<256x128xf32> to vector<256x128xbf16>
    %c0_6 = arith.constant 0 : index
    %c0_7 = arith.constant 0 : index
    %9 = vector.load %arg4[%c0_6, %c0_7] : memref<256x128xbf16, #tpu.memory_space<vmem>>, vector<256x128xbf16>
    tpu.vector_store %arg4[%c0_6, %c0_7], %8 {strides = array<i32>} : memref<256x128xbf16, #tpu.memory_space<vmem>>, vector<256x128xbf16>,
    return
  }
  func.func @transform_0(%arg0: i32) -> (i32, i32) {
    %c0_i32 = arith.constant 0 : i32
    %c0_i32_0 = arith.constant 0 : i32
    return %arg0, %c0_i32 : i32, i32
  }
  func.func @transform_1(%arg0: i32) -> (i32, i32) {
    %c0_i32 = arith.constant 0 : i32
    %c0_i32_0 = arith.constant 0 : i32
    %c0_i32_1 = arith.constant 0 : i32
    return %c0_i32, %c0_i32_0 : i32, i32
  }
  func.func @transform_2(%arg0: i32) -> (i32, i32) {
    %c0_i32 = arith.constant 0 : i32
    %c0_i32_0 = arith.constant 0 : i32
    %c0_i32_1 = arith.constant 0 : i32
    return %c0_i32, %c0_i32_0 : i32, i32
  }
  func.func @transform_3(%arg0: i32) -> (i32, i32) {
    %c0_i32 = arith.constant 0 : i32
    %c0_i32_0 = arith.constant 0 : i32
    return %arg0, %c0_i32 : i32, i32
  }
}

module attributes {stable_mosaic.version = 11 : i64} {
  func.func @gpt_stack_kernel(%arg0: i32, %arg1: i32, %arg2: memref<1x8x128xf32, #tpu.memory_space<vmem>>, %arg3: memref<1x1x128xf32, #tpu.memory_space<vmem>>, %arg4: memref<1x1x128xf32, #tpu.memory_space<vmem>>, %arg5: memref<1x128x384xbf16, #tpu.memory_space<vmem>>, %arg6: memref<1x1x384xf32, #tpu.memory_space<vmem>>, %arg7: memref<1x128x128xbf16, #tpu.memory_space<vmem>>, %arg8: memref<1x1x128xf32, #tpu.memory_space<vmem>>, %arg9: memref<1x1x128xf32, #tpu.memory_space<vmem>>, %arg10: memref<1x1x128xf32, #tpu.memory_space<vmem>>, %arg11: memref<1x128x512xbf16, #tpu.memory_space<vmem>>, %arg12: memref<1x1x512xf32, #tpu.memory_space<vmem>>, %arg13: memref<1x512x128xbf16, #tpu.memory_space<vmem>>, %arg14: memref<1x1x128xf32, #tpu.memory_space<vmem>>, %arg15: memref<1x8x128xf32, #tpu.memory_space<vmem>>, %arg16: memref<2x8x128xf32, #tpu.memory_space<vmem>>) attributes {dimension_semantics = [#tpu.dimension_semantics<arbitrary>, #tpu.dimension_semantics<arbitrary>], iteration_bounds = array<i64: 2, 2>, scalar_prefetch = 0 : i64, scratch_operands = 1 : i64, tpu.core_type = #tpu.core_type<tc>, window_params = [{transform_indices = @transform_0, window_bounds = array<i64: 1, 8, 128>}, {transform_indices = @transform_1, window_bounds = array<i64: 1, 1, 128>}, {transform_indices = @transform_2, window_bounds = array<i64: 1, 1, 128>}, {transform_indices = @transform_3, window_bounds = array<i64: 1, 128, 384>}, {transform_indices = @transform_4, window_bounds = array<i64: 1, 1, 384>}, {transform_indices = @transform_5, window_bounds = array<i64: 1, 128, 128>}, {transform_indices = @transform_6, window_bounds = array<i64: 1, 1, 128>}, {transform_indices = @transform_7, window_bounds = array<i64: 1, 1, 128>}, {transform_indices = @transform_8, window_bounds = array<i64: 1, 1, 128>}, {transform_indices = @transform_9, window_bounds = array<i64: 1, 128, 512>}, {transform_indices = @transform_10, window_bounds = array<i64: 1, 1, 512>}, {transform_indices = @transform_11, window_bounds = array<i64: 1, 512, 128>}, {transform_indices = @transform_12, window_bounds = array<i64: 1, 1, 128>}, {transform_indices = @transform_13, window_bounds = array<i64: 1, 8, 128>}]} {
    %c0_i32 = arith.constant 0 : i32
    %0 = arith.cmpi eq, %arg0, %c0_i32 : i32
    %1 = arith.extui %0 : i1 to i32
    %c0_i32_0 = arith.constant 0 : i32
    %2 = arith.cmpi ne, %1, %c0_i32_0 : i32
    scf.if %2 {
      %c0_82 = arith.constant 0 : index
      %c0_83 = arith.constant 0 : index
      %c0_84 = arith.constant 0 : index
      %207 = vector.load %arg2[%c0_82, %c0_83, %c0_84] : memref<1x8x128xf32, #tpu.memory_space<vmem>>, vector<1x8x128xf32>
      %208 = vector.shape_cast %207 : vector<1x8x128xf32> to vector<8x128xf32>
      %209 = arith.index_cast %arg1 : i32 to index
      %c0_85 = arith.constant 0 : index
      %c0_86 = arith.constant 0 : index
      %210 = vector.load %arg16[%209, %c0_85, %c0_86] : memref<2x8x128xf32, #tpu.memory_space<vmem>>, vector<1x8x128xf32>
      %211 = vector.shape_cast %210 : vector<1x8x128xf32> to vector<8x128xf32>
      %212 = vector.shape_cast %208 : vector<8x128xf32> to vector<1x8x128xf32>
      tpu.vector_store %arg16[%209, %c0_85, %c0_86], %212 {strides = array<i32>} : memref<2x8x128xf32, #tpu.memory_space<vmem>>, vector<1x8x128xf32>,
    } else {
    }
    %3 = arith.index_cast %arg1 : i32 to index
    %c0 = arith.constant 0 : index
    %c0_1 = arith.constant 0 : index
    %4 = vector.load %arg16[%3, %c0, %c0_1] : memref<2x8x128xf32, #tpu.memory_space<vmem>>, vector<1x8x128xf32>
    %5 = vector.shape_cast %4 : vector<1x8x128xf32> to vector<8x128xf32>
    %c0_2 = arith.constant 0 : index
    %c0_3 = arith.constant 0 : index
    %c0_4 = arith.constant 0 : index
    %6 = vector.load %arg3[%c0_2, %c0_3, %c0_4] : memref<1x1x128xf32, #tpu.memory_space<vmem>>, vector<1x1x128xf32>
    %7 = vector.shape_cast %6 : vector<1x1x128xf32> to vector<1x128xf32>
    %c0_5 = arith.constant 0 : index
    %c0_6 = arith.constant 0 : index
    %c0_7 = arith.constant 0 : index
    %8 = vector.load %arg4[%c0_5, %c0_6, %c0_7] : memref<1x1x128xf32, #tpu.memory_space<vmem>>, vector<1x1x128xf32>
    %9 = vector.shape_cast %8 : vector<1x1x128xf32> to vector<1x128xf32>
    %cst = arith.constant dense<0.000000e+00> : vector<8xf32>
    %10 = vector.multi_reduction <add>, %5, %cst [1] : vector<8x128xf32> to vector<8xf32>
    %11 = vector.shape_cast %10 : vector<8xf32> to vector<8x1xf32>
    %cst_8 = arith.constant 1.280000e+02 : f32
    %12 = vector.broadcast %cst_8 : f32 to vector<8x1xf32>
    %13 = arith.divf %11, %12 : vector<8x1xf32>
    %14 = vector.broadcast %13 : vector<8x1xf32> to vector<8x128xf32>
    %15 = arith.subf %5, %14 : vector<8x128xf32>
    %16 = arith.mulf %15, %15 : vector<8x128xf32>
    %cst_9 = arith.constant dense<0.000000e+00> : vector<8xf32>
    %17 = vector.multi_reduction <add>, %16, %cst_9 [1] : vector<8x128xf32> to vector<8xf32>
    %18 = vector.shape_cast %17 : vector<8xf32> to vector<8x1xf32>
    %cst_10 = arith.constant 1.280000e+02 : f32
    %19 = vector.broadcast %cst_10 : f32 to vector<8x1xf32>
    %20 = arith.divf %18, %19 : vector<8x1xf32>
    %21 = vector.broadcast %13 : vector<8x1xf32> to vector<8x128xf32>
    %22 = arith.subf %5, %21 : vector<8x128xf32>
    %cst_11 = arith.constant 9.99999974E-6 : f32
    %23 = vector.broadcast %cst_11 : f32 to vector<8x1xf32>
    %24 = arith.addf %20, %23 : vector<8x1xf32>
    %25 = math.rsqrt %24 : vector<8x1xf32>
    %26 = vector.broadcast %25 : vector<8x1xf32> to vector<8x128xf32>
    %27 = arith.mulf %22, %26 : vector<8x128xf32>
    %28 = vector.broadcast %7 : vector<1x128xf32> to vector<8x128xf32>
    %29 = arith.mulf %27, %28 : vector<8x128xf32>
    %30 = vector.broadcast %9 : vector<1x128xf32> to vector<8x128xf32>
    %31 = arith.addf %29, %30 : vector<8x128xf32>
    %32 = arith.truncf %31 : vector<8x128xf32> to vector<8x128xbf16>
    %c0_12 = arith.constant 0 : index
    %c0_13 = arith.constant 0 : index
    %c0_14 = arith.constant 0 : index
    %33 = vector.load %arg5[%c0_12, %c0_13, %c0_14] : memref<1x128x384xbf16, #tpu.memory_space<vmem>>, vector<1x128x384xbf16>
    %34 = vector.shape_cast %33 : vector<1x128x384xbf16> to vector<128x384xbf16>
    %cst_15 = arith.constant dense<0.000000e+00> : vector<8x384xf32>
    %35 = tpu.matmul %32, %34, %cst_15 {dimension_numbers = #tpu.dot_dimension_numbers<[1], [0], [0], [1], [0, 0, 1, 1], [], []>} : vector<8x128xbf16>, vector<128x384xbf16>, vector<8x384xf32> -> vector<8x384xf32>
    %c0_16 = arith.constant 0 : index
    %c0_17 = arith.constant 0 : index
    %c0_18 = arith.constant 0 : index
    %36 = vector.load %arg6[%c0_16, %c0_17, %c0_18] : memref<1x1x384xf32, #tpu.memory_space<vmem>>, vector<1x1x384xf32>
    %37 = vector.shape_cast %36 : vector<1x1x384xf32> to vector<1x384xf32>
    %38 = vector.broadcast %37 : vector<1x384xf32> to vector<8x384xf32>
    %39 = arith.addf %35, %38 : vector<8x384xf32>
    %40 = tpu.iota {dimensions = array<i32: 0>} : vector<8x8xi32>
    %41 = tpu.iota {dimensions = array<i32: 1>} : vector<8x8xi32>
    %42 = arith.cmpi sle, %41, %40 : vector<8x8xi32>
    %cst_19 = arith.constant 0.000000e+00 : f32
    %cst_20 = arith.constant -1.000000e+30 : f32
    %43 = vector.broadcast %cst_19 : f32 to vector<8x8xf32>
    %44 = vector.broadcast %cst_20 : f32 to vector<8x8xf32>
    %45 = arith.select %42, %43, %44 : vector<8x8xi1>, vector<8x8xf32>
    %46 = vector.extract_strided_slice %39 {offsets = [0, 0], sizes = [8, 32], strides = [1, 1]} : vector<8x384xf32> to vector<8x32xf32>
    %47 = arith.truncf %46 : vector<8x32xf32> to vector<8x32xbf16>
    %48 = vector.extract_strided_slice %39 {offsets = [0, 128], sizes = [8, 32], strides = [1, 1]} : vector<8x384xf32> to vector<8x32xf32>
    %49 = arith.truncf %48 : vector<8x32xf32> to vector<8x32xbf16>
    %50 = vector.extract_strided_slice %39 {offsets = [0, 256], sizes = [8, 32], strides = [1, 1]} : vector<8x384xf32> to vector<8x32xf32>
    %51 = arith.truncf %50 : vector<8x32xf32> to vector<8x32xbf16>
    "tpu.trace_start"() <{level = 10 : i32, message = "qd,kd->qk"}> : () -> ()
    %cst_21 = arith.constant dense<0.000000e+00> : vector<8x8xf32>
    %52 = tpu.matmul %47, %49, %cst_21 {dimension_numbers = #tpu.dot_dimension_numbers<[1], [1], [0], [0], [0, 0, 1, 0], [], []>} : vector<8x32xbf16>, vector<8x32xbf16>, vector<8x8xf32> -> vector<8x8xf32>
    "tpu.trace_stop"() : () -> ()
    %cst_22 = arith.constant 0.176776692 : f32
    %53 = vector.broadcast %cst_22 : f32 to vector<8x8xf32>
    %54 = arith.mulf %52, %53 : vector<8x8xf32>
    %55 = arith.addf %54, %45 : vector<8x8xf32>
    %cst_23 = arith.constant dense<0xFF800000> : vector<8xf32>
    %56 = vector.multi_reduction <maximumf>, %55, %cst_23 [1] : vector<8x8xf32> to vector<8xf32>
    %57 = vector.shape_cast %56 : vector<8xf32> to vector<8x1xf32>
    %58 = vector.broadcast %57 : vector<8x1xf32> to vector<8x8xf32>
    %59 = arith.subf %55, %58 : vector<8x8xf32>
    %60 = math.exp %59 : vector<8x8xf32>
    %cst_24 = arith.constant dense<0.000000e+00> : vector<8xf32>
    %61 = vector.multi_reduction <add>, %60, %cst_24 [1] : vector<8x8xf32> to vector<8xf32>
    %62 = vector.shape_cast %61 : vector<8xf32> to vector<8x1xf32>
    %63 = tpu.reciprocal %62 : vector<8x1xf32> -> vector<8x1xf32>
    %64 = vector.broadcast %63 : vector<8x1xf32> to vector<8x8xf32>
    %65 = arith.mulf %60, %64 : vector<8x8xf32>
    %66 = arith.truncf %65 : vector<8x8xf32> to vector<8x8xbf16>
    %cst_25 = arith.constant dense<0.000000e+00> : vector<8x32xf32>
    %67 = tpu.matmul %66, %51, %cst_25 {dimension_numbers = #tpu.dot_dimension_numbers<[1], [0], [0], [1], [0, 0, 1, 1], [], []>} : vector<8x8xbf16>, vector<8x32xbf16>, vector<8x32xf32> -> vector<8x32xf32>
    %68 = vector.extract_strided_slice %39 {offsets = [0, 32], sizes = [8, 32], strides = [1, 1]} : vector<8x384xf32> to vector<8x32xf32>
    %69 = arith.truncf %68 : vector<8x32xf32> to vector<8x32xbf16>
    %70 = vector.extract_strided_slice %39 {offsets = [0, 160], sizes = [8, 32], strides = [1, 1]} : vector<8x384xf32> to vector<8x32xf32>
    %71 = arith.truncf %70 : vector<8x32xf32> to vector<8x32xbf16>
    %72 = vector.extract_strided_slice %39 {offsets = [0, 288], sizes = [8, 32], strides = [1, 1]} : vector<8x384xf32> to vector<8x32xf32>
    %73 = arith.truncf %72 : vector<8x32xf32> to vector<8x32xbf16>
    "tpu.trace_start"() <{level = 10 : i32, message = "qd,kd->qk"}> : () -> ()
    %cst_26 = arith.constant dense<0.000000e+00> : vector<8x8xf32>
    %74 = tpu.matmul %69, %71, %cst_26 {dimension_numbers = #tpu.dot_dimension_numbers<[1], [1], [0], [0], [0, 0, 1, 0], [], []>} : vector<8x32xbf16>, vector<8x32xbf16>, vector<8x8xf32> -> vector<8x8xf32>
    "tpu.trace_stop"() : () -> ()
    %cst_27 = arith.constant 0.176776692 : f32
    %75 = vector.broadcast %cst_27 : f32 to vector<8x8xf32>
    %76 = arith.mulf %74, %75 : vector<8x8xf32>
    %77 = arith.addf %76, %45 : vector<8x8xf32>
    %cst_28 = arith.constant dense<0xFF800000> : vector<8xf32>
    %78 = vector.multi_reduction <maximumf>, %77, %cst_28 [1] : vector<8x8xf32> to vector<8xf32>
    %79 = vector.shape_cast %78 : vector<8xf32> to vector<8x1xf32>
    %80 = vector.broadcast %79 : vector<8x1xf32> to vector<8x8xf32>
    %81 = arith.subf %77, %80 : vector<8x8xf32>
    %82 = math.exp %81 : vector<8x8xf32>
    %cst_29 = arith.constant dense<0.000000e+00> : vector<8xf32>
    %83 = vector.multi_reduction <add>, %82, %cst_29 [1] : vector<8x8xf32> to vector<8xf32>
    %84 = vector.shape_cast %83 : vector<8xf32> to vector<8x1xf32>
    %85 = tpu.reciprocal %84 : vector<8x1xf32> -> vector<8x1xf32>
    %86 = vector.broadcast %85 : vector<8x1xf32> to vector<8x8xf32>
    %87 = arith.mulf %82, %86 : vector<8x8xf32>
    %88 = arith.truncf %87 : vector<8x8xf32> to vector<8x8xbf16>
    %cst_30 = arith.constant dense<0.000000e+00> : vector<8x32xf32>
    %89 = tpu.matmul %88, %73, %cst_30 {dimension_numbers = #tpu.dot_dimension_numbers<[1], [0], [0], [1], [0, 0, 1, 1], [], []>} : vector<8x8xbf16>, vector<8x32xbf16>, vector<8x32xf32> -> vector<8x32xf32>
    %90 = vector.extract_strided_slice %39 {offsets = [0, 64], sizes = [8, 32], strides = [1, 1]} : vector<8x384xf32> to vector<8x32xf32>
    %91 = arith.truncf %90 : vector<8x32xf32> to vector<8x32xbf16>
    %92 = vector.extract_strided_slice %39 {offsets = [0, 192], sizes = [8, 32], strides = [1, 1]} : vector<8x384xf32> to vector<8x32xf32>
    %93 = arith.truncf %92 : vector<8x32xf32> to vector<8x32xbf16>
    %94 = vector.extract_strided_slice %39 {offsets = [0, 320], sizes = [8, 32], strides = [1, 1]} : vector<8x384xf32> to vector<8x32xf32>
    %95 = arith.truncf %94 : vector<8x32xf32> to vector<8x32xbf16>
    "tpu.trace_start"() <{level = 10 : i32, message = "qd,kd->qk"}> : () -> ()
    %cst_31 = arith.constant dense<0.000000e+00> : vector<8x8xf32>
    %96 = tpu.matmul %91, %93, %cst_31 {dimension_numbers = #tpu.dot_dimension_numbers<[1], [1], [0], [0], [0, 0, 1, 0], [], []>} : vector<8x32xbf16>, vector<8x32xbf16>, vector<8x8xf32> -> vector<8x8xf32>
    "tpu.trace_stop"() : () -> ()
    %cst_32 = arith.constant 0.176776692 : f32
    %97 = vector.broadcast %cst_32 : f32 to vector<8x8xf32>
    %98 = arith.mulf %96, %97 : vector<8x8xf32>
    %99 = arith.addf %98, %45 : vector<8x8xf32>
    %cst_33 = arith.constant dense<0xFF800000> : vector<8xf32>
    %100 = vector.multi_reduction <maximumf>, %99, %cst_33 [1] : vector<8x8xf32> to vector<8xf32>
    %101 = vector.shape_cast %100 : vector<8xf32> to vector<8x1xf32>
    %102 = vector.broadcast %101 : vector<8x1xf32> to vector<8x8xf32>
    %103 = arith.subf %99, %102 : vector<8x8xf32>
    %104 = math.exp %103 : vector<8x8xf32>
    %cst_34 = arith.constant dense<0.000000e+00> : vector<8xf32>
    %105 = vector.multi_reduction <add>, %104, %cst_34 [1] : vector<8x8xf32> to vector<8xf32>
    %106 = vector.shape_cast %105 : vector<8xf32> to vector<8x1xf32>
    %107 = tpu.reciprocal %106 : vector<8x1xf32> -> vector<8x1xf32>
    %108 = vector.broadcast %107 : vector<8x1xf32> to vector<8x8xf32>
    %109 = arith.mulf %104, %108 : vector<8x8xf32>
    %110 = arith.truncf %109 : vector<8x8xf32> to vector<8x8xbf16>
    %cst_35 = arith.constant dense<0.000000e+00> : vector<8x32xf32>
    %111 = tpu.matmul %110, %95, %cst_35 {dimension_numbers = #tpu.dot_dimension_numbers<[1], [0], [0], [1], [0, 0, 1, 1], [], []>} : vector<8x8xbf16>, vector<8x32xbf16>, vector<8x32xf32> -> vector<8x32xf32>
    %112 = vector.extract_strided_slice %39 {offsets = [0, 96], sizes = [8, 32], strides = [1, 1]} : vector<8x384xf32> to vector<8x32xf32>
    %113 = arith.truncf %112 : vector<8x32xf32> to vector<8x32xbf16>
    %114 = vector.extract_strided_slice %39 {offsets = [0, 224], sizes = [8, 32], strides = [1, 1]} : vector<8x384xf32> to vector<8x32xf32>
    %115 = arith.truncf %114 : vector<8x32xf32> to vector<8x32xbf16>
    %116 = vector.extract_strided_slice %39 {offsets = [0, 352], sizes = [8, 32], strides = [1, 1]} : vector<8x384xf32> to vector<8x32xf32>
    %117 = arith.truncf %116 : vector<8x32xf32> to vector<8x32xbf16>
    "tpu.trace_start"() <{level = 10 : i32, message = "qd,kd->qk"}> : () -> ()
    %cst_36 = arith.constant dense<0.000000e+00> : vector<8x8xf32>
    %118 = tpu.matmul %113, %115, %cst_36 {dimension_numbers = #tpu.dot_dimension_numbers<[1], [1], [0], [0], [0, 0, 1, 0], [], []>} : vector<8x32xbf16>, vector<8x32xbf16>, vector<8x8xf32> -> vector<8x8xf32>
    "tpu.trace_stop"() : () -> ()
    %cst_37 = arith.constant 0.176776692 : f32
    %119 = vector.broadcast %cst_37 : f32 to vector<8x8xf32>
    %120 = arith.mulf %118, %119 : vector<8x8xf32>
    %121 = arith.addf %120, %45 : vector<8x8xf32>
    %cst_38 = arith.constant dense<0xFF800000> : vector<8xf32>
    %122 = vector.multi_reduction <maximumf>, %121, %cst_38 [1] : vector<8x8xf32> to vector<8xf32>
    %123 = vector.shape_cast %122 : vector<8xf32> to vector<8x1xf32>
    %124 = vector.broadcast %123 : vector<8x1xf32> to vector<8x8xf32>
    %125 = arith.subf %121, %124 : vector<8x8xf32>
    %126 = math.exp %125 : vector<8x8xf32>
    %cst_39 = arith.constant dense<0.000000e+00> : vector<8xf32>
    %127 = vector.multi_reduction <add>, %126, %cst_39 [1] : vector<8x8xf32> to vector<8xf32>
    %128 = vector.shape_cast %127 : vector<8xf32> to vector<8x1xf32>
    %129 = tpu.reciprocal %128 : vector<8x1xf32> -> vector<8x1xf32>
    %130 = vector.broadcast %129 : vector<8x1xf32> to vector<8x8xf32>
    %131 = arith.mulf %126, %130 : vector<8x8xf32>
    %132 = arith.truncf %131 : vector<8x8xf32> to vector<8x8xbf16>
    %cst_40 = arith.constant dense<0.000000e+00> : vector<8x32xf32>
    %133 = tpu.matmul %132, %117, %cst_40 {dimension_numbers = #tpu.dot_dimension_numbers<[1], [0], [0], [1], [0, 0, 1, 1], [], []>} : vector<8x8xbf16>, vector<8x32xbf16>, vector<8x32xf32> -> vector<8x32xf32>
    %134 = tpu.concatenate %67, %89, %111, %133 in 1 : vector<8x32xf32>, vector<8x32xf32>, vector<8x32xf32>, vector<8x32xf32> -> vector<8x128xf32>
    %135 = arith.truncf %134 : vector<8x128xf32> to vector<8x128xbf16>
    %c0_41 = arith.constant 0 : index
    %c0_42 = arith.constant 0 : index
    %c0_43 = arith.constant 0 : index
    %136 = vector.load %arg7[%c0_41, %c0_42, %c0_43] : memref<1x128x128xbf16, #tpu.memory_space<vmem>>, vector<1x128x128xbf16>
    %137 = vector.shape_cast %136 : vector<1x128x128xbf16> to vector<128x128xbf16>
    %cst_44 = arith.constant dense<0.000000e+00> : vector<8x128xf32>
    %138 = tpu.matmul %135, %137, %cst_44 {dimension_numbers = #tpu.dot_dimension_numbers<[1], [0], [0], [1], [0, 0, 1, 1], [], []>} : vector<8x128xbf16>, vector<128x128xbf16>, vector<8x128xf32> -> vector<8x128xf32>
    %c0_45 = arith.constant 0 : index
    %c0_46 = arith.constant 0 : index
    %c0_47 = arith.constant 0 : index
    %139 = vector.load %arg8[%c0_45, %c0_46, %c0_47] : memref<1x1x128xf32, #tpu.memory_space<vmem>>, vector<1x1x128xf32>
    %140 = vector.shape_cast %139 : vector<1x1x128xf32> to vector<1x128xf32>
    %141 = vector.broadcast %140 : vector<1x128xf32> to vector<8x128xf32>
    %142 = arith.addf %138, %141 : vector<8x128xf32>
    %143 = arith.addf %5, %142 : vector<8x128xf32>
    %c0_48 = arith.constant 0 : index
    %c0_49 = arith.constant 0 : index
    %c0_50 = arith.constant 0 : index
    %144 = vector.load %arg9[%c0_48, %c0_49, %c0_50] : memref<1x1x128xf32, #tpu.memory_space<vmem>>, vector<1x1x128xf32>
    %145 = vector.shape_cast %144 : vector<1x1x128xf32> to vector<1x128xf32>
    %c0_51 = arith.constant 0 : index
    %c0_52 = arith.constant 0 : index
    %c0_53 = arith.constant 0 : index
    %146 = vector.load %arg10[%c0_51, %c0_52, %c0_53] : memref<1x1x128xf32, #tpu.memory_space<vmem>>, vector<1x1x128xf32>
    %147 = vector.shape_cast %146 : vector<1x1x128xf32> to vector<1x128xf32>
    %cst_54 = arith.constant dense<0.000000e+00> : vector<8xf32>
    %148 = vector.multi_reduction <add>, %143, %cst_54 [1] : vector<8x128xf32> to vector<8xf32>
    %149 = vector.shape_cast %148 : vector<8xf32> to vector<8x1xf32>
    %cst_55 = arith.constant 1.280000e+02 : f32
    %150 = vector.broadcast %cst_55 : f32 to vector<8x1xf32>
    %151 = arith.divf %149, %150 : vector<8x1xf32>
    %152 = vector.broadcast %151 : vector<8x1xf32> to vector<8x128xf32>
    %153 = arith.subf %143, %152 : vector<8x128xf32>
    %154 = arith.mulf %153, %153 : vector<8x128xf32>
    %cst_56 = arith.constant dense<0.000000e+00> : vector<8xf32>
    %155 = vector.multi_reduction <add>, %154, %cst_56 [1] : vector<8x128xf32> to vector<8xf32>
    %156 = vector.shape_cast %155 : vector<8xf32> to vector<8x1xf32>
    %cst_57 = arith.constant 1.280000e+02 : f32
    %157 = vector.broadcast %cst_57 : f32 to vector<8x1xf32>
    %158 = arith.divf %156, %157 : vector<8x1xf32>
    %159 = vector.broadcast %151 : vector<8x1xf32> to vector<8x128xf32>
    %160 = arith.subf %143, %159 : vector<8x128xf32>
    %cst_58 = arith.constant 9.99999974E-6 : f32
    %161 = vector.broadcast %cst_58 : f32 to vector<8x1xf32>
    %162 = arith.addf %158, %161 : vector<8x1xf32>
    %163 = math.rsqrt %162 : vector<8x1xf32>
    %164 = vector.broadcast %163 : vector<8x1xf32> to vector<8x128xf32>
    %165 = arith.mulf %160, %164 : vector<8x128xf32>
    %166 = vector.broadcast %145 : vector<1x128xf32> to vector<8x128xf32>
    %167 = arith.mulf %165, %166 : vector<8x128xf32>
    %168 = vector.broadcast %147 : vector<1x128xf32> to vector<8x128xf32>
    %169 = arith.addf %167, %168 : vector<8x128xf32>
    %170 = arith.truncf %169 : vector<8x128xf32> to vector<8x128xbf16>
    %c0_59 = arith.constant 0 : index
    %c0_60 = arith.constant 0 : index
    %c0_61 = arith.constant 0 : index
    %171 = vector.load %arg11[%c0_59, %c0_60, %c0_61] : memref<1x128x512xbf16, #tpu.memory_space<vmem>>, vector<1x128x512xbf16>
    %172 = vector.shape_cast %171 : vector<1x128x512xbf16> to vector<128x512xbf16>
    %cst_62 = arith.constant dense<0.000000e+00> : vector<8x512xf32>
    %173 = tpu.matmul %170, %172, %cst_62 {dimension_numbers = #tpu.dot_dimension_numbers<[1], [0], [0], [1], [0, 0, 1, 1], [], []>} : vector<8x128xbf16>, vector<128x512xbf16>, vector<8x512xf32> -> vector<8x512xf32>
    %c0_63 = arith.constant 0 : index
    %c0_64 = arith.constant 0 : index
    %c0_65 = arith.constant 0 : index
    %174 = vector.load %arg12[%c0_63, %c0_64, %c0_65] : memref<1x1x512xf32, #tpu.memory_space<vmem>>, vector<1x1x512xf32>
    %175 = vector.shape_cast %174 : vector<1x1x512xf32> to vector<1x512xf32>
    %176 = vector.broadcast %175 : vector<1x512xf32> to vector<8x512xf32>
    %177 = arith.addf %173, %176 : vector<8x512xf32>
    %178 = arith.mulf %177, %177 : vector<8x512xf32>
    %179 = arith.mulf %177, %178 : vector<8x512xf32>
    %cst_66 = arith.constant 4.471500e-02 : f32
    %180 = vector.broadcast %cst_66 : f32 to vector<8x512xf32>
    %181 = arith.mulf %180, %179 : vector<8x512xf32>
    %182 = arith.addf %177, %181 : vector<8x512xf32>
    %cst_67 = arith.constant 0.797884583 : f32
    %183 = vector.broadcast %cst_67 : f32 to vector<8x512xf32>
    %184 = arith.mulf %183, %182 : vector<8x512xf32>
    %185 = math.tanh %184 : vector<8x512xf32>
    %cst_68 = arith.constant 1.000000e+00 : f32
    %186 = vector.broadcast %cst_68 : f32 to vector<8x512xf32>
    %187 = arith.addf %186, %185 : vector<8x512xf32>
    %cst_69 = arith.constant 5.000000e-01 : f32
    %188 = vector.broadcast %cst_69 : f32 to vector<8x512xf32>
    %189 = arith.mulf %188, %187 : vector<8x512xf32>
    %190 = arith.mulf %177, %189 : vector<8x512xf32>
    %191 = arith.truncf %190 : vector<8x512xf32> to vector<8x512xbf16>
    %c0_70 = arith.constant 0 : index
    %c0_71 = arith.constant 0 : index
    %c0_72 = arith.constant 0 : index
    %192 = vector.load %arg13[%c0_70, %c0_71, %c0_72] : memref<1x512x128xbf16, #tpu.memory_space<vmem>>, vector<1x512x128xbf16>
    %193 = vector.shape_cast %192 : vector<1x512x128xbf16> to vector<512x128xbf16>
    %cst_73 = arith.constant dense<0.000000e+00> : vector<8x128xf32>
    %194 = tpu.matmul %191, %193, %cst_73 {dimension_numbers = #tpu.dot_dimension_numbers<[1], [0], [0], [1], [0, 0, 1, 1], [], []>} : vector<8x512xbf16>, vector<512x128xbf16>, vector<8x128xf32> -> vector<8x128xf32>
    %c0_74 = arith.constant 0 : index
    %c0_75 = arith.constant 0 : index
    %c0_76 = arith.constant 0 : index
    %195 = vector.load %arg14[%c0_74, %c0_75, %c0_76] : memref<1x1x128xf32, #tpu.memory_space<vmem>>, vector<1x1x128xf32>
    %196 = vector.shape_cast %195 : vector<1x1x128xf32> to vector<1x128xf32>
    %197 = vector.broadcast %196 : vector<1x128xf32> to vector<8x128xf32>
    %198 = arith.addf %194, %197 : vector<8x128xf32>
    %199 = arith.addf %143, %198 : vector<8x128xf32>
    %200 = arith.index_cast %arg1 : i32 to index
    %c0_77 = arith.constant 0 : index
    %c0_78 = arith.constant 0 : index
    %201 = vector.load %arg16[%200, %c0_77, %c0_78] : memref<2x8x128xf32, #tpu.memory_space<vmem>>, vector<1x8x128xf32>
    %202 = vector.shape_cast %201 : vector<1x8x128xf32> to vector<8x128xf32>
    %203 = vector.shape_cast %199 : vector<8x128xf32> to vector<1x8x128xf32>
    tpu.vector_store %arg16[%200, %c0_77, %c0_78], %203 {strides = array<i32>} : memref<2x8x128xf32, #tpu.memory_space<vmem>>, vector<1x8x128xf32>,
    %c0_79 = arith.constant 0 : index
    %c0_80 = arith.constant 0 : index
    %c0_81 = arith.constant 0 : index
    %204 = vector.load %arg15[%c0_79, %c0_80, %c0_81] : memref<1x8x128xf32, #tpu.memory_space<vmem>>, vector<1x8x128xf32>
    %205 = vector.shape_cast %204 : vector<1x8x128xf32> to vector<8x128xf32>
    %206 = vector.shape_cast %199 : vector<8x128xf32> to vector<1x8x128xf32>
    tpu.vector_store %arg15[%c0_79, %c0_80, %c0_81], %206 {strides = array<i32>} : memref<1x8x128xf32, #tpu.memory_space<vmem>>, vector<1x8x128xf32>,
    return
  }
  func.func @transform_0(%arg0: i32, %arg1: i32) -> (i32, i32, i32) {
    %c0_i32 = arith.constant 0 : i32
    %c0_i32_0 = arith.constant 0 : i32
    %c0_i32_1 = arith.constant 0 : i32
    return %arg1, %c0_i32, %c0_i32_0 : i32, i32, i32
  }
  func.func @transform_1(%arg0: i32, %arg1: i32) -> (i32, i32, i32) {
    %c0_i32 = arith.constant 0 : i32
    %c0_i32_0 = arith.constant 0 : i32
    %c0_i32_1 = arith.constant 0 : i32
    return %arg0, %c0_i32, %c0_i32_0 : i32, i32, i32
  }
  func.func @transform_2(%arg0: i32, %arg1: i32) -> (i32, i32, i32) {
    %c0_i32 = arith.constant 0 : i32
    %c0_i32_0 = arith.constant 0 : i32
    %c0_i32_1 = arith.constant 0 : i32
    return %arg0, %c0_i32, %c0_i32_0 : i32, i32, i32
  }
  func.func @transform_3(%arg0: i32, %arg1: i32) -> (i32, i32, i32) {
    %c0_i32 = arith.constant 0 : i32
    %c0_i32_0 = arith.constant 0 : i32
    %c0_i32_1 = arith.constant 0 : i32
    return %arg0, %c0_i32, %c0_i32_0 : i32, i32, i32
  }
  func.func @transform_4(%arg0: i32, %arg1: i32) -> (i32, i32, i32) {
    %c0_i32 = arith.constant 0 : i32
    %c0_i32_0 = arith.constant 0 : i32
    %c0_i32_1 = arith.constant 0 : i32
    return %arg0, %c0_i32, %c0_i32_0 : i32, i32, i32
  }
  func.func @transform_5(%arg0: i32, %arg1: i32) -> (i32, i32, i32) {
    %c0_i32 = arith.constant 0 : i32
    %c0_i32_0 = arith.constant 0 : i32
    %c0_i32_1 = arith.constant 0 : i32
    return %arg0, %c0_i32, %c0_i32_0 : i32, i32, i32
  }
  func.func @transform_6(%arg0: i32, %arg1: i32) -> (i32, i32, i32) {
    %c0_i32 = arith.constant 0 : i32
    %c0_i32_0 = arith.constant 0 : i32
    %c0_i32_1 = arith.constant 0 : i32
    return %arg0, %c0_i32, %c0_i32_0 : i32, i32, i32
  }
  func.func @transform_7(%arg0: i32, %arg1: i32) -> (i32, i32, i32) {
    %c0_i32 = arith.constant 0 : i32
    %c0_i32_0 = arith.constant 0 : i32
    %c0_i32_1 = arith.constant 0 : i32
    return %arg0, %c0_i32, %c0_i32_0 : i32, i32, i32
  }
  func.func @transform_8(%arg0: i32, %arg1: i32) -> (i32, i32, i32) {
    %c0_i32 = arith.constant 0 : i32
    %c0_i32_0 = arith.constant 0 : i32
    %c0_i32_1 = arith.constant 0 : i32
    return %arg0, %c0_i32, %c0_i32_0 : i32, i32, i32
  }
  func.func @transform_9(%arg0: i32, %arg1: i32) -> (i32, i32, i32) {
    %c0_i32 = arith.constant 0 : i32
    %c0_i32_0 = arith.constant 0 : i32
    %c0_i32_1 = arith.constant 0 : i32
    return %arg0, %c0_i32, %c0_i32_0 : i32, i32, i32
  }
  func.func @transform_10(%arg0: i32, %arg1: i32) -> (i32, i32, i32) {
    %c0_i32 = arith.constant 0 : i32
    %c0_i32_0 = arith.constant 0 : i32
    %c0_i32_1 = arith.constant 0 : i32
    return %arg0, %c0_i32, %c0_i32_0 : i32, i32, i32
  }
  func.func @transform_11(%arg0: i32, %arg1: i32) -> (i32, i32, i32) {
    %c0_i32 = arith.constant 0 : i32
    %c0_i32_0 = arith.constant 0 : i32
    %c0_i32_1 = arith.constant 0 : i32
    return %arg0, %c0_i32, %c0_i32_0 : i32, i32, i32
  }
  func.func @transform_12(%arg0: i32, %arg1: i32) -> (i32, i32, i32) {
    %c0_i32 = arith.constant 0 : i32
    %c0_i32_0 = arith.constant 0 : i32
    %c0_i32_1 = arith.constant 0 : i32
    return %arg0, %c0_i32, %c0_i32_0 : i32, i32, i32
  }
  func.func @transform_13(%arg0: i32, %arg1: i32) -> (i32, i32, i32) {
    %c0_i32 = arith.constant 0 : i32
    %c0_i32_0 = arith.constant 0 : i32
    %c0_i32_1 = arith.constant 0 : i32
    return %arg1, %c0_i32, %c0_i32_0 : i32, i32, i32
  }
}

module attributes {stable_mosaic.version = 11 : i64} {
  func.func @lm_head_kernel(%arg0: i32, %arg1: i32, %arg2: memref<16x128xbf16, #tpu.memory_space<vmem>>, %arg3: memref<1x128xf32, #tpu.memory_space<vmem>>, %arg4: memref<1x128xf32, #tpu.memory_space<vmem>>, %arg5: memref<128x256xbf16, #tpu.memory_space<vmem>>, %arg6: memref<16x1xi32, #tpu.memory_space<vmem>>, %arg7: memref<16x256xbf16, #tpu.memory_space<vmem>>, %arg8: memref<16x1xf32, #tpu.memory_space<vmem>>, %arg9: memref<16x128xbf16, #tpu.memory_space<vmem>>, %arg10: memref<16x1xf32, #tpu.memory_space<vmem>>, %arg11: memref<16x1xf32, #tpu.memory_space<vmem>>, %arg12: memref<16x1xf32, #tpu.memory_space<vmem>>) attributes {dimension_semantics = [#tpu.dimension_semantics<parallel>, #tpu.dimension_semantics<arbitrary>], iteration_bounds = array<i64: 1, 1>, scalar_prefetch = 0 : i64, scratch_operands = 4 : i64, tpu.core_type = #tpu.core_type<tc>, window_params = [{transform_indices = @transform_0, window_bounds = array<i64: 16, 128>}, {pipeline_mode = #tpu.pipeline_mode<synchronous>, transform_indices = @transform_1, window_bounds = array<i64: 1, 128>}, {pipeline_mode = #tpu.pipeline_mode<synchronous>, transform_indices = @transform_2, window_bounds = array<i64: 1, 128>}, {transform_indices = @transform_3, window_bounds = array<i64: 128, 256>}, {transform_indices = @transform_4, window_bounds = array<i64: 16, 1>}, {transform_indices = @transform_5, window_bounds = array<i64: 16, 256>}, {transform_indices = @transform_6, window_bounds = array<i64: 16, 1>}]} {
    %c0_i32 = arith.constant 0 : i32
    %0 = arith.cmpi eq, %arg1, %c0_i32 : i32
    %1 = arith.extui %0 : i1 to i32
    %c0_i32_0 = arith.constant 0 : i32
    %2 = arith.cmpi ne, %1, %c0_i32_0 : i32
    scf.if %2 {
      %c0_28 = arith.constant 0 : index
      %c0_29 = arith.constant 0 : index
      %45 = vector.load %arg2[%c0_28, %c0_29] : memref<16x128xbf16, #tpu.memory_space<vmem>>, vector<16x128xbf16>
      %46 = arith.extf %45 : vector<16x128xbf16> to vector<16x128xf32>
      %c0_30 = arith.constant 0 : index
      %c0_31 = arith.constant 0 : index
      %47 = vector.load %arg3[%c0_30, %c0_31] : memref<1x128xf32, #tpu.memory_space<vmem>>, vector<1x128xf32>
      %c0_32 = arith.constant 0 : index
      %c0_33 = arith.constant 0 : index
      %48 = vector.load %arg4[%c0_32, %c0_33] : memref<1x128xf32, #tpu.memory_space<vmem>>, vector<1x128xf32>
      %cst_34 = arith.constant dense<0.000000e+00> : vector<16xf32>
      %49 = vector.multi_reduction <add>, %46, %cst_34 [1] : vector<16x128xf32> to vector<16xf32>
      %50 = vector.shape_cast %49 : vector<16xf32> to vector<16x1xf32>
      %cst_35 = arith.constant 1.280000e+02 : f32
      %51 = vector.broadcast %cst_35 : f32 to vector<16x1xf32>
      %52 = arith.divf %50, %51 : vector<16x1xf32>
      %53 = vector.broadcast %52 : vector<16x1xf32> to vector<16x128xf32>
      %54 = arith.subf %46, %53 : vector<16x128xf32>
      %55 = arith.mulf %54, %54 : vector<16x128xf32>
      %cst_36 = arith.constant dense<0.000000e+00> : vector<16xf32>
      %56 = vector.multi_reduction <add>, %55, %cst_36 [1] : vector<16x128xf32> to vector<16xf32>
      %57 = vector.shape_cast %56 : vector<16xf32> to vector<16x1xf32>
      %cst_37 = arith.constant 1.280000e+02 : f32
      %58 = vector.broadcast %cst_37 : f32 to vector<16x1xf32>
      %59 = arith.divf %57, %58 : vector<16x1xf32>
      %60 = vector.broadcast %52 : vector<16x1xf32> to vector<16x128xf32>
      %61 = arith.subf %46, %60 : vector<16x128xf32>
      %cst_38 = arith.constant 9.99999974E-6 : f32
      %62 = vector.broadcast %cst_38 : f32 to vector<16x1xf32>
      %63 = arith.addf %59, %62 : vector<16x1xf32>
      %64 = math.rsqrt %63 : vector<16x1xf32>
      %65 = vector.broadcast %64 : vector<16x1xf32> to vector<16x128xf32>
      %66 = arith.mulf %61, %65 : vector<16x128xf32>
      %67 = vector.broadcast %47 : vector<1x128xf32> to vector<16x128xf32>
      %68 = arith.mulf %66, %67 : vector<16x128xf32>
      %69 = vector.broadcast %48 : vector<1x128xf32> to vector<16x128xf32>
      %70 = arith.addf %68, %69 : vector<16x128xf32>
      %71 = arith.truncf %70 : vector<16x128xf32> to vector<16x128xbf16>
      %c0_39 = arith.constant 0 : index
      %c0_40 = arith.constant 0 : index
      %72 = vector.load %arg9[%c0_39, %c0_40] : memref<16x128xbf16, #tpu.memory_space<vmem>>, vector<16x128xbf16>
      tpu.vector_store %arg9[%c0_39, %c0_40], %71 {strides = array<i32>} : memref<16x128xbf16, #tpu.memory_space<vmem>>, vector<16x128xbf16>,
      %cst_41 = arith.constant 0xFF800000 : f32
      %73 = vector.broadcast %cst_41 : f32 to vector<16x1xf32>
      %c0_42 = arith.constant 0 : index
      %c0_43 = arith.constant 0 : index
      %74 = vector.load %arg10[%c0_42, %c0_43] : memref<16x1xf32, #tpu.memory_space<vmem>>, vector<16x1xf32>
      tpu.vector_store %arg10[%c0_42, %c0_43], %73 {strides = array<i32>} : memref<16x1xf32, #tpu.memory_space<vmem>>, vector<16x1xf32>,
      %cst_44 = arith.constant 0.000000e+00 : f32
      %75 = vector.broadcast %cst_44 : f32 to vector<16x1xf32>
      %c0_45 = arith.constant 0 : index
      %c0_46 = arith.constant 0 : index
      %76 = vector.load %arg11[%c0_45, %c0_46] : memref<16x1xf32, #tpu.memory_space<vmem>>, vector<16x1xf32>
      tpu.vector_store %arg11[%c0_45, %c0_46], %75 {strides = array<i32>} : memref<16x1xf32, #tpu.memory_space<vmem>>, vector<16x1xf32>,
      %cst_47 = arith.constant 0.000000e+00 : f32
      %77 = vector.broadcast %cst_47 : f32 to vector<16x1xf32>
      %c0_48 = arith.constant 0 : index
      %c0_49 = arith.constant 0 : index
      %78 = vector.load %arg12[%c0_48, %c0_49] : memref<16x1xf32, #tpu.memory_space<vmem>>, vector<16x1xf32>
      tpu.vector_store %arg12[%c0_48, %c0_49], %77 {strides = array<i32>} : memref<16x1xf32, #tpu.memory_space<vmem>>, vector<16x1xf32>,
    } else {
    }
    %c0 = arith.constant 0 : index
    %c0_1 = arith.constant 0 : index
    %3 = vector.load %arg9[%c0, %c0_1] : memref<16x128xbf16, #tpu.memory_space<vmem>>, vector<16x128xbf16>
    %c0_2 = arith.constant 0 : index
    %c0_3 = arith.constant 0 : index
    %4 = vector.load %arg5[%c0_2, %c0_3] : memref<128x256xbf16, #tpu.memory_space<vmem>>, vector<128x256xbf16>
    %cst = arith.constant dense<0.000000e+00> : vector<16x256xf32>
    %5 = tpu.matmul %3, %4, %cst {dimension_numbers = #tpu.dot_dimension_numbers<[1], [0], [0], [1], [0, 0, 1, 1], [], []>} : vector<16x128xbf16>, vector<128x256xbf16>, vector<16x256xf32> -> vector<16x256xf32>
    %c256_i32 = arith.constant 256 : i32
    %6 = arith.muli %arg1, %c256_i32 : i32
    %7 = tpu.iota {dimensions = array<i32: 1>} : vector<16x256xi32>
    %8 = vector.broadcast %6 : i32 to vector<16x256xi32>
    %9 = arith.addi %8, %7 : vector<16x256xi32>
    %c256_i32_4 = arith.constant 256 : i32
    %10 = vector.broadcast %c256_i32_4 : i32 to vector<16x256xi32>
    %11 = arith.cmpi slt, %9, %10 : vector<16x256xi32>
    %cst_5 = arith.constant -1.000000e+30 : f32
    %12 = vector.broadcast %cst_5 : f32 to vector<16x256xf32>
    %13 = arith.select %11, %5, %12 : vector<16x256xi1>, vector<16x256xf32>
    %14 = arith.truncf %13 : vector<16x256xf32> to vector<16x256xbf16>
    %c0_6 = arith.constant 0 : index
    %c0_7 = arith.constant 0 : index
    %15 = vector.load %arg7[%c0_6, %c0_7] : memref<16x256xbf16, #tpu.memory_space<vmem>>, vector<16x256xbf16>
    tpu.vector_store %arg7[%c0_6, %c0_7], %14 {strides = array<i32>} : memref<16x256xbf16, #tpu.memory_space<vmem>>, vector<16x256xbf16>,
    %c0_8 = arith.constant 0 : index
    %c0_9 = arith.constant 0 : index
    %16 = vector.load %arg10[%c0_8, %c0_9] : memref<16x1xf32, #tpu.memory_space<vmem>>, vector<16x1xf32>
    %cst_10 = arith.constant dense<0xFF800000> : vector<16xf32>
    %17 = vector.multi_reduction <maximumf>, %13, %cst_10 [1] : vector<16x256xf32> to vector<16xf32>
    %18 = vector.shape_cast %17 : vector<16xf32> to vector<16x1xf32>
    %19 = arith.maximumf %16, %18 : vector<16x1xf32>
    %c0_11 = arith.constant 0 : index
    %c0_12 = arith.constant 0 : index
    %20 = vector.load %arg11[%c0_11, %c0_12] : memref<16x1xf32, #tpu.memory_space<vmem>>, vector<16x1xf32>
    %21 = arith.subf %16, %19 : vector<16x1xf32>
    %22 = math.exp %21 : vector<16x1xf32>
    %23 = arith.mulf %20, %22 : vector<16x1xf32>
    %24 = vector.broadcast %19 : vector<16x1xf32> to vector<16x256xf32>
    %25 = arith.subf %13, %24 : vector<16x256xf32>
    %26 = math.exp %25 : vector<16x256xf32>
    %cst_13 = arith.constant dense<0.000000e+00> : vector<16xf32>
    %27 = vector.multi_reduction <add>, %26, %cst_13 [1] : vector<16x256xf32> to vector<16xf32>
    %28 = vector.shape_cast %27 : vector<16xf32> to vector<16x1xf32>
    %29 = arith.addf %23, %28 : vector<16x1xf32>
    %c0_14 = arith.constant 0 : index
    %c0_15 = arith.constant 0 : index
    %30 = vector.load %arg11[%c0_14, %c0_15] : memref<16x1xf32, #tpu.memory_space<vmem>>, vector<16x1xf32>
    tpu.vector_store %arg11[%c0_14, %c0_15], %29 {strides = array<i32>} : memref<16x1xf32, #tpu.memory_space<vmem>>, vector<16x1xf32>,
    %c0_16 = arith.constant 0 : index
    %c0_17 = arith.constant 0 : index
    %31 = vector.load %arg10[%c0_16, %c0_17] : memref<16x1xf32, #tpu.memory_space<vmem>>, vector<16x1xf32>
    tpu.vector_store %arg10[%c0_16, %c0_17], %19 {strides = array<i32>} : memref<16x1xf32, #tpu.memory_space<vmem>>, vector<16x1xf32>,
    %c0_18 = arith.constant 0 : index
    %c0_19 = arith.constant 0 : index
    %32 = vector.load %arg6[%c0_18, %c0_19] : memref<16x1xi32, #tpu.memory_space<vmem>>, vector<16x1xi32>
    %33 = vector.broadcast %32 : vector<16x1xi32> to vector<16x256xi32>
    %34 = arith.cmpi eq, %9, %33 : vector<16x256xi32>
    %c0_20 = arith.constant 0 : index
    %c0_21 = arith.constant 0 : index
    %35 = vector.load %arg12[%c0_20, %c0_21] : memref<16x1xf32, #tpu.memory_space<vmem>>, vector<16x1xf32>
    %cst_22 = arith.constant 0.000000e+00 : f32
    %36 = vector.broadcast %cst_22 : f32 to vector<16x256xf32>
    %37 = arith.select %34, %13, %36 : vector<16x256xi1>, vector<16x256xf32>
    %cst_23 = arith.constant dense<0.000000e+00> : vector<16xf32>
    %38 = vector.multi_reduction <add>, %37, %cst_23 [1] : vector<16x256xf32> to vector<16xf32>
    %39 = vector.shape_cast %38 : vector<16xf32> to vector<16x1xf32>
    %40 = arith.addf %35, %39 : vector<16x1xf32>
    %c0_24 = arith.constant 0 : index
    %c0_25 = arith.constant 0 : index
    %41 = vector.load %arg12[%c0_24, %c0_25] : memref<16x1xf32, #tpu.memory_space<vmem>>, vector<16x1xf32>
    tpu.vector_store %arg12[%c0_24, %c0_25], %40 {strides = array<i32>} : memref<16x1xf32, #tpu.memory_space<vmem>>, vector<16x1xf32>,
    %c0_i32_26 = arith.constant 0 : i32
    %42 = arith.cmpi eq, %arg1, %c0_i32_26 : i32
    %43 = arith.extui %42 : i1 to i32
    %c0_i32_27 = arith.constant 0 : i32
    %44 = arith.cmpi ne, %43, %c0_i32_27 : i32
    scf.if %44 {
      %c0_28 = arith.constant 0 : index
      %c0_29 = arith.constant 0 : index
      %45 = vector.load %arg6[%c0_28, %c0_29] : memref<16x1xi32, #tpu.memory_space<vmem>>, vector<16x1xi32>
      %c-100_i32 = arith.constant -100 : i32
      %46 = vector.broadcast %c-100_i32 : i32 to vector<16x1xi32>
      %47 = arith.cmpi ne, %45, %46 : vector<16x1xi32>
      %c0_30 = arith.constant 0 : index
      %c0_31 = arith.constant 0 : index
      %48 = vector.load %arg10[%c0_30, %c0_31] : memref<16x1xf32, #tpu.memory_space<vmem>>, vector<16x1xf32>
      %c0_32 = arith.constant 0 : index
      %c0_33 = arith.constant 0 : index
      %49 = vector.load %arg11[%c0_32, %c0_33] : memref<16x1xf32, #tpu.memory_space<vmem>>, vector<16x1xf32>
      %50 = math.log %49 : vector<16x1xf32>
      %51 = arith.addf %48, %50 : vector<16x1xf32>
      %c0_34 = arith.constant 0 : index
      %c0_35 = arith.constant 0 : index
      %52 = vector.load %arg12[%c0_34, %c0_35] : memref<16x1xf32, #tpu.memory_space<vmem>>, vector<16x1xf32>
      %53 = arith.subf %51, %52 : vector<16x1xf32>
      %cst_36 = arith.constant 0.000000e+00 : f32
      %54 = vector.broadcast %cst_36 : f32 to vector<16x1xf32>
      %55 = arith.select %47, %53, %54 : vector<16x1xi1>, vector<16x1xf32>
      %c0_37 = arith.constant 0 : index
      %c0_38 = arith.constant 0 : index
      %56 = vector.load %arg8[%c0_37, %c0_38] : memref<16x1xf32, #tpu.memory_space<vmem>>, vector<16x1xf32>
      tpu.vector_store %arg8[%c0_37, %c0_38], %55 {strides = array<i32>} : memref<16x1xf32, #tpu.memory_space<vmem>>, vector<16x1xf32>,
    } else {
    }
    return
  }
  func.func @transform_0(%arg0: i32, %arg1: i32) -> (i32, i32) {
    %c0_i32 = arith.constant 0 : i32
    %c0_i32_0 = arith.constant 0 : i32
    return %arg0, %c0_i32 : i32, i32
  }
  func.func @transform_1(%arg0: i32, %arg1: i32) -> (i32, i32) {
    %c0_i32 = arith.constant 0 : i32
    %c0_i32_0 = arith.constant 0 : i32
    %c0_i32_1 = arith.constant 0 : i32
    return %c0_i32, %c0_i32_0 : i32, i32
  }
  func.func @transform_2(%arg0: i32, %arg1: i32) -> (i32, i32) {
    %c0_i32 = arith.constant 0 : i32
    %c0_i32_0 = arith.constant 0 : i32
    %c0_i32_1 = arith.constant 0 : i32
    return %c0_i32, %c0_i32_0 : i32, i32
  }
  func.func @transform_3(%arg0: i32, %arg1: i32) -> (i32, i32) {
    %c0_i32 = arith.constant 0 : i32
    %c0_i32_0 = arith.constant 0 : i32
    return %c0_i32, %arg1 : i32, i32
  }
  func.func @transform_4(%arg0: i32, %arg1: i32) -> (i32, i32) {
    %c0_i32 = arith.constant 0 : i32
    %c0_i32_0 = arith.constant 0 : i32
    return %arg0, %c0_i32 : i32, i32
  }
  func.func @transform_5(%arg0: i32, %arg1: i32) -> (i32, i32) {
    %c0_i32 = arith.constant 0 : i32
    return %arg0, %arg1 : i32, i32
  }
  func.func @transform_6(%arg0: i32, %arg1: i32) -> (i32, i32) {
    %c0_i32 = arith.constant 0 : i32
    %c0_i32_0 = arith.constant 0 : i32
    return %arg0, %c0_i32 : i32, i32
  }
}

</mosaic_0001>

<llo_original>
// kernel: cxr_forward.4
$region0: #{cxr_forward.4}
  #allocation0 [shape = 'u32[]', space=smem, size = 0x4, offset = 0x4, fixed_abs, tag = 'smem constant byte address 0x4 - core index']
  #allocation1 [shape = 'u32[72,128]{1,0:T(1,128)}', space=vmem, size = 0x9000, scoped, tag = 'internal scratch']
  %s0 = inlined_call_operand.vmem [shape: bf16[256,48], index: 0, kind: input, shape index: {}]
  %s1 = inlined_call_operand.vmem [shape: bf16[48,128], index: 1, kind: input, shape index: {}]
  %s2 = inlined_call_operand.vmem [shape: f32[1,128], index: 2, kind: input, shape index: {}]
  %s3 = inlined_call_operand.vmem [shape: bf16[256,128], index: 3, kind: output, shape index: {}]
  %s4 = sld [smem:[#allocation0]]
  $region22: #{cxr_forward.4} parent=0
    _
  %s6 = ssub.s32 1, %s4
  %s7 = scalar_select 0, %s6, %s4
  // Predicated region
  $region2: #{cxr_forward.4} parent=0 // pred_check
    _
  $region3: #{cxr_forward.4} parent=0 // pred_check_branch
    %9 = sbr.rel (0) target = $region5
  $region4: #{cxr_forward.4} parent=0 // pred_region
    _
  $region5: #{cxr_forward.4} parent=0 // pred_fallthru
    _
  // Predicated region
  $region6: #{cxr_forward.4} parent=0 // pred_check
    _
  $region7: #{cxr_forward.4} parent=0 // pred_check_branch
    %11 = sbr.rel (0) target = $region9
  $region8: #{cxr_forward.4} parent=0 // pred_region
    _
  $region9: #{cxr_forward.4} parent=0 // pred_fallthru
    _
  // Predicated region
  $region10: #{cxr_forward.4} parent=0 // pred_check
    _
  $region11: #{cxr_forward.4} parent=0 // pred_check_branch
    %13 = sbr.rel (0) target = $region13
  $region12: #{cxr_forward.4} parent=0 // pred_region
    _
  $region13: #{cxr_forward.4} parent=0 // pred_fallthru
    _
  %v15 = vld [vmem:[%s0] sm:$0xf]
  %v16 = vld [vmem:[%s0 + $0x4] sm:$0xf]
  %v17 = vld [vmem:[%s0 + $0x8] sm:$0xf]
  %v18 = vld [vmem:[%s0 + $0xc] sm:$0xf]
  %v19 = vld [vmem:[%s0 + $0x10] sm:$0xf]
  %v20 = vld [vmem:[%s0 + $0x14] sm:$0xf]
  %v21 = vld [vmem:[%s0 + $0x18] sm:$0xf]
  %v22 = vld [vmem:[%s0 + $0x1c] sm:$0xf]
  %v23 = vld [vmem:[%s0 + $0x20] sm:$0xf]
  %v24 = vld [vmem:[%s0 + $0x24] sm:$0xf]
  %v25 = vld [vmem:[%s0 + $0x28] sm:$0xf]
  %v26 = vld [vmem:[%s0 + $0x2c] sm:$0xf]
  %v27 = vld [vmem:[%s0 + $0x30] sm:$0xf]
  %v28 = vld [vmem:[%s0 + $0x34] sm:$0xf]
  %v29 = vld [vmem:[%s0 + $0x38] sm:$0xf]
  %v30 = vld [vmem:[%s0 + $0x3c] sm:$0xf]
  %v31 = vld [vmem:[%s0 + $0x40] sm:$0xf]
  %v32 = vld [vmem:[%s0 + $0x44] sm:$0xf]
  %v33 = vld [vmem:[%s0 + $0x48] sm:$0xf]
  %v34 = vld [vmem:[%s0 + $0x4c] sm:$0xf]
  %v35 = vld [vmem:[%s0 + $0x50] sm:$0xf]
  %v36 = vld [vmem:[%s0 + $0x54] sm:$0xf]
  %v37 = vld [vmem:[%s0 + $0x58] sm:$0xf]
  %v38 = vld [vmem:[%s0 + $0x5c] sm:$0xf]
  %v39 = vld [vmem:[%s0 + $0x60] sm:$0xf]
  %v40 = vld [vmem:[%s0 + $0x64] sm:$0xf]
  %v41 = vld [vmem:[%s0 + $0x68] sm:$0xf]
  %v42 = vld [vmem:[%s0 + $0x6c] sm:$0xf]
  %v43 = vld [vmem:[%s0 + $0x70] sm:$0xf]
  %v44 = vld [vmem:[%s0 + $0x74] sm:$0xf]
  %v45 = vld [vmem:[%s0 + $0x78] sm:$0xf]
  %v46 = vld [vmem:[%s0 + $0x7c] sm:$0xf]
  %v47 = vld [vmem:[%s1] sm:$0xf]
  %v48 = vld [vmem:[%s1 + $0x4] sm:$0xf]
  %v49 = vld [vmem:[%s1 + $0x8] sm:$0xf]
  %v50 = vld [vmem:[%s1 + $0xc] sm:$0xf]
  %v51 = vld [vmem:[%s1 + $0x10] sm:$0xf]
  %v52 = vld [vmem:[%s1 + $0x14] sm:$0xf]
  %v53 = vld [vmem:[%s2] sm:$0x1]
  %v55 = vperm.slane %v53, 0
  %v89 = vunpack.c.l.b16 %v15
  %v90 = vunpack.c.l.b16 %v16
  %v91 = vunpack.c.l.b16 %v17
  %v92 = vunpack.c.l.b16 %v18
  %v93 = vunpack.c.l.b16 %v19
  %v94 = vunpack.c.l.b16 %v20
  %v95 = vunpack.c.l.b16 %v21
  %v96 = vunpack.c.l.b16 %v22
  %v97 = vunpack.c.l.b16 %v23
  %v98 = vunpack.c.l.b16 %v24
  %v99 = vunpack.c.l.b16 %v25
  %v100 = vunpack.c.l.b16 %v26
  %v101 = vunpack.c.l.b16 %v27
  %v102 = vunpack.c.l.b16 %v28
  %v103 = vunpack.c.l.b16 %v29
  %v104 = vunpack.c.l.b16 %v30
  %v105 = vunpack.c.l.b16 %v31
  %v106 = vunpack.c.l.b16 %v32
  %v107 = vunpack.c.l.b16 %v33
  %v108 = vunpack.c.l.b16 %v34
  %v109 = vunpack.c.l.b16 %v35
  %v110 = vunpack.c.l.b16 %v36
  %v111 = vunpack.c.l.b16 %v37
  %v112 = vunpack.c.l.b16 %v38
  %v113 = vunpack.c.l.b16 %v39
  %v114 = vunpack.c.l.b16 %v40
  %v115 = vunpack.c.l.b16 %v41
  %v116 = vunpack.c.l.b16 %v42
  %v117 = vunpack.c.l.b16 %v43
  %v118 = vunpack.c.l.b16 %v44
  %v119 = vunpack.c.l.b16 %v45
  %v120 = vunpack.c.l.b16 %v46
  %v121 = vpack.c.b16 %v90, %v89
  %v122 = vpack.c.b16 %v92, %v91
  %v123 = vpack.c.b16 %v94, %v93
  %v124 = vpack.c.b16 %v96, %v95
  %v125 = vpack.c.b16 %v98, %v97
  %v126 = vpack.c.b16 %v100, %v99
  %v127 = vpack.c.b16 %v102, %v101
  %v128 = vpack.c.b16 %v104, %v103
  %v129 = vpack.c.b16 %v106, %v105
  %v130 = vpack.c.b16 %v108, %v107
  %v131 = vpack.c.b16 %v110, %v109
  %v132 = vpack.c.b16 %v112, %v111
  %v133 = vpack.c.b16 %v114, %v113
  %v134 = vpack.c.b16 %v116, %v115
  %v135 = vpack.c.b16 %v118, %v117
  %v136 = vpack.c.b16 %v120, %v119
  %v143 = vunpack.c.l.b16 %v47
  %v144 = vunpack.c.l.b16 %v48
  %v145 = vunpack.c.l.b16 %v49
  %v146 = vunpack.c.l.b16 %v50
  %v147 = vunpack.c.l.b16 %v51
  %v148 = vunpack.c.l.b16 %v52
  %v149 = vpack.c.b16 %v144, %v143
  %v150 = vpack.c.b16 %v146, %v145
  %v151 = vpack.c.b16 %v148, %v147
  %vm155 = vcmask 392192
  %v157 = vsel %vm155, %v121, 0
  %v160 = vsel %vm155, %v122, 0
  %v163 = vsel %vm155, %v123, 0
  %v166 = vsel %vm155, %v124, 0
  %v169 = vsel %vm155, %v125, 0
  %v172 = vsel %vm155, %v126, 0
  %v175 = vsel %vm155, %v127, 0
  %v178 = vsel %vm155, %v128, 0
  %v181 = vsel %vm155, %v129, 0
  %v184 = vsel %vm155, %v130, 0
  %v187 = vsel %vm155, %v131, 0
  %v190 = vsel %vm155, %v132, 0
  %v193 = vsel %vm155, %v133, 0
  %v196 = vsel %vm155, %v134, 0
  %v199 = vsel %vm155, %v135, 0
  %v202 = vsel %vm155, %v136, 0
  %204 = vmatpush.bf16.msra.mxu0 0
  %205 = vmatpush.bf16.msra.mxu0 0
  %206 = vmatpush.bf16.msra.mxu0 0
  %207 = vmatpush.bf16.msra.mxu0 0
  %208 = vmatpush.bf16.msra.mxu0 0
  %209 = vmatpush.bf16.msra.mxu0 %v151
  %210 = vmatpush.bf16.msra.mxu0 %v150
  %211 = vmatpush.bf16.msra.mxu0 %v149
  %212 = vmatmul.bf16.gmra.mxu0 %v157
  %v213 = vpop.f32.mrf.mxu0
  %v214 = vadd.f32 %v55, %v213
  %v215 = vpop.f32.mrf.mxu0
  %v216 = vadd.f32 %v55, %v215
  %217 = vmatmul.bf16.gmra.mxu0 %v160
  %v218 = vpop.f32.mrf.mxu0
  %v219 = vadd.f32 %v55, %v218
  %v220 = vpop.f32.mrf.mxu0
  %v221 = vadd.f32 %v55, %v220
  %222 = vmatmul.bf16.gmra.mxu0 %v163
  %v223 = vpop.f32.mrf.mxu0
  %v224 = vadd.f32 %v55, %v223
  %v225 = vpop.f32.mrf.mxu0
  %v226 = vadd.f32 %v55, %v225
  %227 = vmatmul.bf16.gmra.mxu0 %v166
  %v228 = vpop.f32.mrf.mxu0
  %v229 = vadd.f32 %v55, %v228
  %v230 = vpop.f32.mrf.mxu0
  %v231 = vadd.f32 %v55, %v230
  %232 = vmatmul.bf16.gmra.mxu0 %v169
  %v233 = vpop.f32.mrf.mxu0
  %v234 = vadd.f32 %v55, %v233
  %v235 = vpop.f32.mrf.mxu0
  %v236 = vadd.f32 %v55, %v235
  %237 = vmatmul.bf16.gmra.mxu0 %v172
  %v238 = vpop.f32.mrf.mxu0
  %v239 = vadd.f32 %v55, %v238
  %v240 = vpop.f32.mrf.mxu0
  %v241 = vadd.f32 %v55, %v240
  %242 = vmatmul.bf16.gmra.mxu0 %v175
  %v243 = vpop.f32.mrf.mxu0
  %v244 = vadd.f32 %v55, %v243
  %v245 = vpop.f32.mrf.mxu0
  %v246 = vadd.f32 %v55, %v245
  %247 = vmatmul.bf16.gmra.mxu0 %v178
  %v248 = vpop.f32.mrf.mxu0
  %v249 = vadd.f32 %v55, %v248
  %v250 = vpop.f32.mrf.mxu0
  %v251 = vadd.f32 %v55, %v250
  %252 = vmatmul.bf16.gmra.mxu0 %v181
  %v253 = vpop.f32.mrf.mxu0
  %v254 = vadd.f32 %v55, %v253
  %v255 = vpop.f32.mrf.mxu0
  %v256 = vadd.f32 %v55, %v255
  %257 = vmatmul.bf16.gmra.mxu0 %v184
  %v258 = vpop.f32.mrf.mxu0
  %v259 = vadd.f32 %v55, %v258
  %v260 = vpop.f32.mrf.mxu0
  %v261 = vadd.f32 %v55, %v260
  %262 = vmatmul.bf16.gmra.mxu0 %v187
  %v263 = vpop.f32.mrf.mxu0
  %v264 = vadd.f32 %v55, %v263
  %v265 = vpop.f32.mrf.mxu0
  %v266 = vadd.f32 %v55, %v265
  %267 = vmatmul.bf16.gmra.mxu0 %v190
  %v268 = vpop.f32.mrf.mxu0
  %v269 = vadd.f32 %v55, %v268
  %v270 = vpop.f32.mrf.mxu0
  %v271 = vadd.f32 %v55, %v270
  %272 = vmatmul.bf16.gmra.mxu0 %v193
  %v273 = vpop.f32.mrf.mxu0
  %v274 = vadd.f32 %v55, %v273
  %v275 = vpop.f32.mrf.mxu0
  %v276 = vadd.f32 %v55, %v275
  %277 = vmatmul.bf16.gmra.mxu0 %v196
  %v278 = vpop.f32.mrf.mxu0
  %v279 = vadd.f32 %v55, %v278
  %v280 = vpop.f32.mrf.mxu0
  %v281 = vadd.f32 %v55, %v280
  %282 = vmatmul.bf16.gmra.mxu0 %v199
  %v283 = vpop.f32.mrf.mxu0
  %v284 = vadd.f32 %v55, %v283
  %v285 = vpop.f32.mrf.mxu0
  %v286 = vadd.f32 %v55, %v285
  %287 = vmatmul.bf16.gmra.mxu0 %v202
  %v288 = vpop.f32.mrf.mxu0
  %v289 = vadd.f32 %v55, %v288
  %v290 = vpop.f32.mrf.mxu0
  %v291 = vadd.f32 %v55, %v290
  %292 = vdwg.mxu0
  %v293 = vmax.f32 %v214, 0.0
  %v294 = vmax.f32 %v216, 0.0
  %v295 = vmax.f32 %v219, 0.0
  %v296 = vmax.f32 %v221, 0.0
  %v297 = vmax.f32 %v224, 0.0
  %v298 = vmax.f32 %v226, 0.0
  %v299 = vmax.f32 %v229, 0.0
  %v300 = vmax.f32 %v231, 0.0
  %v301 = vmax.f32 %v234, 0.0
  %v302 = vmax.f32 %v236, 0.0
  %v303 = vmax.f32 %v239, 0.0
  %v304 = vmax.f32 %v241, 0.0
  %v305 = vmax.f32 %v244, 0.0
  %v306 = vmax.f32 %v246, 0.0
  %v307 = vmax.f32 %v249, 0.0
  %v308 = vmax.f32 %v251, 0.0
  %v309 = vmax.f32 %v254, 0.0
  %v310 = vmax.f32 %v256, 0.0
  %v311 = vmax.f32 %v259, 0.0
  %v312 = vmax.f32 %v261, 0.0
  %v313 = vmax.f32 %v264, 0.0
  %v314 = vmax.f32 %v266, 0.0
  %v315 = vmax.f32 %v269, 0.0
  %v316 = vmax.f32 %v271, 0.0
  %v317 = vmax.f32 %v274, 0.0
  %v318 = vmax.f32 %v276, 0.0
  %v319 = vmax.f32 %v279, 0.0
  %v320 = vmax.f32 %v281, 0.0
  %v321 = vmax.f32 %v284, 0.0
  %v322 = vmax.f32 %v286, 0.0
  %v323 = vmax.f32 %v289, 0.0
  %v324 = vmax.f32 %v291, 0.0
  %v325 = vpack.c.bf16 %v293, %v293
  %v326 = vpack.c.bf16 %v294, %v294
  %v327 = vpack.c.bf16 %v295, %v295
  %v328 = vpack.c.bf16 %v296, %v296
  %v329 = vpack.c.bf16 %v297, %v297
  %v330 = vpack.c.bf16 %v298, %v298
  %v331 = vpack.c.bf16 %v299, %v299
  %v332 = vpack.c.bf16 %v300, %v300
  %v333 = vpack.c.bf16 %v301, %v301
  %v334 = vpack.c.bf16 %v302, %v302
  %v335 = vpack.c.bf16 %v303, %v303
  %v336 = vpack.c.bf16 %v304, %v304
  %v337 = vpack.c.bf16 %v305, %v305
  %v338 = vpack.c.bf16 %v306, %v306
  %v339 = vpack.c.bf16 %v307, %v307
  %v340 = vpack.c.bf16 %v308, %v308
  %v341 = vpack.c.bf16 %v309, %v309
  %v342 = vpack.c.bf16 %v310, %v310
  %v343 = vpack.c.bf16 %v311, %v311
  %v344 = vpack.c.bf16 %v312, %v312
  %v345 = vpack.c.bf16 %v313, %v313
  %v346 = vpack.c.bf16 %v314, %v314
  %v347 = vpack.c.bf16 %v315, %v315
  %v348 = vpack.c.bf16 %v316, %v316
  %v349 = vpack.c.bf16 %v317, %v317
  %v350 = vpack.c.bf16 %v318, %v318
  %v351 = vpack.c.bf16 %v319, %v319
  %v352 = vpack.c.bf16 %v320, %v320
  %v353 = vpack.c.bf16 %v321, %v321
  %v354 = vpack.c.bf16 %v322, %v322
  %v355 = vpack.c.bf16 %v323, %v323
  %v356 = vpack.c.bf16 %v324, %v324
  %357 = vst [vmem:[%s3] sm:$0xf] %v325
  %358 = vst [vmem:[%s3 + $0x4] sm:$0xf] %v326
  %359 = vst [vmem:[%s3 + $0x8] sm:$0xf] %v327
  %360 = vst [vmem:[%s3 + $0xc] sm:$0xf] %v328
  %361 = vst [vmem:[%s3 + $0x10] sm:$0xf] %v329
  %362 = vst [vmem:[%s3 + $0x14] sm:$0xf] %v330
  %363 = vst [vmem:[%s3 + $0x18] sm:$0xf] %v331
  %364 = vst [vmem:[%s3 + $0x1c] sm:$0xf] %v332
  %365 = vst [vmem:[%s3 + $0x20] sm:$0xf] %v333
  %366 = vst [vmem:[%s3 + $0x24] sm:$0xf] %v334
  %367 = vst [vmem:[%s3 + $0x28] sm:$0xf] %v335
  %368 = vst [vmem:[%s3 + $0x2c] sm:$0xf] %v336
  %369 = vst [vmem:[%s3 + $0x30] sm:$0xf] %v337
  %370 = vst [vmem:[%s3 + $0x34] sm:$0xf] %v338
  %371 = vst [vmem:[%s3 + $0x38] sm:$0xf] %v339
  %372 = vst [vmem:[%s3 + $0x3c] sm:$0xf] %v340
  %373 = vst [vmem:[%s3 + $0x40] sm:$0xf] %v341
  %374 = vst [vmem:[%s3 + $0x44] sm:$0xf] %v342
  %375 = vst [vmem:[%s3 + $0x48] sm:$0xf] %v343
  %376 = vst [vmem:[%s3 + $0x4c] sm:$0xf] %v344
  %377 = vst [vmem:[%s3 + $0x50] sm:$0xf] %v345
  %378 = vst [vmem:[%s3 + $0x54] sm:$0xf] %v346
  %379 = vst [vmem:[%s3 + $0x58] sm:$0xf] %v347
  %380 = vst [vmem:[%s3 + $0x5c] sm:$0xf] %v348
  %381 = vst [vmem:[%s3 + $0x60] sm:$0xf] %v349
  %382 = vst [vmem:[%s3 + $0x64] sm:$0xf] %v350
  %383 = vst [vmem:[%s3 + $0x68] sm:$0xf] %v351
  %384 = vst [vmem:[%s3 + $0x6c] sm:$0xf] %v352
  %385 = vst [vmem:[%s3 + $0x70] sm:$0xf] %v353
  %386 = vst [vmem:[%s3 + $0x74] sm:$0xf] %v354
  %387 = vst [vmem:[%s3 + $0x78] sm:$0xf] %v355
  %388 = vst [vmem:[%s3 + $0x7c] sm:$0xf] %v356
  // Predicated region
  $region14: #{cxr_forward.4} parent=0 // pred_check
    _
  $region15: #{cxr_forward.4} parent=0 // pred_check_branch
    %390 = sbr.rel (0) target = $region17
  $region16: #{cxr_forward.4} parent=0 // pred_region
    _
  $region17: #{cxr_forward.4} parent=0 // pred_fallthru
    _
  // Predicated region
  $region18: #{cxr_forward.4} parent=0 // pred_check
    _
  $region19: #{cxr_forward.4} parent=0 // pred_check_branch
    %392 = sbr.rel (0) target = $region21
  $region20: #{cxr_forward.4} parent=0 // pred_region
    _
  $region21: #{cxr_forward.4} parent=0 // pred_fallthru
    _

// kernel: cxr_forward.5
$region0: #{cxr_forward.5}
  #allocation0 [shape = 'u32[]', space=smem, size = 0x4, offset = 0x4, fixed_abs, tag = 'smem constant byte address 0x4 - core index']
  #allocation1 [shape = 'u32[72,128]{1,0:T(1,128)}', space=vmem, size = 0x9000, scoped, tag = 'internal scratch']
  #allocation2 [shape = 'f32[2,128]{1,0:T(2,128)}', space=vmem, size = 0x400, scoped, tag = 'scratch operand']
  %s0 = inlined_call_operand.vmem [shape: bf16[2,2048], index: 0, kind: input, shape index: {}]
  %s1 = inlined_call_operand.vmem [shape: bf16[2048,128], index: 1, kind: input, shape index: {}]
  %s2 = inlined_call_operand.vmem [shape: f32[1,128], index: 2, kind: input, shape index: {}]
  %s3 = inlined_call_operand.vmem [shape: f32[1,128], index: 3, kind: input, shape index: {}]
  %s4 = inlined_call_operand.vmem [shape: f32[1,128], index: 4, kind: input, shape index: {}]
  %s5 = inlined_call_operand.vmem [shape: f32[1,128], index: 5, kind: input, shape index: {}]
  %s6 = inlined_call_operand.vmem [shape: f32[2,128], index: 6, kind: output, shape index: {}]
  %s7 = sld [smem:[#allocation0]]
  $region42: #{cxr_forward.5} parent=0
    _
  %s9 = ssub.s32 1, %s7
  %s10 = scalar_select 0, %s9, %s7
  // Predicated region
  $region2: #{cxr_forward.5} parent=0 // pred_check
    _
  $region3: #{cxr_forward.5} parent=0 // pred_check_branch
    %12 = sbr.rel (0) target = $region5
  $region4: #{cxr_forward.5} parent=0 // pred_region
    _
  $region5: #{cxr_forward.5} parent=0 // pred_fallthru
    _
  // Predicated region
  $region6: #{cxr_forward.5} parent=0 // pred_check
    _
  $region7: #{cxr_forward.5} parent=0 // pred_check_branch
    %14 = sbr.rel (0) target = $region9
  $region8: #{cxr_forward.5} parent=0 // pred_region
    _
  $region9: #{cxr_forward.5} parent=0 // pred_fallthru
    _
  // Predicated region
  $region10: #{cxr_forward.5} parent=0 // pred_check
    _
  $region11: #{cxr_forward.5} parent=0 // pred_check_branch
    %16 = sbr.rel (0) target = $region13
  $region12: #{cxr_forward.5} parent=0 // pred_region
    _
  $region13: #{cxr_forward.5} parent=0 // pred_fallthru
    _
  // Predicated region
  $region14: #{cxr_forward.5} parent=0 // pred_check
    _
  $region15: #{cxr_forward.5} parent=0 // pred_check_branch
    %18 = sbr.rel (0) target = $region17
  $region16: #{cxr_forward.5} parent=0 // pred_region
    _
  $region17: #{cxr_forward.5} parent=0 // pred_fallthru
    _
  // Predicated region
  $region18: #{cxr_forward.5} parent=0 // pred_check
    _
  $region19: #{cxr_forward.5} parent=0 // pred_check_branch
    %20 = sbr.rel (0) target = $region21
  $region20: #{cxr_forward.5} parent=0 // pred_region
    _
  $region21: #{cxr_forward.5} parent=0 // pred_fallthru
    _
  // Predicated region
  $region22: #{cxr_forward.5} parent=0 // pred_check
    _
  $region23: #{cxr_forward.5} parent=0 // pred_check_branch
    %22 = sbr.rel (0) target = $region25
  $region24: #{cxr_forward.5} parent=0 // pred_region
    _
  $region25: #{cxr_forward.5} parent=0 // pred_fallthru
    _
  %p23 = scmp.eq.s32.totalorder 0, 0
  // Predicated region
  $region26: #{cxr_forward.5} parent=0 // pred_check
    %p24 = pneg %p23
  $region27: #{cxr_forward.5} parent=0 // pred_check_branch
    %26 = sbr.rel (%p24) target = $region29
  $region28: #{cxr_forward.5} parent=0 // pred_region
    %27 = vst [vmem:[#allocation2] sm:$0x3] 0.0
  $region29: #{cxr_forward.5} parent=0 // pred_fallthru
    _
  %v28 = vld [vmem:[#allocation2] sm:$0x3]
  %v29 = vld [vmem:[%s0] sm:$0xff]
  %v30 = vld [vmem:[%s0 + $0x8] sm:$0xff]
  %v31 = vld [vmem:[%s1] sm:$0xf]
  %v32 = vld [vmem:[%s1 + $0x4] sm:$0xf]
  %v33 = vld [vmem:[%s1 + $0x8] sm:$0xf]
  %v34 = vld [vmem:[%s1 + $0xc] sm:$0xf]
  %v35 = vld [vmem:[%s1 + $0x10] sm:$0xf]
  %v36 = vld [vmem:[%s1 + $0x14] sm:$0xf]
  %v37 = vld [vmem:[%s1 + $0x18] sm:$0xf]
  %v38 = vld [vmem:[%s1 + $0x1c] sm:$0xf]
  %v39 = vld [vmem:[%s1 + $0x20] sm:$0xf]
  %v40 = vld [vmem:[%s1 + $0x24] sm:$0xf]
  %v41 = vld [vmem:[%s1 + $0x28] sm:$0xf]
  %v42 = vld [vmem:[%s1 + $0x2c] sm:$0xf]
  %v43 = vld [vmem:[%s1 + $0x30] sm:$0xf]
  %v44 = vld [vmem:[%s1 + $0x34] sm:$0xf]
  %v45 = vld [vmem:[%s1 + $0x38] sm:$0xf]
  %v46 = vld [vmem:[%s1 + $0x3c] sm:$0xf]
  %v47 = vld [vmem:[%s1 + $0x40] sm:$0xf]
  %v48 = vld [vmem:[%s1 + $0x44] sm:$0xf]
  %v49 = vld [vmem:[%s1 + $0x48] sm:$0xf]
  %v50 = vld [vmem:[%s1 + $0x4c] sm:$0xf]
  %v51 = vld [vmem:[%s1 + $0x50] sm:$0xf]
  %v52 = vld [vmem:[%s1 + $0x54] sm:$0xf]
  %v53 = vld [vmem:[%s1 + $0x58] sm:$0xf]
  %v54 = vld [vmem:[%s1 + $0x5c] sm:$0xf]
  %v55 = vld [vmem:[%s1 + $0x60] sm:$0xf]
  %v56 = vld [vmem:[%s1 + $0x64] sm:$0xf]
  %v57 = vld [vmem:[%s1 + $0x68] sm:$0xf]
  %v58 = vld [vmem:[%s1 + $0x6c] sm:$0xf]
  %v59 = vld [vmem:[%s1 + $0x70] sm:$0xf]
  %v60 = vld [vmem:[%s1 + $0x74] sm:$0xf]
  %v61 = vld [vmem:[%s1 + $0x78] sm:$0xf]
  %v62 = vld [vmem:[%s1 + $0x7c] sm:$0xf]
  %v63 = vld [vmem:[%s1 + $0x80] sm:$0xf]
  %v64 = vld [vmem:[%s1 + $0x84] sm:$0xf]
  %v65 = vld [vmem:[%s1 + $0x88] sm:$0xf]
  %v66 = vld [vmem:[%s1 + $0x8c] sm:$0xf]
  %v67 = vld [vmem:[%s1 + $0x90] sm:$0xf]
  %v68 = vld [vmem:[%s1 + $0x94] sm:$0xf]
  %v69 = vld [vmem:[%s1 + $0x98] sm:$0xf]
  %v70 = vld [vmem:[%s1 + $0x9c] sm:$0xf]
  %v71 = vld [vmem:[%s1 + $0xa0] sm:$0xf]
  %v72 = vld [vmem:[%s1 + $0xa4] sm:$0xf]
  %v73 = vld [vmem:[%s1 + $0xa8] sm:$0xf]
  %v74 = vld [vmem:[%s1 + $0xac] sm:$0xf]
  %v75 = vld [vmem:[%s1 + $0xb0] sm:$0xf]
  %v76 = vld [vmem:[%s1 + $0xb4] sm:$0xf]
  %v77 = vld [vmem:[%s1 + $0xb8] sm:$0xf]
  %v78 = vld [vmem:[%s1 + $0xbc] sm:$0xf]
  %v79 = vld [vmem:[%s1 + $0xc0] sm:$0xf]
  %v80 = vld [vmem:[%s1 + $0xc4] sm:$0xf]
  %v81 = vld [vmem:[%s1 + $0xc8] sm:$0xf]
  %v82 = vld [vmem:[%s1 + $0xcc] sm:$0xf]
  %v83 = vld [vmem:[%s1 + $0xd0] sm:$0xf]
  %v84 = vld [vmem:[%s1 + $0xd4] sm:$0xf]
  %v85 = vld [vmem:[%s1 + $0xd8] sm:$0xf]
  %v86 = vld [vmem:[%s1 + $0xdc] sm:$0xf]
  %v87 = vld [vmem:[%s1 + $0xe0] sm:$0xf]
  %v88 = vld [vmem:[%s1 + $0xe4] sm:$0xf]
  %v89 = vld [vmem:[%s1 + $0xe8] sm:$0xf]
  %v90 = vld [vmem:[%s1 + $0xec] sm:$0xf]
  %v91 = vld [vmem:[%s1 + $0xf0] sm:$0xf]
  %v92 = vld [vmem:[%s1 + $0xf4] sm:$0xf]
  %v93 = vld [vmem:[%s1 + $0xf8] sm:$0xf]
  %v94 = vld [vmem:[%s1 + $0xfc] sm:$0xf]
  %v95 = vld [vmem:[%s1 + $0x100] sm:$0xf]
  %v96 = vld [vmem:[%s1 + $0x104] sm:$0xf]
  %v97 = vld [vmem:[%s1 + $0x108] sm:$0xf]
  %v98 = vld [vmem:[%s1 + $0x10c] sm:$0xf]
  %v99 = vld [vmem:[%s1 + $0x110] sm:$0xf]
  %v100 = vld [vmem:[%s1 + $0x114] sm:$0xf]
  %v101 = vld [vmem:[%s1 + $0x118] sm:$0xf]
  %v102 = vld [vmem:[%s1 + $0x11c] sm:$0xf]
  %v103 = vld [vmem:[%s1 + $0x120] sm:$0xf]
  %v104 = vld [vmem:[%s1 + $0x124] sm:$0xf]
  %v105 = vld [vmem:[%s1 + $0x128] sm:$0xf]
  %v106 = vld [vmem:[%s1 + $0x12c] sm:$0xf]
  %v107 = vld [vmem:[%s1 + $0x130] sm:$0xf]
  %v108 = vld [vmem:[%s1 + $0x134] sm:$0xf]
  %v109 = vld [vmem:[%s1 + $0x138] sm:$0xf]
  %v110 = vld [vmem:[%s1 + $0x13c] sm:$0xf]
  %v111 = vld [vmem:[%s1 + $0x140] sm:$0xf]
  %v112 = vld [vmem:[%s1 + $0x144] sm:$0xf]
  %v113 = vld [vmem:[%s1 + $0x148] sm:$0xf]
  %v114 = vld [vmem:[%s1 + $0x14c] sm:$0xf]
  %v115 = vld [vmem:[%s1 + $0x150] sm:$0xf]
  %v116 = vld [vmem:[%s1 + $0x154] sm:$0xf]
  %v117 = vld [vmem:[%s1 + $0x158] sm:$0xf]
  %v118 = vld [vmem:[%s1 + $0x15c] sm:$0xf]
  %v119 = vld [vmem:[%s1 + $0x160] sm:$0xf]
  %v120 = vld [vmem:[%s1 + $0x164] sm:$0xf]
  %v121 = vld [vmem:[%s1 + $0x168] sm:$0xf]
  %v122 = vld [vmem:[%s1 + $0x16c] sm:$0xf]
  %v123 = vld [vmem:[%s1 + $0x170] sm:$0xf]
  %v124 = vld [vmem:[%s1 + $0x174] sm:$0xf]
  %v125 = vld [vmem:[%s1 + $0x178] sm:$0xf]
  %v126 = vld [vmem:[%s1 + $0x17c] sm:$0xf]
  %v127 = vld [vmem:[%s1 + $0x180] sm:$0xf]
  %v128 = vld [vmem:[%s1 + $0x184] sm:$0xf]
  %v129 = vld [vmem:[%s1 + $0x188] sm:$0xf]
  %v130 = vld [vmem:[%s1 + $0x18c] sm:$0xf]
  %v131 = vld [vmem:[%s1 + $0x190] sm:$0xf]
  %v132 = vld [vmem:[%s1 + $0x194] sm:$0xf]
  %v133 = vld [vmem:[%s1 + $0x198] sm:$0xf]
  %v134 = vld [vmem:[%s1 + $0x19c] sm:$0xf]
  %v135 = vld [vmem:[%s1 + $0x1a0] sm:$0xf]
  %v136 = vld [vmem:[%s1 + $0x1a4] sm:$0xf]
  %v137 = vld [vmem:[%s1 + $0x1a8] sm:$0xf]
  %v138 = vld [vmem:[%s1 + $0x1ac] sm:$0xf]
  %v139 = vld [vmem:[%s1 + $0x1b0] sm:$0xf]
  %v140 = vld [vmem:[%s1 + $0x1b4] sm:$0xf]
  %v141 = vld [vmem:[%s1 + $0x1b8] sm:$0xf]
  %v142 = vld [vmem:[%s1 + $0x1bc] sm:$0xf]
  %v143 = vld [vmem:[%s1 + $0x1c0] sm:$0xf]
  %v144 = vld [vmem:[%s1 + $0x1c4] sm:$0xf]
  %v145 = vld [vmem:[%s1 + $0x1c8] sm:$0xf]
  %v146 = vld [vmem:[%s1 + $0x1cc] sm:$0xf]
  %v147 = vld [vmem:[%s1 + $0x1d0] sm:$0xf]
  %v148 = vld [vmem:[%s1 + $0x1d4] sm:$0xf]
  %v149 = vld [vmem:[%s1 + $0x1d8] sm:$0xf]
  %v150 = vld [vmem:[%s1 + $0x1dc] sm:$0xf]
  %v151 = vld [vmem:[%s1 + $0x1e0] sm:$0xf]
  %v152 = vld [vmem:[%s1 + $0x1e4] sm:$0xf]
  %v153 = vld [vmem:[%s1 + $0x1e8] sm:$0xf]
  %v154 = vld [vmem:[%s1 + $0x1ec] sm:$0xf]
  %v155 = vld [vmem:[%s1 + $0x1f0] sm:$0xf]
  %v156 = vld [vmem:[%s1 + $0x1f4] sm:$0xf]
  %v157 = vld [vmem:[%s1 + $0x1f8] sm:$0xf]
  %v158 = vld [vmem:[%s1 + $0x1fc] sm:$0xf]
  %v159 = vld [vmem:[%s1 + $0x200] sm:$0xf]
  %v160 = vld [vmem:[%s1 + $0x204] sm:$0xf]
  %v161 = vld [vmem:[%s1 + $0x208] sm:$0xf]
  %v162 = vld [vmem:[%s1 + $0x20c] sm:$0xf]
  %v163 = vld [vmem:[%s1 + $0x210] sm:$0xf]
  %v164 = vld [vmem:[%s1 + $0x214] sm:$0xf]
  %v165 = vld [vmem:[%s1 + $0x218] sm:$0xf]
  %v166 = vld [vmem:[%s1 + $0x21c] sm:$0xf]
  %v167 = vld [vmem:[%s1 + $0x220] sm:$0xf]
  %v168 = vld [vmem:[%s1 + $0x224] sm:$0xf]
  %v169 = vld [vmem:[%s1 + $0x228] sm:$0xf]
  %v170 = vld [vmem:[%s1 + $0x22c] sm:$0xf]
  %v171 = vld [vmem:[%s1 + $0x230] sm:$0xf]
  %v172 = vld [vmem:[%s1 + $0x234] sm:$0xf]
  %v173 = vld [vmem:[%s1 + $0x238] sm:$0xf]
  %v174 = vld [vmem:[%s1 + $0x23c] sm:$0xf]
  %v175 = vld [vmem:[%s1 + $0x240] sm:$0xf]
  %v176 = vld [vmem:[%s1 + $0x244] sm:$0xf]
  %v177 = vld [vmem:[%s1 + $0x248] sm:$0xf]
  %v178 = vld [vmem:[%s1 + $0x24c] sm:$0xf]
  %v179 = vld [vmem:[%s1 + $0x250] sm:$0xf]
  %v180 = vld [vmem:[%s1 + $0x254] sm:$0xf]
  %v181 = vld [vmem:[%s1 + $0x258] sm:$0xf]
  %v182 = vld [vmem:[%s1 + $0x25c] sm:$0xf]
  %v183 = vld [vmem:[%s1 + $0x260] sm:$0xf]
  %v184 = vld [vmem:[%s1 + $0x264] sm:$0xf]
  %v185 = vld [vmem:[%s1 + $0x268] sm:$0xf]
  %v186 = vld [vmem:[%s1 + $0x26c] sm:$0xf]
  %v187 = vld [vmem:[%s1 + $0x270] sm:$0xf]
  %v188 = vld [vmem:[%s1 + $0x274] sm:$0xf]
  %v189 = vld [vmem:[%s1 + $0x278] sm:$0xf]
  %v190 = vld [vmem:[%s1 + $0x27c] sm:$0xf]
  %v191 = vld [vmem:[%s1 + $0x280] sm:$0xf]
  %v192 = vld [vmem:[%s1 + $0x284] sm:$0xf]
  %v193 = vld [vmem:[%s1 + $0x288] sm:$0xf]
  %v194 = vld [vmem:[%s1 + $0x28c] sm:$0xf]
  %v195 = vld [vmem:[%s1 + $0x290] sm:$0xf]
  %v196 = vld [vmem:[%s1 + $0x294] sm:$0xf]
  %v197 = vld [vmem:[%s1 + $0x298] sm:$0xf]
  %v198 = vld [vmem:[%s1 + $0x29c] sm:$0xf]
  %v199 = vld [vmem:[%s1 + $0x2a0] sm:$0xf]
  %v200 = vld [vmem:[%s1 + $0x2a4] sm:$0xf]
  %v201 = vld [vmem:[%s1 + $0x2a8] sm:$0xf]
  %v202 = vld [vmem:[%s1 + $0x2ac] sm:$0xf]
  %v203 = vld [vmem:[%s1 + $0x2b0] sm:$0xf]
  %v204 = vld [vmem:[%s1 + $0x2b4] sm:$0xf]
  %v205 = vld [vmem:[%s1 + $0x2b8] sm:$0xf]
  %v206 = vld [vmem:[%s1 + $0x2bc] sm:$0xf]
  %v207 = vld [vmem:[%s1 + $0x2c0] sm:$0xf]
  %v208 = vld [vmem:[%s1 + $0x2c4] sm:$0xf]
  %v209 = vld [vmem:[%s1 + $0x2c8] sm:$0xf]
  %v210 = vld [vmem:[%s1 + $0x2cc] sm:$0xf]
  %v211 = vld [vmem:[%s1 + $0x2d0] sm:$0xf]
  %v212 = vld [vmem:[%s1 + $0x2d4] sm:$0xf]
  %v213 = vld [vmem:[%s1 + $0x2d8] sm:$0xf]
  %v214 = vld [vmem:[%s1 + $0x2dc] sm:$0xf]
  %v215 = vld [vmem:[%s1 + $0x2e0] sm:$0xf]
  %v216 = vld [vmem:[%s1 + $0x2e4] sm:$0xf]
  %v217 = vld [vmem:[%s1 + $0x2e8] sm:$0xf]
  %v218 = vld [vmem:[%s1 + $0x2ec] sm:$0xf]
  %v219 = vld [vmem:[%s1 + $0x2f0] sm:$0xf]
  %v220 = vld [vmem:[%s1 + $0x2f4] sm:$0xf]
  %v221 = vld [vmem:[%s1 + $0x2f8] sm:$0xf]
  %v222 = vld [vmem:[%s1 + $0x2fc] sm:$0xf]
  %v223 = vld [vmem:[%s1 + $0x300] sm:$0xf]
  %v224 = vld [vmem:[%s1 + $0x304] sm:$0xf]
  %v225 = vld [vmem:[%s1 + $0x308] sm:$0xf]
  %v226 = vld [vmem:[%s1 + $0x30c] sm:$0xf]
  %v227 = vld [vmem:[%s1 + $0x310] sm:$0xf]
  %v228 = vld [vmem:[%s1 + $0x314] sm:$0xf]
  %v229 = vld [vmem:[%s1 + $0x318] sm:$0xf]
  %v230 = vld [vmem:[%s1 + $0x31c] sm:$0xf]
  %v231 = vld [vmem:[%s1 + $0x320] sm:$0xf]
  %v232 = vld [vmem:[%s1 + $0x324] sm:$0xf]
  %v233 = vld [vmem:[%s1 + $0x328] sm:$0xf]
  %v234 = vld [vmem:[%s1 + $0x32c] sm:$0xf]
  %v235 = vld [vmem:[%s1 + $0x330] sm:$0xf]
  %v236 = vld [vmem:[%s1 + $0x334] sm:$0xf]
  %v237 = vld [vmem:[%s1 + $0x338] sm:$0xf]
  %v238 = vld [vmem:[%s1 + $0x33c] sm:$0xf]
  %v239 = vld [vmem:[%s1 + $0x340] sm:$0xf]
  %v240 = vld [vmem:[%s1 + $0x344] sm:$0xf]
  %v241 = vld [vmem:[%s1 + $0x348] sm:$0xf]
  %v242 = vld [vmem:[%s1 + $0x34c] sm:$0xf]
  %v243 = vld [vmem:[%s1 + $0x350] sm:$0xf]
  %v244 = vld [vmem:[%s1 + $0x354] sm:$0xf]
  %v245 = vld [vmem:[%s1 + $0x358] sm:$0xf]
  %v246 = vld [vmem:[%s1 + $0x35c] sm:$0xf]
  %v247 = vld [vmem:[%s1 + $0x360] sm:$0xf]
  %v248 = vld [vmem:[%s1 + $0x364] sm:$0xf]
  %v249 = vld [vmem:[%s1 + $0x368] sm:$0xf]
  %v250 = vld [vmem:[%s1 + $0x36c] sm:$0xf]
  %v251 = vld [vmem:[%s1 + $0x370] sm:$0xf]
  %v252 = vld [vmem:[%s1 + $0x374] sm:$0xf]
  %v253 = vld [vmem:[%s1 + $0x378] sm:$0xf]
  %v254 = vld [vmem:[%s1 + $0x37c] sm:$0xf]
  %v255 = vld [vmem:[%s1 + $0x380] sm:$0xf]
  %v256 = vld [vmem:[%s1 + $0x384] sm:$0xf]
  %v257 = vld [vmem:[%s1 + $0x388] sm:$0xf]
  %v258 = vld [vmem:[%s1 + $0x38c] sm:$0xf]
  %v259 = vld [vmem:[%s1 + $0x390] sm:$0xf]
  %v260 = vld [vmem:[%s1 + $0x394] sm:$0xf]
  %v261 = vld [vmem:[%s1 + $0x398] sm:$0xf]
  %v262 = vld [vmem:[%s1 + $0x39c] sm:$0xf]
  %v263 = vld [vmem:[%s1 + $0x3a0] sm:$0xf]
  %v264 = vld [vmem:[%s1 + $0x3a4] sm:$0xf]
  %v265 = vld [vmem:[%s1 + $0x3a8] sm:$0xf]
  %v266 = vld [vmem:[%s1 + $0x3ac] sm:$0xf]
  %v267 = vld [vmem:[%s1 + $0x3b0] sm:$0xf]
  %v268 = vld [vmem:[%s1 + $0x3b4] sm:$0xf]
  %v269 = vld [vmem:[%s1 + $0x3b8] sm:$0xf]
  %v270 = vld [vmem:[%s1 + $0x3bc] sm:$0xf]
  %v271 = vld [vmem:[%s1 + $0x3c0] sm:$0xf]
  %v272 = vld [vmem:[%s1 + $0x3c4] sm:$0xf]
  %v273 = vld [vmem:[%s1 + $0x3c8] sm:$0xf]
  %v274 = vld [vmem:[%s1 + $0x3cc] sm:$0xf]
  %v275 = vld [vmem:[%s1 + $0x3d0] sm:$0xf]
  %v276 = vld [vmem:[%s1 + $0x3d4] sm:$0xf]
  %v277 = vld [vmem:[%s1 + $0x3d8] sm:$0xf]
  %v278 = vld [vmem:[%s1 + $0x3dc] sm:$0xf]
  %v279 = vld [vmem:[%s1 + $0x3e0] sm:$0xf]
  %v280 = vld [vmem:[%s1 + $0x3e4] sm:$0xf]
  %v281 = vld [vmem:[%s1 + $0x3e8] sm:$0xf]
  %v282 = vld [vmem:[%s1 + $0x3ec] sm:$0xf]
  %v283 = vld [vmem:[%s1 + $0x3f0] sm:$0xf]
  %v284 = vld [vmem:[%s1 + $0x3f4] sm:$0xf]
  %v285 = vld [vmem:[%s1 + $0x3f8] sm:$0xf]
  %v286 = vld [vmem:[%s1 + $0x3fc] sm:$0xf]
  %288 = vst [vmem:[#allocation1] ss:$9 sm:$0xff] %v29
  %v289 = vld [vmem:[#allocation1] sm:$0xff]
  %v290 = vld [vmem:[#allocation1 + $0x9] sm:$0xff]
  %v291 = vld [vmem:[#allocation1 + $0x12] sm:$0xff]
  %v292 = vld [vmem:[#allocation1 + $0x1b] sm:$0xff]
  %v293 = vld [vmem:[#allocation1 + $0x24] sm:$0xff]
  %v294 = vld [vmem:[#allocation1 + $0x2d] sm:$0xff]
  %v295 = vld [vmem:[#allocation1 + $0x36] sm:$0xff]
  %v296 = vld [vmem:[#allocation1 + $0x3f] sm:$0xff]
  %298 = vst [vmem:[#allocation1] ss:$9 sm:$0xff] %v30
  %v299 = vld [vmem:[#allocation1] sm:$0xff]
  %v300 = vld [vmem:[#allocation1 + $0x9] sm:$0xff]
  %v301 = vld [vmem:[#allocation1 + $0x12] sm:$0xff]
  %v302 = vld [vmem:[#allocation1 + $0x1b] sm:$0xff]
  %v303 = vld [vmem:[#allocation1 + $0x24] sm:$0xff]
  %v304 = vld [vmem:[#allocation1 + $0x2d] sm:$0xff]
  %v305 = vld [vmem:[#allocation1 + $0x36] sm:$0xff]
  %v306 = vld [vmem:[#allocation1 + $0x3f] sm:$0xff]
  %v579 = vunpack.c.l.b16 %v31
  %v580 = vunpack.c.l.b16 %v32
  %v581 = vunpack.c.l.b16 %v33
  %v582 = vunpack.c.l.b16 %v34
  %v583 = vunpack.c.l.b16 %v35
  %v584 = vunpack.c.l.b16 %v36
  %v585 = vunpack.c.l.b16 %v37
  %v586 = vunpack.c.l.b16 %v38
  %v587 = vunpack.c.l.b16 %v39
  %v588 = vunpack.c.l.b16 %v40
  %v589 = vunpack.c.l.b16 %v41
  %v590 = vunpack.c.l.b16 %v42
  %v591 = vunpack.c.l.b16 %v43
  %v592 = vunpack.c.l.b16 %v44
  %v593 = vunpack.c.l.b16 %v45
  %v594 = vunpack.c.l.b16 %v46
  %v595 = vunpack.c.l.b16 %v47
  %v596 = vunpack.c.l.b16 %v48
  %v597 = vunpack.c.l.b16 %v49
  %v598 = vunpack.c.l.b16 %v50
  %v599 = vunpack.c.l.b16 %v51
  %v600 = vunpack.c.l.b16 %v52
  %v601 = vunpack.c.l.b16 %v53
  %v602 = vunpack.c.l.b16 %v54
  %v603 = vunpack.c.l.b16 %v55
  %v604 = vunpack.c.l.b16 %v56
  %v605 = vunpack.c.l.b16 %v57
  %v606 = vunpack.c.l.b16 %v58
  %v607 = vunpack.c.l.b16 %v59
  %v608 = vunpack.c.l.b16 %v60
  %v609 = vunpack.c.l.b16 %v61
  %v610 = vunpack.c.l.b16 %v62
  %v611 = vunpack.c.l.b16 %v63
  %v612 = vunpack.c.l.b16 %v64
  %v613 = vunpack.c.l.b16 %v65
  %v614 = vunpack.c.l.b16 %v66
  %v615 = vunpack.c.l.b16 %v67
  %v616 = vunpack.c.l.b16 %v68
  %v617 = vunpack.c.l.b16 %v69
  %v618 = vunpack.c.l.b16 %v70
  %v619 = vunpack.c.l.b16 %v71
  %v620 = vunpack.c.l.b16 %v72
  %v621 = vunpack.c.l.b16 %v73
  %v622 = vunpack.c.l.b16 %v74
  %v623 = vunpack.c.l.b16 %v75
  %v624 = vunpack.c.l.b16 %v76
  %v625 = vunpack.c.l.b16 %v77
  %v626 = vunpack.c.l.b16 %v78
  %v627 = vunpack.c.l.b16 %v79
  %v628 = vunpack.c.l.b16 %v80
  %v629 = vunpack.c.l.b16 %v81
  %v630 = vunpack.c.l.b16 %v82
  %v631 = vunpack.c.l.b16 %v83
  %v632 = vunpack.c.l.b16 %v84
  %v633 = vunpack.c.l.b16 %v85
  %v634 = vunpack.c.l.b16 %v86
  %v635 = vunpack.c.l.b16 %v87
  %v636 = vunpack.c.l.b16 %v88
  %v637 = vunpack.c.l.b16 %v89
  %v638 = vunpack.c.l.b16 %v90
  %v639 = vunpack.c.l.b16 %v91
  %v640 = vunpack.c.l.b16 %v92
  %v641 = vunpack.c.l.b16 %v93
  %v642 = vunpack.c.l.b16 %v94
  %v643 = vunpack.c.l.b16 %v95
  %v644 = vunpack.c.l.b16 %v96
  %v645 = vunpack.c.l.b16 %v97
  %v646 = vunpack.c.l.b16 %v98
  %v647 = vunpack.c.l.b16 %v99
  %v648 = vunpack.c.l.b16 %v100
  %v649 = vunpack.c.l.b16 %v101
  %v650 = vunpack.c.l.b16 %v102
  %v651 = vunpack.c.l.b16 %v103
  %v652 = vunpack.c.l.b16 %v104
  %v653 = vunpack.c.l.b16 %v105
  %v654 = vunpack.c.l.b16 %v106
  %v655 = vunpack.c.l.b16 %v107
  %v656 = vunpack.c.l.b16 %v108
  %v657 = vunpack.c.l.b16 %v109
  %v658 = vunpack.c.l.b16 %v110
  %v659 = vunpack.c.l.b16 %v111
  %v660 = vunpack.c.l.b16 %v112
  %v661 = vunpack.c.l.b16 %v113
  %v662 = vunpack.c.l.b16 %v114
  %v663 = vunpack.c.l.b16 %v115
  %v664 = vunpack.c.l.b16 %v116
  %v665 = vunpack.c.l.b16 %v117
  %v666 = vunpack.c.l.b16 %v118
  %v667 = vunpack.c.l.b16 %v119
  %v668 = vunpack.c.l.b16 %v120
  %v669 = vunpack.c.l.b16 %v121
  %v670 = vunpack.c.l.b16 %v122
  %v671 = vunpack.c.l.b16 %v123
  %v672 = vunpack.c.l.b16 %v124
  %v673 = vunpack.c.l.b16 %v125
  %v674 = vunpack.c.l.b16 %v126
  %v675 = vunpack.c.l.b16 %v127
  %v676 = vunpack.c.l.b16 %v128
  %v677 = vunpack.c.l.b16 %v129
  %v678 = vunpack.c.l.b16 %v130
  %v679 = vunpack.c.l.b16 %v131
  %v680 = vunpack.c.l.b16 %v132
  %v681 = vunpack.c.l.b16 %v133
  %v682 = vunpack.c.l.b16 %v134
  %v683 = vunpack.c.l.b16 %v135
  %v684 = vunpack.c.l.b16 %v136
  %v685 = vunpack.c.l.b16 %v137
  %v686 = vunpack.c.l.b16 %v138
  %v687 = vunpack.c.l.b16 %v139
  %v688 = vunpack.c.l.b16 %v140
  %v689 = vunpack.c.l.b16 %v141
  %v690 = vunpack.c.l.b16 %v142
  %v691 = vunpack.c.l.b16 %v143
  %v692 = vunpack.c.l.b16 %v144
  %v693 = vunpack.c.l.b16 %v145
  %v694 = vunpack.c.l.b16 %v146
  %v695 = vunpack.c.l.b16 %v147
  %v696 = vunpack.c.l.b16 %v148
  %v697 = vunpack.c.l.b16 %v149
  %v698 = vunpack.c.l.b16 %v150
  %v699 = vunpack.c.l.b16 %v151
  %v700 = vunpack.c.l.b16 %v152
  %v701 = vunpack.c.l.b16 %v153
  %v702 = vunpack.c.l.b16 %v154
  %v703 = vunpack.c.l.b16 %v155
  %v704 = vunpack.c.l.b16 %v156
  %v705 = vunpack.c.l.b16 %v157
  %v706 = vunpack.c.l.b16 %v158
  %v707 = vunpack.c.l.b16 %v159
  %v708 = vunpack.c.l.b16 %v160
  %v709 = vunpack.c.l.b16 %v161
  %v710 = vunpack.c.l.b16 %v162
  %v711 = vunpack.c.l.b16 %v163
  %v712 = vunpack.c.l.b16 %v164
  %v713 = vunpack.c.l.b16 %v165
  %v714 = vunpack.c.l.b16 %v166
  %v715 = vunpack.c.l.b16 %v167
  %v716 = vunpack.c.l.b16 %v168
  %v717 = vunpack.c.l.b16 %v169
  %v718 = vunpack.c.l.b16 %v170
  %v719 = vunpack.c.l.b16 %v171
  %v720 = vunpack.c.l.b16 %v172
  %v721 = vunpack.c.l.b16 %v173
  %v722 = vunpack.c.l.b16 %v174
  %v723 = vunpack.c.l.b16 %v175
  %v724 = vunpack.c.l.b16 %v176
  %v725 = vunpack.c.l.b16 %v177
  %v726 = vunpack.c.l.b16 %v178
  %v727 = vunpack.c.l.b16 %v179
  %v728 = vunpack.c.l.b16 %v180
  %v729 = vunpack.c.l.b16 %v181
  %v730 = vunpack.c.l.b16 %v182
  %v731 = vunpack.c.l.b16 %v183
  %v732 = vunpack.c.l.b16 %v184
  %v733 = vunpack.c.l.b16 %v185
  %v734 = vunpack.c.l.b16 %v186
  %v735 = vunpack.c.l.b16 %v187
  %v736 = vunpack.c.l.b16 %v188
  %v737 = vunpack.c.l.b16 %v189
  %v738 = vunpack.c.l.b16 %v190
  %v739 = vunpack.c.l.b16 %v191
  %v740 = vunpack.c.l.b16 %v192
  %v741 = vunpack.c.l.b16 %v193
  %v742 = vunpack.c.l.b16 %v194
  %v743 = vunpack.c.l.b16 %v195
  %v744 = vunpack.c.l.b16 %v196
  %v745 = vunpack.c.l.b16 %v197
  %v746 = vunpack.c.l.b16 %v198
  %v747 = vunpack.c.l.b16 %v199
  %v748 = vunpack.c.l.b16 %v200
  %v749 = vunpack.c.l.b16 %v201
  %v750 = vunpack.c.l.b16 %v202
  %v751 = vunpack.c.l.b16 %v203
  %v752 = vunpack.c.l.b16 %v204
  %v753 = vunpack.c.l.b16 %v205
  %v754 = vunpack.c.l.b16 %v206
  %v755 = vunpack.c.l.b16 %v207
  %v756 = vunpack.c.l.b16 %v208
  %v757 = vunpack.c.l.b16 %v209
  %v758 = vunpack.c.l.b16 %v210
  %v759 = vunpack.c.l.b16 %v211
  %v760 = vunpack.c.l.b16 %v212
  %v761 = vunpack.c.l.b16 %v213
  %v762 = vunpack.c.l.b16 %v214
  %v763 = vunpack.c.l.b16 %v215
  %v764 = vunpack.c.l.b16 %v216
  %v765 = vunpack.c.l.b16 %v217
  %v766 = vunpack.c.l.b16 %v218
  %v767 = vunpack.c.l.b16 %v219
  %v768 = vunpack.c.l.b16 %v220
  %v769 = vunpack.c.l.b16 %v221
  %v770 = vunpack.c.l.b16 %v222
  %v771 = vunpack.c.l.b16 %v223
  %v772 = vunpack.c.l.b16 %v224
  %v773 = vunpack.c.l.b16 %v225
  %v774 = vunpack.c.l.b16 %v226
  %v775 = vunpack.c.l.b16 %v227
  %v776 = vunpack.c.l.b16 %v228
  %v777 = vunpack.c.l.b16 %v229
  %v778 = vunpack.c.l.b16 %v230
  %v779 = vunpack.c.l.b16 %v231
  %v780 = vunpack.c.l.b16 %v232
  %v781 = vunpack.c.l.b16 %v233
  %v782 = vunpack.c.l.b16 %v234
  %v783 = vunpack.c.l.b16 %v235
  %v784 = vunpack.c.l.b16 %v236
  %v785 = vunpack.c.l.b16 %v237
  %v786 = vunpack.c.l.b16 %v238
  %v787 = vunpack.c.l.b16 %v239
  %v788 = vunpack.c.l.b16 %v240
  %v789 = vunpack.c.l.b16 %v241
  %v790 = vunpack.c.l.b16 %v242
  %v791 = vunpack.c.l.b16 %v243
  %v792 = vunpack.c.l.b16 %v244
  %v793 = vunpack.c.l.b16 %v245
  %v794 = vunpack.c.l.b16 %v246
  %v795 = vunpack.c.l.b16 %v247
  %v796 = vunpack.c.l.b16 %v248
  %v797 = vunpack.c.l.b16 %v249
  %v798 = vunpack.c.l.b16 %v250
  %v799 = vunpack.c.l.b16 %v251
  %v800 = vunpack.c.l.b16 %v252
  %v801 = vunpack.c.l.b16 %v253
  %v802 = vunpack.c.l.b16 %v254
  %v803 = vunpack.c.l.b16 %v255
  %v804 = vunpack.c.l.b16 %v256
  %v805 = vunpack.c.l.b16 %v257
  %v806 = vunpack.c.l.b16 %v258
  %v807 = vunpack.c.l.b16 %v259
  %v808 = vunpack.c.l.b16 %v260
  %v809 = vunpack.c.l.b16 %v261
  %v810 = vunpack.c.l.b16 %v262
  %v811 = vunpack.c.l.b16 %v263
  %v812 = vunpack.c.l.b16 %v264
  %v813 = vunpack.c.l.b16 %v265
  %v814 = vunpack.c.l.b16 %v266
  %v815 = vunpack.c.l.b16 %v267
  %v816 = vunpack.c.l.b16 %v268
  %v817 = vunpack.c.l.b16 %v269
  %v818 = vunpack.c.l.b16 %v270
  %v819 = vunpack.c.l.b16 %v271
  %v820 = vunpack.c.l.b16 %v272
  %v821 = vunpack.c.l.b16 %v273
  %v822 = vunpack.c.l.b16 %v274
  %v823 = vunpack.c.l.b16 %v275
  %v824 = vunpack.c.l.b16 %v276
  %v825 = vunpack.c.l.b16 %v277
  %v826 = vunpack.c.l.b16 %v278
  %v827 = vunpack.c.l.b16 %v279
  %v828 = vunpack.c.l.b16 %v280
  %v829 = vunpack.c.l.b16 %v281
  %v830 = vunpack.c.l.b16 %v282
  %v831 = vunpack.c.l.b16 %v283
  %v832 = vunpack.c.l.b16 %v284
  %v833 = vunpack.c.l.b16 %v285
  %v834 = vunpack.c.l.b16 %v286
  %v835 = vpack.c.b16 %v580, %v579
  %v836 = vpack.c.b16 %v582, %v581
  %v837 = vpack.c.b16 %v584, %v583
  %v838 = vpack.c.b16 %v586, %v585
  %v839 = vpack.c.b16 %v588, %v587
  %v840 = vpack.c.b16 %v590, %v589
  %v841 = vpack.c.b16 %v592, %v591
  %v842 = vpack.c.b16 %v594, %v593
  %v843 = vpack.c.b16 %v596, %v595
  %v844 = vpack.c.b16 %v598, %v597
  %v845 = vpack.c.b16 %v600, %v599
  %v846 = vpack.c.b16 %v602, %v601
  %v847 = vpack.c.b16 %v604, %v603
  %v848 = vpack.c.b16 %v606, %v605
  %v849 = vpack.c.b16 %v608, %v607
  %v850 = vpack.c.b16 %v610, %v609
  %v851 = vpack.c.b16 %v612, %v611
  %v852 = vpack.c.b16 %v614, %v613
  %v853 = vpack.c.b16 %v616, %v615
  %v854 = vpack.c.b16 %v618, %v617
  %v855 = vpack.c.b16 %v620, %v619
  %v856 = vpack.c.b16 %v622, %v621
  %v857 = vpack.c.b16 %v624, %v623
  %v858 = vpack.c.b16 %v626, %v625
  %v859 = vpack.c.b16 %v628, %v627
  %v860 = vpack.c.b16 %v630, %v629
  %v861 = vpack.c.b16 %v632, %v631
  %v862 = vpack.c.b16 %v634, %v633
  %v863 = vpack.c.b16 %v636, %v635
  %v864 = vpack.c.b16 %v638, %v637
  %v865 = vpack.c.b16 %v640, %v639
  %v866 = vpack.c.b16 %v642, %v641
  %v867 = vpack.c.b16 %v644, %v643
  %v868 = vpack.c.b16 %v646, %v645
  %v869 = vpack.c.b16 %v648, %v647
  %v870 = vpack.c.b16 %v650, %v649
  %v871 = vpack.c.b16 %v652, %v651
  %v872 = vpack.c.b16 %v654, %v653
  %v873 = vpack.c.b16 %v656, %v655
  %v874 = vpack.c.b16 %v658, %v657
  %v875 = vpack.c.b16 %v660, %v659
  %v876 = vpack.c.b16 %v662, %v661
  %v877 = vpack.c.b16 %v664, %v663
  %v878 = vpack.c.b16 %v666, %v665
  %v879 = vpack.c.b16 %v668, %v667
  %v880 = vpack.c.b16 %v670, %v669
  %v881 = vpack.c.b16 %v672, %v671
  %v882 = vpack.c.b16 %v674, %v673
  %v883 = vpack.c.b16 %v676, %v675
  %v884 = vpack.c.b16 %v678, %v677
  %v885 = vpack.c.b16 %v680, %v679
  %v886 = vpack.c.b16 %v682, %v681
  %v887 = vpack.c.b16 %v684, %v683
  %v888 = vpack.c.b16 %v686, %v685
  %v889 = vpack.c.b16 %v688, %v687
  %v890 = vpack.c.b16 %v690, %v689
  %v891 = vpack.c.b16 %v692, %v691
  %v892 = vpack.c.b16 %v694, %v693
  %v893 = vpack.c.b16 %v696, %v695
  %v894 = vpack.c.b16 %v698, %v697
  %v895 = vpack.c.b16 %v700, %v699
  %v896 = vpack.c.b16 %v702, %v701
  %v897 = vpack.c.b16 %v704, %v703
  %v898 = vpack.c.b16 %v706, %v705
  %v899 = vpack.c.b16 %v708, %v707
  %v900 = vpack.c.b16 %v710, %v709
  %v901 = vpack.c.b16 %v712, %v711
  %v902 = vpack.c.b16 %v714, %v713
  %v903 = vpack.c.b16 %v716, %v715
  %v904 = vpack.c.b16 %v718, %v717
  %v905 = vpack.c.b16 %v720, %v719
  %v906 = vpack.c.b16 %v722, %v721
  %v907 = vpack.c.b16 %v724, %v723
  %v908 = vpack.c.b16 %v726, %v725
  %v909 = vpack.c.b16 %v728, %v727
  %v910 = vpack.c.b16 %v730, %v729
  %v911 = vpack.c.b16 %v732, %v731
  %v912 = vpack.c.b16 %v734, %v733
  %v913 = vpack.c.b16 %v736, %v735
  %v914 = vpack.c.b16 %v738, %v737
  %v915 = vpack.c.b16 %v740, %v739
  %v916 = vpack.c.b16 %v742, %v741
  %v917 = vpack.c.b16 %v744, %v743
  %v918 = vpack.c.b16 %v746, %v745
  %v919 = vpack.c.b16 %v748, %v747
  %v920 = vpack.c.b16 %v750, %v749
  %v921 = vpack.c.b16 %v752, %v751
  %v922 = vpack.c.b16 %v754, %v753
  %v923 = vpack.c.b16 %v756, %v755
  %v924 = vpack.c.b16 %v758, %v757
  %v925 = vpack.c.b16 %v760, %v759
  %v926 = vpack.c.b16 %v762, %v761
  %v927 = vpack.c.b16 %v764, %v763
  %v928 = vpack.c.b16 %v766, %v765
  %v929 = vpack.c.b16 %v768, %v767
  %v930 = vpack.c.b16 %v770, %v769
  %v931 = vpack.c.b16 %v772, %v771
  %v932 = vpack.c.b16 %v774, %v773
  %v933 = vpack.c.b16 %v776, %v775
  %v934 = vpack.c.b16 %v778, %v777
  %v935 = vpack.c.b16 %v780, %v779
  %v936 = vpack.c.b16 %v782, %v781
  %v937 = vpack.c.b16 %v784, %v783
  %v938 = vpack.c.b16 %v786, %v785
  %v939 = vpack.c.b16 %v788, %v787
  %v940 = vpack.c.b16 %v790, %v789
  %v941 = vpack.c.b16 %v792, %v791
  %v942 = vpack.c.b16 %v794, %v793
  %v943 = vpack.c.b16 %v796, %v795
  %v944 = vpack.c.b16 %v798, %v797
  %v945 = vpack.c.b16 %v800, %v799
  %v946 = vpack.c.b16 %v802, %v801
  %v947 = vpack.c.b16 %v804, %v803
  %v948 = vpack.c.b16 %v806, %v805
  %v949 = vpack.c.b16 %v808, %v807
  %v950 = vpack.c.b16 %v810, %v809
  %v951 = vpack.c.b16 %v812, %v811
  %v952 = vpack.c.b16 %v814, %v813
  %v953 = vpack.c.b16 %v816, %v815
  %v954 = vpack.c.b16 %v818, %v817
  %v955 = vpack.c.b16 %v820, %v819
  %v956 = vpack.c.b16 %v822, %v821
  %v957 = vpack.c.b16 %v824, %v823
  %v958 = vpack.c.b16 %v826, %v825
  %v959 = vpack.c.b16 %v828, %v827
  %v960 = vpack.c.b16 %v830, %v829
  %v961 = vpack.c.b16 %v832, %v831
  %v962 = vpack.c.b16 %v834, %v833
  %1091 = vmatpush.bf16.msra.mxu0 %v842
  %1092 = vmatpush.bf16.msra.mxu0 %v841
  %1093 = vmatpush.bf16.msra.mxu0 %v840
  %1094 = vmatpush.bf16.msra.mxu0 %v839
  %1095 = vmatpush.bf16.msra.mxu0 %v838
  %1096 = vmatpush.bf16.msra.mxu0 %v837
  %1097 = vmatpush.bf16.msra.mxu0 %v836
  %1098 = vmatpush.bf16.msra.mxu0 %v835
  %1099 = vmatmul.bf16.gmra.mxu0 %v289
  %v1100 = vpop.f32.mrf.mxu0
  %v1101 = vadd.f32 0.0, %v1100
  %v1102 = vpop.f32.mrf.mxu0
  %1103 = vdwg.mxu0
  %1104 = vmatpush.bf16.msra.mxu0 %v850
  %1105 = vmatpush.bf16.msra.mxu0 %v849
  %1106 = vmatpush.bf16.msra.mxu0 %v848
  %1107 = vmatpush.bf16.msra.mxu0 %v847
  %1108 = vmatpush.bf16.msra.mxu0 %v846
  %1109 = vmatpush.bf16.msra.mxu0 %v845
  %1110 = vmatpush.bf16.msra.mxu0 %v844
  %1111 = vmatpush.bf16.msra.mxu0 %v843
  %1112 = vmatmul.bf16.gmra.mxu0 %v290
  %v1113 = vpop.f32.mrf.mxu0
  %v1114 = vadd.f32 %v1101, %v1113
  %v1115 = vpop.f32.mrf.mxu0
  %1116 = vdwg.mxu0
  %1117 = vmatpush.bf16.msra.mxu0 %v858
  %1118 = vmatpush.bf16.msra.mxu0 %v857
  %1119 = vmatpush.bf16.msra.mxu0 %v856
  %1120 = vmatpush.bf16.msra.mxu0 %v855
  %1121 = vmatpush.bf16.msra.mxu0 %v854
  %1122 = vmatpush.bf16.msra.mxu0 %v853
  %1123 = vmatpush.bf16.msra.mxu0 %v852
  %1124 = vmatpush.bf16.msra.mxu0 %v851
  %1125 = vmatmul.bf16.gmra.mxu0 %v291
  %v1126 = vpop.f32.mrf.mxu0
  %v1127 = vadd.f32 %v1114, %v1126
  %v1128 = vpop.f32.mrf.mxu0
  %1129 = vdwg.mxu0
  %1130 = vmatpush.bf16.msra.mxu0 %v866
  %1131 = vmatpush.bf16.msra.mxu0 %v865
  %1132 = vmatpush.bf16.msra.mxu0 %v864
  %1133 = vmatpush.bf16.msra.mxu0 %v863
  %1134 = vmatpush.bf16.msra.mxu0 %v862
  %1135 = vmatpush.bf16.msra.mxu0 %v861
  %1136 = vmatpush.bf16.msra.mxu0 %v860
  %1137 = vmatpush.bf16.msra.mxu0 %v859
  %1138 = vmatmul.bf16.gmra.mxu0 %v292
  %v1139 = vpop.f32.mrf.mxu0
  %v1140 = vadd.f32 %v1127, %v1139
  %v1141 = vpop.f32.mrf.mxu0
  %1142 = vdwg.mxu0
  %1143 = vmatpush.bf16.msra.mxu0 %v874
  %1144 = vmatpush.bf16.msra.mxu0 %v873
  %1145 = vmatpush.bf16.msra.mxu0 %v872
  %1146 = vmatpush.bf16.msra.mxu0 %v871
  %1147 = vmatpush.bf16.msra.mxu0 %v870
  %1148 = vmatpush.bf16.msra.mxu0 %v869
  %1149 = vmatpush.bf16.msra.mxu0 %v868
  %1150 = vmatpush.bf16.msra.mxu0 %v867
  %1151 = vmatmul.bf16.gmra.mxu0 %v293
  %v1152 = vpop.f32.mrf.mxu0
  %v1153 = vadd.f32 %v1140, %v1152
  %v1154 = vpop.f32.mrf.mxu0
  %1155 = vdwg.mxu0
  %1156 = vmatpush.bf16.msra.mxu0 %v882
  %1157 = vmatpush.bf16.msra.mxu0 %v881
  %1158 = vmatpush.bf16.msra.mxu0 %v880
  %1159 = vmatpush.bf16.msra.mxu0 %v879
  %1160 = vmatpush.bf16.msra.mxu0 %v878
  %1161 = vmatpush.bf16.msra.mxu0 %v877
  %1162 = vmatpush.bf16.msra.mxu0 %v876
  %1163 = vmatpush.bf16.msra.mxu0 %v875
  %1164 = vmatmul.bf16.gmra.mxu0 %v294
  %v1165 = vpop.f32.mrf.mxu0
  %v1166 = vadd.f32 %v1153, %v1165
  %v1167 = vpop.f32.mrf.mxu0
  %1168 = vdwg.mxu0
  %1169 = vmatpush.bf16.msra.mxu0 %v890
  %1170 = vmatpush.bf16.msra.mxu0 %v889
  %1171 = vmatpush.bf16.msra.mxu0 %v888
  %1172 = vmatpush.bf16.msra.mxu0 %v887
  %1173 = vmatpush.bf16.msra.mxu0 %v886
  %1174 = vmatpush.bf16.msra.mxu0 %v885
  %1175 = vmatpush.bf16.msra.mxu0 %v884
  %1176 = vmatpush.bf16.msra.mxu0 %v883
  %1177 = vmatmul.bf16.gmra.mxu0 %v295
  %v1178 = vpop.f32.mrf.mxu0
  %v1179 = vadd.f32 %v1166, %v1178
  %v1180 = vpop.f32.mrf.mxu0
  %1181 = vdwg.mxu0
  %1182 = vmatpush.bf16.msra.mxu0 %v898
  %1183 = vmatpush.bf16.msra.mxu0 %v897
  %1184 = vmatpush.bf16.msra.mxu0 %v896
  %1185 = vmatpush.bf16.msra.mxu0 %v895
  %1186 = vmatpush.bf16.msra.mxu0 %v894
  %1187 = vmatpush.bf16.msra.mxu0 %v893
  %1188 = vmatpush.bf16.msra.mxu0 %v892
  %1189 = vmatpush.bf16.msra.mxu0 %v891
  %1190 = vmatmul.bf16.gmra.mxu0 %v296
  %v1191 = vpop.f32.mrf.mxu0
  %v1192 = vadd.f32 %v1179, %v1191
  %v1193 = vpop.f32.mrf.mxu0
  %1194 = vdwg.mxu0
  %1195 = vmatpush.bf16.msra.mxu0 %v906
  %1196 = vmatpush.bf16.msra.mxu0 %v905
  %1197 = vmatpush.bf16.msra.mxu0 %v904
  %1198 = vmatpush.bf16.msra.mxu0 %v903
  %1199 = vmatpush.bf16.msra.mxu0 %v902
  %1200 = vmatpush.bf16.msra.mxu0 %v901
  %1201 = vmatpush.bf16.msra.mxu0 %v900
  %1202 = vmatpush.bf16.msra.mxu0 %v899
  %1203 = vmatmul.bf16.gmra.mxu0 %v299
  %v1204 = vpop.f32.mrf.mxu0
  %v1205 = vadd.f32 %v1192, %v1204
  %v1206 = vpop.f32.mrf.mxu0
  %1207 = vdwg.mxu0
  %1208 = vmatpush.bf16.msra.mxu0 %v914
  %1209 = vmatpush.bf16.msra.mxu0 %v913
  %1210 = vmatpush.bf16.msra.mxu0 %v912
  %1211 = vmatpush.bf16.msra.mxu0 %v911
  %1212 = vmatpush.bf16.msra.mxu0 %v910
  %1213 = vmatpush.bf16.msra.mxu0 %v909
  %1214 = vmatpush.bf16.msra.mxu0 %v908
  %1215 = vmatpush.bf16.msra.mxu0 %v907
  %1216 = vmatmul.bf16.gmra.mxu0 %v300
  %v1217 = vpop.f32.mrf.mxu0
  %v1218 = vadd.f32 %v1205, %v1217
  %v1219 = vpop.f32.mrf.mxu0
  %1220 = vdwg.mxu0
  %1221 = vmatpush.bf16.msra.mxu0 %v922
  %1222 = vmatpush.bf16.msra.mxu0 %v921
  %1223 = vmatpush.bf16.msra.mxu0 %v920
  %1224 = vmatpush.bf16.msra.mxu0 %v919
  %1225 = vmatpush.bf16.msra.mxu0 %v918
  %1226 = vmatpush.bf16.msra.mxu0 %v917
  %1227 = vmatpush.bf16.msra.mxu0 %v916
  %1228 = vmatpush.bf16.msra.mxu0 %v915
  %1229 = vmatmul.bf16.gmra.mxu0 %v301
  %v1230 = vpop.f32.mrf.mxu0
  %v1231 = vadd.f32 %v1218, %v1230
  %v1232 = vpop.f32.mrf.mxu0
  %1233 = vdwg.mxu0
  %1234 = vmatpush.bf16.msra.mxu0 %v930
  %1235 = vmatpush.bf16.msra.mxu0 %v929
  %1236 = vmatpush.bf16.msra.mxu0 %v928
  %1237 = vmatpush.bf16.msra.mxu0 %v927
  %1238 = vmatpush.bf16.msra.mxu0 %v926
  %1239 = vmatpush.bf16.msra.mxu0 %v925
  %1240 = vmatpush.bf16.msra.mxu0 %v924
  %1241 = vmatpush.bf16.msra.mxu0 %v923
  %1242 = vmatmul.bf16.gmra.mxu0 %v302
  %v1243 = vpop.f32.mrf.mxu0
  %v1244 = vadd.f32 %v1231, %v1243
  %v1245 = vpop.f32.mrf.mxu0
  %1246 = vdwg.mxu0
  %1247 = vmatpush.bf16.msra.mxu0 %v938
  %1248 = vmatpush.bf16.msra.mxu0 %v937
  %1249 = vmatpush.bf16.msra.mxu0 %v936
  %1250 = vmatpush.bf16.msra.mxu0 %v935
  %1251 = vmatpush.bf16.msra.mxu0 %v934
  %1252 = vmatpush.bf16.msra.mxu0 %v933
  %1253 = vmatpush.bf16.msra.mxu0 %v932
  %1254 = vmatpush.bf16.msra.mxu0 %v931
  %1255 = vmatmul.bf16.gmra.mxu0 %v303
  %v1256 = vpop.f32.mrf.mxu0
  %v1257 = vadd.f32 %v1244, %v1256
  %v1258 = vpop.f32.mrf.mxu0
  %1259 = vdwg.mxu0
  %1260 = vmatpush.bf16.msra.mxu0 %v946
  %1261 = vmatpush.bf16.msra.mxu0 %v945
  %1262 = vmatpush.bf16.msra.mxu0 %v944
  %1263 = vmatpush.bf16.msra.mxu0 %v943
  %1264 = vmatpush.bf16.msra.mxu0 %v942
  %1265 = vmatpush.bf16.msra.mxu0 %v941
  %1266 = vmatpush.bf16.msra.mxu0 %v940
  %1267 = vmatpush.bf16.msra.mxu0 %v939
  %1268 = vmatmul.bf16.gmra.mxu0 %v304
  %v1269 = vpop.f32.mrf.mxu0
  %v1270 = vadd.f32 %v1257, %v1269
  %v1271 = vpop.f32.mrf.mxu0
  %1272 = vdwg.mxu0
  %1273 = vmatpush.bf16.msra.mxu0 %v954
  %1274 = vmatpush.bf16.msra.mxu0 %v953
  %1275 = vmatpush.bf16.msra.mxu0 %v952
  %1276 = vmatpush.bf16.msra.mxu0 %v951
  %1277 = vmatpush.bf16.msra.mxu0 %v950
  %1278 = vmatpush.bf16.msra.mxu0 %v949
  %1279 = vmatpush.bf16.msra.mxu0 %v948
  %1280 = vmatpush.bf16.msra.mxu0 %v947
  %1281 = vmatmul.bf16.gmra.mxu0 %v305
  %v1282 = vpop.f32.mrf.mxu0
  %v1283 = vadd.f32 %v1270, %v1282
  %v1284 = vpop.f32.mrf.mxu0
  %1285 = vdwg.mxu0
  %1286 = vmatpush.bf16.msra.mxu0 %v962
  %1287 = vmatpush.bf16.msra.mxu0 %v961
  %1288 = vmatpush.bf16.msra.mxu0 %v960
  %1289 = vmatpush.bf16.msra.mxu0 %v959
  %1290 = vmatpush.bf16.msra.mxu0 %v958
  %1291 = vmatpush.bf16.msra.mxu0 %v957
  %1292 = vmatpush.bf16.msra.mxu0 %v956
  %1293 = vmatpush.bf16.msra.mxu0 %v955
  %1294 = vmatmul.bf16.gmra.mxu0 %v306
  %v1295 = vpop.f32.mrf.mxu0
  %v1296 = vadd.f32 %v1283, %v1295
  %v1297 = vpop.f32.mrf.mxu0
  %1298 = vdwg.mxu0
  %v1299 = vadd.f32 %v28, %v1296
  %1300 = vst [vmem:[#allocation2] sm:$0x3] %v1299
  // Predicated region
  $region30: #{cxr_forward.5} parent=0 // pred_check
    %p1301 = pneg %p23
  $region31: #{cxr_forward.5} parent=0 // pred_check_branch
    %1303 = sbr.rel (%p1301) target = $region33
  $region32: #{cxr_forward.5} parent=0 // pred_region
    %v1304 = vld [vmem:[#allocation2] sm:$0x3]
    %v1305 = vld [vmem:[%s2] sm:$0x1]
    %v1307 = vperm.slane %v1305, 0
    %v1309 = vadd.f32 %v1304, %v1307
    %v1310 = vld [vmem:[%s3] sm:$0x1]
    %v1311 = vld [vmem:[%s4] sm:$0x1]
    %vm1312 = vcmask 1041408
    %v1313 = vsel %vm1312, %v1309, 0.0
    %1314 = vadd.xlane.f32.xlu0 %v1313
    %v1315 = vpop.xlane.xlu0 %1314
    %v1316 = vrcp.pop 128.0
    %v1317 = vmul.f32 128.0, %v1316
    %v1318 = vsub.f32 1.0, %v1317
    %v1319 = vmul.f32 %v1316, %v1318
    %v1320 = vadd.f32 %v1316, %v1319
    %vm1321 = vweird.f32 %v1316
    %v1322 = vsel %vm1321, %v1316, %v1320
    %v1323 = vmul.f32 %v1315, %v1322
    %v1324 = vsub.f32 %v1309, %v1323
    %v1325 = vmul.f32 %v1324, %v1324
    %v1326 = vsel %vm1312, %v1325, 0.0
    %1327 = vadd.xlane.f32.xlu0 %v1326
    %v1328 = vpop.xlane.xlu0 %1327
    %v1329 = vmul.f32 %v1328, %v1322
    %v1330 = vadd.f32 %v1329, 1e-05
    %v1331 = vrsqrt.pop %v1330
    %v1332 = vmul.f32 %v1331, %v1330
    %v1333 = vmul.f32 %v1332, %v1331
    %v1334 = vmul.f32 0.5, %v1333
    %v1335 = vsub.f32 1.5, %v1334
    %v1336 = vmul.f32 %v1331, %v1335
    %vm1337 = vweird.f32 %v1330
    %vm1338 = vweird.f32 %v1331
    %vm1339 = vmor %vm1337, %vm1338
    %v1340 = vsel %vm1339, %v1331, %v1336
    %v1341 = vmul.f32 %v1324, %v1340
    %v1343 = vperm.slane %v1310, 0
    %v1345 = vmul.f32 %v1341, %v1343
    %v1347 = vperm.slane %v1311, 0
    %v1349 = vadd.f32 %v1345, %v1347
    %v1350 = vmax.f32 %v1349, 0.0
    %v1351 = vld [vmem:[%s5] sm:$0x1]
    %v1353 = vperm.slane %v1351, 0
    %v1355 = vadd.f32 %v1350, %v1353
    %1356 = vst [vmem:[%s6] sm:$0x3] %v1355
  $region33: #{cxr_forward.5} parent=0 // pred_fallthru
    _
  // Predicated region
  $region34: #{cxr_forward.5} parent=0 // pred_check
    _
  $region35: #{cxr_forward.5} parent=0 // pred_check_branch
    %1358 = sbr.rel (0) target = $region37
  $region36: #{cxr_forward.5} parent=0 // pred_region
    _
  $region37: #{cxr_forward.5} parent=0 // pred_fallthru
    _
  // Predicated region
  $region38: #{cxr_forward.5} parent=0 // pred_check
    _
  $region39: #{cxr_forward.5} parent=0 // pred_check_branch
    %1360 = sbr.rel (0) target = $region41
  $region40: #{cxr_forward.5} parent=0 // pred_region
    _
  $region41: #{cxr_forward.5} parent=0 // pred_fallthru
    _

// kernel: cxr_forward.7
$region0: #{cxr_forward.7}
  #allocation0 [shape = 'u32[]', space=smem, size = 0x4, offset = 0x4, fixed_abs, tag = 'smem constant byte address 0x4 - core index']
  #allocation1 [shape = 'u32[72,128]{1,0:T(1,128)}', space=vmem, size = 0x9000, scoped, tag = 'internal scratch']
  #allocation2 [shape = 'bf16[16,128]{1,0:T(8,128)(2,1)}', space=vmem, size = 0x1000, scoped, tag = 'scratch operand']
  #allocation3 [shape = 'f32[16,1]{1,0:T(8,128)}', space=vmem, size = 0x2000, scoped, tag = 'scratch operand']
  #allocation4 [shape = 'f32[16,1]{1,0:T(8,128)}', space=vmem, size = 0x2000, scoped, tag = 'scratch operand']
  #allocation5 [shape = 'f32[16,1]{1,0:T(8,128)}', space=vmem, size = 0x2000, scoped, tag = 'scratch operand']
  %s0 = inlined_call_operand.vmem [shape: bf16[16,128], index: 0, kind: input, shape index: {}]
  %s1 = inlined_call_operand.vmem [shape: f32[1,128], index: 1, kind: input, shape index: {}]
  %s2 = inlined_call_operand.vmem [shape: f32[1,128], index: 2, kind: input, shape index: {}]
  %s3 = inlined_call_operand.vmem [shape: bf16[128,256], index: 3, kind: input, shape index: {}]
  %s4 = inlined_call_operand.vmem [shape: s32[16,1], index: 4, kind: input, shape index: {}]
  %s5 = inlined_call_operand.hbm [shape: bf16[16,256], index: 5, kind: output, shape index: {0}]
  %s6 = inlined_call_operand.vmem [shape: f32[16,1], index: 6, kind: output, shape index: {1}]
  %7 = xla_tuple %s5, %s6
  %s8 = sld [smem:[#allocation0]]
  $region46: #{cxr_forward.7} parent=0
    _
  %s10 = ssub.s32 1, %s8
  %s11 = scalar_select 0, %s10, %s8
  $region1: #{cxr_forward.7} parent=0
    #allocation6 [shape = 'u8[8192]{0}', space=vmem, size = 0x2000, scoped, tag = 'output window, operand 0, single buffered']
    #allocation7 [shape = 's32[1]{0}', space=sflag, size = 0x4, scoped, tag = 'scoped memory for cxr_forward.7']
    %12 = vsyncpa [#allocation7], 0
    // Predicated region
    $region2: #{cxr_forward.7} parent=1 // pred_check
      _
    $region3: #{cxr_forward.7} parent=1 // pred_check_branch
      %14 = sbr.rel (0) target = $region5
    $region4: #{cxr_forward.7} parent=1 // pred_region
      _
    $region5: #{cxr_forward.7} parent=1 // pred_fallthru
      _
    // Predicated region
    $region6: #{cxr_forward.7} parent=1 // pred_check
      _
    $region7: #{cxr_forward.7} parent=1 // pred_check_branch
      %16 = sbr.rel (0) target = $region9
    $region8: #{cxr_forward.7} parent=1 // pred_region
      _
    $region9: #{cxr_forward.7} parent=1 // pred_fallthru
      _
    // Predicated region
    $region10: #{cxr_forward.7} parent=1 // pred_check
      _
    $region11: #{cxr_forward.7} parent=1 // pred_check_branch
      %18 = sbr.rel (0) target = $region13
    $region12: #{cxr_forward.7} parent=1 // pred_region
      _
    $region13: #{cxr_forward.7} parent=1 // pred_fallthru
      _
    // Predicated region
    $region14: #{cxr_forward.7} parent=1 // pred_check
      _
    $region15: #{cxr_forward.7} parent=1 // pred_check_branch
      %20 = sbr.rel (0) target = $region17
    $region16: #{cxr_forward.7} parent=1 // pred_region
      _
    $region17: #{cxr_forward.7} parent=1 // pred_fallthru
      _
    // Predicated region
    $region18: #{cxr_forward.7} parent=1 // pred_check
      _
    $region19: #{cxr_forward.7} parent=1 // pred_check_branch
      %22 = sbr.rel (0) target = $region21
    $region20: #{cxr_forward.7} parent=1 // pred_region
      _
    $region21: #{cxr_forward.7} parent=1 // pred_fallthru
      _
    %p23 = scmp.eq.s32.totalorder 0, 0
    // Predicated region
    $region22: #{cxr_forward.7} parent=1 // pred_check
      %p24 = pneg %p23
    $region23: #{cxr_forward.7} parent=1 // pred_check_branch
      %26 = sbr.rel (%p24) target = $region25
    $region24: #{cxr_forward.7} parent=1 // pred_region
      %v27 = vld [vmem:[%s0] sm:$0xf]
      %v28 = vld [vmem:[%s0 + $0x4] sm:$0xf]
      %v29 = vunpack.c.l.bf16 %v27
      %v30 = vunpack.c.l.bf16 %v28
      %v31 = vld [vmem:[%s1] sm:$0x1]
      %v32 = vld [vmem:[%s2] sm:$0x1]
      %33 = vadd.xlane.f32.xlu0 %v29
      %v34 = vpop.xlane.xlu0 %33
      %35 = vadd.xlane.f32.xlu0 %v30
      %v36 = vpop.xlane.xlu0 %35
      %v37 = vrcp.pop 128.0
      %v38 = vmul.f32 128.0, %v37
      %v39 = vsub.f32 1.0, %v38
      %v40 = vmul.f32 %v37, %v39
      %v41 = vadd.f32 %v37, %v40
      %vm42 = vweird.f32 %v37
      %v43 = vsel %vm42, %v37, %v41
      %v44 = vmul.f32 %v34, %v43
      %v45 = vmul.f32 %v36, %v43
      %v46 = vsub.f32 %v29, %v44
      %v47 = vsub.f32 %v30, %v45
      %v48 = vmul.f32 %v46, %v46
      %v49 = vmul.f32 %v47, %v47
      %50 = vadd.xlane.f32.xlu0 %v48
      %v51 = vpop.xlane.xlu0 %50
      %52 = vadd.xlane.f32.xlu0 %v49
      %v53 = vpop.xlane.xlu0 %52
      %v54 = vmul.f32 %v51, %v43
      %v55 = vmul.f32 %v53, %v43
      %v56 = vadd.f32 %v54, 1e-05
      %v57 = vadd.f32 %v55, 1e-05
      %v58 = vrsqrt.pop %v56
      %v59 = vmul.f32 %v58, %v56
      %v60 = vmul.f32 %v59, %v58
      %v61 = vmul.f32 0.5, %v60
      %v62 = vsub.f32 1.5, %v61
      %v63 = vmul.f32 %v58, %v62
      %vm64 = vweird.f32 %v56
      %vm65 = vweird.f32 %v58
      %vm66 = vmor %vm64, %vm65
      %v67 = vsel %vm66, %v58, %v63
      %v68 = vrsqrt.pop %v57
      %v69 = vmul.f32 %v68, %v57
      %v70 = vmul.f32 %v69, %v68
      %v71 = vmul.f32 0.5, %v70
      %v72 = vsub.f32 1.5, %v71
      %v73 = vmul.f32 %v68, %v72
      %vm74 = vweird.f32 %v57
      %vm75 = vweird.f32 %v68
      %vm76 = vmor %vm74, %vm75
      %v77 = vsel %vm76, %v68, %v73
      %v78 = vmul.f32 %v46, %v67
      %v79 = vmul.f32 %v47, %v77
      %v81 = vperm.slane %v31, 0
      %v83 = vmul.f32 %v78, %v81
      %v84 = vmul.f32 %v79, %v81
      %v86 = vperm.slane %v32, 0
      %v88 = vadd.f32 %v83, %v86
      %v89 = vadd.f32 %v84, %v86
      %v90 = vpack.c.bf16 %v88, %v88
      %v91 = vpack.c.bf16 %v89, %v89
      %92 = vst [vmem:[#allocation2] sm:$0xf] %v90
      %93 = vst [vmem:[#allocation2 + $0x4] sm:$0xf] %v91
      %vm94 = vcmask 7168
      %95 = vst.msk [vmem:[#allocation3] sm:$0xff] %vm94, -inf
      %96 = vst.msk [vmem:[#allocation3 + $0x8] sm:$0xff] %vm94, -inf
      %97 = vst.msk [vmem:[#allocation4] sm:$0xff] %vm94, 0.0
      %98 = vst.msk [vmem:[#allocation4 + $0x8] sm:$0xff] %vm94, 0.0
      %99 = vst.msk [vmem:[#allocation5] sm:$0xff] %vm94, 0.0
      %100 = vst.msk [vmem:[#allocation5 + $0x8] sm:$0xff] %vm94, 0.0
    $region25: #{cxr_forward.7} parent=1 // pred_fallthru
      _
    %v101 = vld [vmem:[#allocation2] sm:$0xf]
    %v102 = vld [vmem:[#allocation2 + $0x4] sm:$0xf]
    %v103 = vld [vmem:[%s3] sm:$0xff]
    %v104 = vld [vmem:[%s3 + $0x8] sm:$0xff]
    %v105 = vld [vmem:[%s3 + $0x10] sm:$0xff]
    %v106 = vld [vmem:[%s3 + $0x18] sm:$0xff]
    %v107 = vld [vmem:[%s3 + $0x20] sm:$0xff]
    %v108 = vld [vmem:[%s3 + $0x28] sm:$0xff]
    %v109 = vld [vmem:[%s3 + $0x30] sm:$0xff]
    %v110 = vld [vmem:[%s3 + $0x38] sm:$0xff]
    %v111 = vld [vmem:[%s3 + $0x40] sm:$0xff]
    %v112 = vld [vmem:[%s3 + $0x48] sm:$0xff]
    %v113 = vld [vmem:[%s3 + $0x50] sm:$0xff]
    %v114 = vld [vmem:[%s3 + $0x58] sm:$0xff]
    %v115 = vld [vmem:[%s3 + $0x60] sm:$0xff]
    %v116 = vld [vmem:[%s3 + $0x68] sm:$0xff]
    %v117 = vld [vmem:[%s3 + $0x70] sm:$0xff]
    %v118 = vld [vmem:[%s3 + $0x78] sm:$0xff]
    %v121 = vunpack.c.l.b16 %v101
    %v122 = vunpack.c.l.b16 %v102
    %v123 = vpack.c.b16 %v122, %v121
    %v141 = vunpack.c.l.b16 %v103
    %v142 = vunpack.c.h.b16 %v103
    %v143 = vunpack.c.l.b16 %v104
    %v144 = vunpack.c.h.b16 %v104
    %v145 = vunpack.c.l.b16 %v105
    %v146 = vunpack.c.h.b16 %v105
    %v147 = vunpack.c.l.b16 %v106
    %v148 = vunpack.c.h.b16 %v106
    %v149 = vunpack.c.l.b16 %v107
    %v150 = vunpack.c.h.b16 %v107
    %v151 = vunpack.c.l.b16 %v108
    %v152 = vunpack.c.h.b16 %v108
    %v153 = vunpack.c.l.b16 %v109
    %v154 = vunpack.c.h.b16 %v109
    %v155 = vunpack.c.l.b16 %v110
    %v156 = vunpack.c.h.b16 %v110
    %v157 = vunpack.c.l.b16 %v111
    %v158 = vunpack.c.h.b16 %v111
    %v159 = vunpack.c.l.b16 %v112
    %v160 = vunpack.c.h.b16 %v112
    %v161 = vunpack.c.l.b16 %v113
    %v162 = vunpack.c.h.b16 %v113
    %v163 = vunpack.c.l.b16 %v114
    %v164 = vunpack.c.h.b16 %v114
    %v165 = vunpack.c.l.b16 %v115
    %v166 = vunpack.c.h.b16 %v115
    %v167 = vunpack.c.l.b16 %v116
    %v168 = vunpack.c.h.b16 %v116
    %v169 = vunpack.c.l.b16 %v117
    %v170 = vunpack.c.h.b16 %v117
    %v171 = vunpack.c.l.b16 %v118
    %v172 = vunpack.c.h.b16 %v118
    %v173 = vpack.c.b16 %v143, %v141
    %v174 = vpack.c.b16 %v144, %v142
    %v175 = vpack.c.b16 %v147, %v145
    %v176 = vpack.c.b16 %v148, %v146
    %v177 = vpack.c.b16 %v151, %v149
    %v178 = vpack.c.b16 %v152, %v150
    %v179 = vpack.c.b16 %v155, %v153
    %v180 = vpack.c.b16 %v156, %v154
    %v181 = vpack.c.b16 %v159, %v157
    %v182 = vpack.c.b16 %v160, %v158
    %v183 = vpack.c.b16 %v163, %v161
    %v184 = vpack.c.b16 %v164, %v162
    %v185 = vpack.c.b16 %v167, %v165
    %v186 = vpack.c.b16 %v168, %v166
    %v187 = vpack.c.b16 %v171, %v169
    %v188 = vpack.c.b16 %v172, %v170
    %205 = vmatpush.bf16.msra.mxu0 %v187
    %206 = vmatpush.bf16.msra.mxu0 %v185
    %207 = vmatpush.bf16.msra.mxu0 %v183
    %208 = vmatpush.bf16.msra.mxu0 %v181
    %209 = vmatpush.bf16.msra.mxu0 %v179
    %210 = vmatpush.bf16.msra.mxu0 %v177
    %211 = vmatpush.bf16.msra.mxu0 %v175
    %212 = vmatpush.bf16.msra.mxu0 %v173
    %213 = vmatmul.bf16.gmra.mxu0 %v123
    %v214 = vpop.f32.mrf.mxu0
    %v215 = vadd.f32 0.0, %v214
    %v216 = vpop.f32.mrf.mxu0
    %v217 = vadd.f32 0.0, %v216
    %218 = vdwg.mxu0
    %219 = vmatpush.bf16.msra.mxu0 %v188
    %220 = vmatpush.bf16.msra.mxu0 %v186
    %221 = vmatpush.bf16.msra.mxu0 %v184
    %222 = vmatpush.bf16.msra.mxu0 %v182
    %223 = vmatpush.bf16.msra.mxu0 %v180
    %224 = vmatpush.bf16.msra.mxu0 %v178
    %225 = vmatpush.bf16.msra.mxu0 %v176
    %226 = vmatpush.bf16.msra.mxu0 %v174
    %227 = vmatmul.bf16.gmra.mxu0 %v123
    %v228 = vpop.f32.mrf.mxu0
    %v229 = vadd.f32 0.0, %v228
    %v230 = vpop.f32.mrf.mxu0
    %v231 = vadd.f32 0.0, %v230
    %232 = vdwg.mxu0
    %s233 = smul.u32 0, 256
    %v234 = vlaneseq
    %v235 = vand.u32 %v234, 127
    %v236 = vadd.s32 %v235, 128
    %v237 = vstv %s233
    %v238 = vadd.s32 %v237, %v235
    %v239 = vadd.s32 %v237, %v236
    %vm240 = vcmp.lt.s32.totalorder %v238, 256
    %vm241 = vcmp.lt.s32.totalorder %v239, 256
    %v242 = vsel %vm240, %v215, -1e+30
    %v243 = vsel %vm241, %v229, -1e+30
    %v244 = vsel %vm240, %v217, -1e+30
    %v245 = vsel %vm241, %v231, -1e+30
    %v246 = vpack.c.bf16 %v243, %v242
    %v247 = vpack.c.bf16 %v245, %v244
    %248 = vst [vmem:[#allocation6] sm:$0xff] %v246
    %249 = vst [vmem:[#allocation6 + $0x8] sm:$0xff] %v247
    %v250 = vld [vmem:[#allocation3] sm:$0xff]
    %v251 = vld [vmem:[#allocation3 + $0x8] sm:$0xff]
    %v252 = vmax.f32 %v242, %v243
    %253 = vmax.xlane.f32.xlu0 %v252
    %v254 = vpop.xlane.xlu0 %253
    %v255 = vmax.f32 %v244, %v245
    %256 = vmax.xlane.f32.xlu0 %v255
    %v257 = vpop.xlane.xlu0 %256
    %v258 = vmax.f32 %v250, %v254
    %v259 = vmax.f32 %v251, %v257
    %v260 = vld [vmem:[#allocation4] sm:$0xff]
    %v261 = vld [vmem:[#allocation4 + $0x8] sm:$0xff]
    %v262 = vsub.f32 %v250, %v258
    %v263 = vsub.f32 %v251, %v259
    %v264 = vmul.f32 %v262, 1.442695
    %v265 = vpow.pop %v264
    %v266 = vmul.f32 %v263, 1.442695
    %v267 = vpow.pop %v266
    %v268 = vmul.f32 %v260, %v265
    %v269 = vmul.f32 %v261, %v267
    %271 = vset.pattern.permute.xlu0 0
    %272 = vperm.xlu0 %271, %v258
    %v273 = vpop.permute.xlu0 %272
    %276 = vset.pattern.permute.xlu0 0
    %277 = vperm.xlu0 %276, %v259
    %v278 = vpop.permute.xlu0 %277
    %v280 = vsub.f32 %v242, %v273
    %v281 = vsub.f32 %v243, %v273
    %v282 = vsub.f32 %v244, %v278
    %v283 = vsub.f32 %v245, %v278
    %v284 = vmul.f32 %v280, 1.442695
    %v285 = vpow.pop %v284
    %v286 = vmul.f32 %v281, 1.442695
    %v287 = vpow.pop %v286
    %v288 = vmul.f32 %v282, 1.442695
    %v289 = vpow.pop %v288
    %v290 = vmul.f32 %v283, 1.442695
    %v291 = vpow.pop %v290
    %v292 = vadd.f32 %v285, %v287
    %293 = vadd.xlane.f32.xlu0 %v292
    %v294 = vpop.xlane.xlu0 %293
    %v295 = vadd.f32 %v289, %v291
    %296 = vadd.xlane.f32.xlu0 %v295
    %v297 = vpop.xlane.xlu0 %296
    %v298 = vadd.f32 %v268, %v294
    %v299 = vadd.f32 %v269, %v297
    %vm300 = vcmask 7168
    %301 = vst.msk [vmem:[#allocation4] sm:$0xff] %vm300, %v298
    %302 = vst.msk [vmem:[#allocation4 + $0x8] sm:$0xff] %vm300, %v299
    %303 = vst.msk [vmem:[#allocation3] sm:$0xff] %vm300, %v258
    %304 = vst.msk [vmem:[#allocation3 + $0x8] sm:$0xff] %vm300, %v259
    %v305 = vld [vmem:[%s4] sm:$0xff]
    %v306 = vld [vmem:[%s4 + $0x8] sm:$0xff]
    %307 = vset.pattern.permute.xlu0 0
    %308 = vperm.xlu0 %307, %v305
    %v309 = vpop.permute.xlu0 %308
    %310 = vset.pattern.permute.xlu0 0
    %311 = vperm.xlu0 %310, %v306
    %v312 = vpop.permute.xlu0 %311
    %vm313 = vcmp.eq.s32.totalorder %v238, %v309
    %vm314 = vcmp.eq.s32.totalorder %v239, %v309
    %vm315 = vcmp.eq.s32.totalorder %v238, %v312
    %vm316 = vcmp.eq.s32.totalorder %v239, %v312
    %v317 = vld [vmem:[#allocation5] sm:$0xff]
    %v318 = vld [vmem:[#allocation5 + $0x8] sm:$0xff]
    %v319 = vsel %vm313, %v242, 0.0
    %v320 = vsel %vm314, %v243, 0.0
    %v321 = vsel %vm315, %v244, 0.0
    %v322 = vsel %vm316, %v245, 0.0
    %v323 = vadd.f32 %v319, %v320
    %324 = vadd.xlane.f32.xlu0 %v323
    %v325 = vpop.xlane.xlu0 %324
    %v326 = vadd.f32 %v321, %v322
    %327 = vadd.xlane.f32.xlu0 %v326
    %v328 = vpop.xlane.xlu0 %327
    %v329 = vadd.f32 %v317, %v325
    %v330 = vadd.f32 %v318, %v328
    %331 = vst.msk [vmem:[#allocation5] sm:$0xff] %vm300, %v329
    %332 = vst.msk [vmem:[#allocation5 + $0x8] sm:$0xff] %vm300, %v330
    // Predicated region
    $region26: #{cxr_forward.7} parent=1 // pred_check
      %p333 = pneg %p23
    $region27: #{cxr_forward.7} parent=1 // pred_check_branch
      %335 = sbr.rel (%p333) target = $region29
    $region28: #{cxr_forward.7} parent=1 // pred_region
      %v336 = vld [vmem:[%s4] sm:$0xff]
      %v337 = vld [vmem:[%s4 + $0x8] sm:$0xff]
      %vm338 = vcmp.ne.s32.totalorder %v336, 4294967196
      %vm339 = vcmp.ne.s32.totalorder %v337, 4294967196
      %v340 = vld [vmem:[#allocation3] sm:$0xff]
      %v341 = vld [vmem:[#allocation3 + $0x8] sm:$0xff]
      %v342 = vld [vmem:[#allocation4] sm:$0xff]
      %v343 = vld [vmem:[#allocation4 + $0x8] sm:$0xff]
      %v344 = vlog2.pop %v342
      %v345 = vmul.f32 %v344, 0.6931472
      %v346 = vlog2.pop %v343
      %v347 = vmul.f32 %v346, 0.6931472
      %v348 = vadd.f32 %v340, %v345
      %v349 = vadd.f32 %v341, %v347
      %v350 = vld [vmem:[#allocation5] sm:$0xff]
      %v351 = vld [vmem:[#allocation5 + $0x8] sm:$0xff]
      %v352 = vsub.f32 %v348, %v350
      %v353 = vsub.f32 %v349, %v351
      %v354 = vsel %vm338, %v352, 0.0
      %v355 = vsel %vm339, %v353, 0.0
      %356 = vst.msk [vmem:[%s6] sm:$0xff] %vm300, %v354
      %357 = vst.msk [vmem:[%s6 + $0x8] sm:$0xff] %vm300, %v355
    $region29: #{cxr_forward.7} parent=1 // pred_fallthru
      _
    // Predicated region
    $region30: #{cxr_forward.7} parent=1 // pred_check
      _
    $region31: #{cxr_forward.7} parent=1 // pred_check_branch
      %359 = sbr.rel (0) target = $region33
    $region32: #{cxr_forward.7} parent=1 // pred_region
      %361 = vsyncadd [#allocation7], 0
      %s362 = sshll.u32 [#allocation6], 4
      %s363 = int_to_ptr.vmem [resolvable:$true] %s362
      %s364 = sshll.u32 %s5, 4
      %s365 = int_to_ptr.hbm [resolvable:$true] %s364
      %370 = dma.vmem_to_hbm [thread:$0]  %s363, 256, %s365, [#allocation7], 128, 128, 8
    $region33: #{cxr_forward.7} parent=1 // pred_fallthru
      _
    // Predicated region
    $region34: #{cxr_forward.7} parent=1 // pred_check
      _
    $region35: #{cxr_forward.7} parent=1 // pred_check_branch
      %372 = sbr.rel (0) target = $region37
    $region36: #{cxr_forward.7} parent=1 // pred_region
      _
    $region37: #{cxr_forward.7} parent=1 // pred_fallthru
      _
    // Predicated region
    $region38: #{cxr_forward.7} parent=1 // pred_check
      _
    $region39: #{cxr_forward.7} parent=1 // pred_check_branch
      %374 = sbr.rel (0) target = $region41
    $region40: #{cxr_forward.7} parent=1 // pred_region
      %376 = dma.done [#allocation7], 256
    $region41: #{cxr_forward.7} parent=1 // pred_fallthru
      _
    // Predicated region
    $region42: #{cxr_forward.7} parent=1 // pred_check
      _
    $region43: #{cxr_forward.7} parent=1 // pred_check_branch
      %378 = sbr.rel (0) target = $region45
    $region44: #{cxr_forward.7} parent=1 // pred_region
      _
    $region45: #{cxr_forward.7} parent=1 // pred_fallthru
      _
    %379 = vsyncpa [#allocation7], 1

// kernel: cxr_forward.6
$region0: #{cxr_forward.6}
  #allocation0 [shape = 'u32[]', space=smem, size = 0x4, offset = 0x4, fixed_abs, tag = 'smem constant byte address 0x4 - core index']
  #allocation1 [shape = 'u32[72,128]{1,0:T(1,128)}', space=vmem, size = 0x9000, scoped, tag = 'internal scratch']
  #allocation2 [shape = 'f32[2,8,128]{2,1,0:T(8,128)}', space=vmem, size = 0x2000, scoped, tag = 'scratch operand']
  %s0 = inlined_call_operand.vmem [shape: f32[2,8,128], index: 0, kind: input, shape index: {}]
  %s1 = inlined_call_operand.vmem [shape: f32[2,1,128], index: 1, kind: input, shape index: {}]
  %s2 = inlined_call_operand.vmem [shape: f32[2,1,128], index: 2, kind: input, shape index: {}]
  %s3 = inlined_call_operand.hbm [shape: bf16[2,128,384], index: 3, kind: input, shape index: {}]
  %s4 = inlined_call_operand.vmem [shape: f32[2,1,384], index: 4, kind: input, shape index: {}]
  %s5 = inlined_call_operand.vmem [shape: bf16[2,128,128], index: 5, kind: input, shape index: {}]
  %s6 = inlined_call_operand.vmem [shape: f32[2,1,128], index: 6, kind: input, shape index: {}]
  %s7 = inlined_call_operand.vmem [shape: f32[2,1,128], index: 7, kind: input, shape index: {}]
  %s8 = inlined_call_operand.vmem [shape: f32[2,1,128], index: 8, kind: input, shape index: {}]
  %s9 = inlined_call_operand.vmem [shape: bf16[2,128,512], index: 9, kind: input, shape index: {}]
  %s10 = inlined_call_operand.vmem [shape: f32[2,1,512], index: 10, kind: input, shape index: {}]
  %s11 = inlined_call_operand.vmem [shape: bf16[2,512,128], index: 11, kind: input, shape index: {}]
  %s12 = inlined_call_operand.vmem [shape: f32[2,1,128], index: 12, kind: input, shape index: {}]
  %s13 = inlined_call_operand.vmem [shape: f32[2,8,128], index: 13, kind: output, shape index: {}]
  %s14 = sld [smem:[#allocation0]]
  $region93: #{cxr_forward.6} parent=0
    _
  %s16 = ssub.s32 1, %s14
  %s17 = scalar_select 0, %s16, %s14
  $region1: #{cxr_forward.6} parent=0
    #allocation3 [shape = 'u8[196608]{0}', space=vmem, size = 0x30000, scoped, tag = 'input window, operand 3']
    #allocation4 [shape = 's32[2]{0}', space=sflag, size = 0x8, scoped, tag = 'scoped memory for cxr_forward.6']
    %18 = vsyncpa [#allocation4], 0
    %s19 = scalar_lea.sflag [#allocation4], 1
    %20 = vsyncpa %s19, 0
    loop: start=0, step=1, limit=6
    $region2: #{cxr_forward.6} parent=1 // loop_pre_header
      _
    $region3: #{cxr_forward.6} parent=1 // loop_header
      %s22 = sphi 0, %s26
      %p23 = scmp.ge.s32.totalorder %s22, 6
      %s29 = sphi 0, %s41
      %s30 = sphi 0, %s37
      %s31 = sphi 0, %s29
      %s32 = sphi 0, %s30
      %s33 = sphi 0, %s31
      %s34 = sphi 0, %s32
      %s44 = sphi 0, %s46
      %s47 = sphi 0, %s44
      %s48 = sphi 0, %s47
      %s64 = sphi 0, %s48
      %s70 = sphi 0, %s72
      %s73 = sphi 0, %s70
      %s74 = sphi 0, %s73
      %s90 = sphi 0, %s74
      %s96 = sphi 0, %s98
      %s99 = sphi 0, %s96
      %s100 = sphi 0, %s99
      %s116 = sphi 0, %s100
      %s122 = sphi 0, %s124
      %s125 = sphi 0, %s122
      %s126 = sphi 0, %s125
      %s142 = sphi 0, %s126
      %s148 = sphi 0, %s150
      %s151 = sphi 0, %s148
      %s152 = sphi 0, %s151
      %s168 = sphi 0, %s152
      %s174 = sphi 0, %s176
      %s177 = sphi 0, %s174
      %s178 = sphi 0, %s177
      %s194 = sphi 0, %s178
      %s200 = sphi 0, %s202
      %s203 = sphi 0, %s200
      %s204 = sphi 0, %s203
      %s220 = sphi 0, %s204
      %s226 = sphi 0, %s228
      %s229 = sphi 0, %s226
      %s230 = sphi 0, %s229
      %s246 = sphi 0, %s230
      %s252 = sphi 0, %s254
      %s255 = sphi 0, %s252
      %s256 = sphi 0, %s255
      %s272 = sphi 0, %s256
      %s278 = sphi 0, %s280
      %s281 = sphi 0, %s278
      %s282 = sphi 0, %s281
      %s298 = sphi 0, %s282
      %s304 = sphi 0, %s306
      %s307 = sphi 0, %s304
      %s308 = sphi 0, %s307
      %s324 = sphi 0, %s308
      %s330 = sphi 0, %s332
      %s333 = sphi 0, %s330
      %s334 = sphi 0, %s333
      %s350 = sphi 0, %s334
      %s356 = sphi 0, %s358
      %s359 = sphi 0, %s356
      %s360 = sphi 0, %s359
      %s376 = sphi 0, %s360
      %s382 = sphi 0, %s384
      %s385 = sphi 0, %s382
      %s386 = sphi 0, %s385
      %s402 = sphi 0, %s386
    $region4: #{cxr_forward.6} parent=1 // loop_header_branch
      %25 = sbr.rel (%p23) target = $region8
    $region5: #{cxr_forward.6} parent=1 // loop_body
      %s27 = ssub.s32 %s22, 1
      %s28 = ssub.s32 %s22, 2
      %s35 = sadd.s32 1, %s30
      %p36 = scmp.ge.s32.totalorder %s35, 2
      %s37 = scalar_select %p36, 0, %s35
      %s38 = sadd.s32 1, %s29
      %s39 = scalar_select %p36, %s38, %s29
      %p40 = scmp.ge.s32.totalorder %s39, 2
      %s41 = scalar_select %p40, 0, %s39
      %s42 = ssub.s32 %s30, %s37
      %p43 = scmp.eq.s32.totalorder %s42, 0
      %s45 = sadd.s32 %s44, 1
      %s46 = scalar_select %p43, %s44, %s45
      %p49 = pneg %p43
      %p50 = scmp.eq.s32.totalorder %s22, 3
      %p51 = por %p49, %p50
      %p52 = scmp.ne.s32.totalorder %s44, %s47
      %p53 = scmp.eq.s32.totalorder %s22, 0
      %p54 = por %p52, %p53
      %p55 = scmp.ne.s32.totalorder %s44, %s47
      %p56 = scmp.eq.s32.totalorder %s27, 3
      %p57 = por %p55, %p56
      %p58 = scmp.ne.s32.totalorder %s47, %s48
      %p59 = scmp.eq.s32.totalorder %s27, 0
      %p60 = por %p58, %p59
      %p61 = scmp.ne.s32.totalorder %s47, %s48
      %p62 = scmp.eq.s32.totalorder %s28, 3
      %p63 = por %p61, %p62
      %p65 = scmp.ne.s32.totalorder %s48, %s64
      %p66 = scmp.eq.s32.totalorder %s28, 0
      %p67 = por %p65, %p66
      %s68 = ssub.s32 %s29, %s41
      %p69 = scmp.eq.s32.totalorder %s68, 0
      %s71 = sadd.s32 %s70, 1
      %s72 = scalar_select %p69, %s70, %s71
      %p75 = pneg %p69
      %p76 = scmp.eq.s32.totalorder %s22, 3
      %p77 = por %p75, %p76
      %p78 = scmp.ne.s32.totalorder %s70, %s73
      %p79 = scmp.eq.s32.totalorder %s22, 0
      %p80 = por %p78, %p79
      %p81 = scmp.ne.s32.totalorder %s70, %s73
      %p82 = scmp.eq.s32.totalorder %s27, 3
      %p83 = por %p81, %p82
      %p84 = scmp.ne.s32.totalorder %s73, %s74
      %p85 = scmp.eq.s32.totalorder %s27, 0
      %p86 = por %p84, %p85
      %p87 = scmp.ne.s32.totalorder %s73, %s74
      %p88 = scmp.eq.s32.totalorder %s28, 3
      %p89 = por %p87, %p88
      %p91 = scmp.ne.s32.totalorder %s74, %s90
      %p92 = scmp.eq.s32.totalorder %s28, 0
      %p93 = por %p91, %p92
      %s94 = ssub.s32 %s29, %s41
      %p95 = scmp.eq.s32.totalorder %s94, 0
      %s97 = sadd.s32 %s96, 1
      %s98 = scalar_select %p95, %s96, %s97
      %p101 = pneg %p95
      %p102 = scmp.eq.s32.totalorder %s22, 3
      %p103 = por %p101, %p102
      %p104 = scmp.ne.s32.totalorder %s96, %s99
      %p105 = scmp.eq.s32.totalorder %s22, 0
      %p106 = por %p104, %p105
      %p107 = scmp.ne.s32.totalorder %s96, %s99
      %p108 = scmp.eq.s32.totalorder %s27, 3
      %p109 = por %p107, %p108
      %p110 = scmp.ne.s32.totalorder %s99, %s100
      %p111 = scmp.eq.s32.totalorder %s27, 0
      %p112 = por %p110, %p111
      %p113 = scmp.ne.s32.totalorder %s99, %s100
      %p114 = scmp.eq.s32.totalorder %s28, 3
      %p115 = por %p113, %p114
      %p117 = scmp.ne.s32.totalorder %s100, %s116
      %p118 = scmp.eq.s32.totalorder %s28, 0
      %p119 = por %p117, %p118
      %s120 = ssub.s32 %s29, %s41
      %p121 = scmp.eq.s32.totalorder %s120, 0
      %s123 = sadd.s32 %s122, 1
      %s124 = scalar_select %p121, %s122, %s123
      %p127 = pneg %p121
      %p128 = scmp.eq.s32.totalorder %s22, 3
      %p129 = por %p127, %p128
      %p130 = scmp.ne.s32.totalorder %s122, %s125
      %p131 = scmp.eq.s32.totalorder %s22, 0
      %p132 = por %p130, %p131
      %p133 = scmp.ne.s32.totalorder %s122, %s125
      %p134 = scmp.eq.s32.totalorder %s27, 3
      %p135 = por %p133, %p134
      %p136 = scmp.ne.s32.totalorder %s125, %s126
      %p137 = scmp.eq.s32.totalorder %s27, 0
      %p138 = por %p136, %p137
      %p139 = scmp.ne.s32.totalorder %s125, %s126
      %p140 = scmp.eq.s32.totalorder %s28, 3
      %p141 = por %p139, %p140
      %p143 = scmp.ne.s32.totalorder %s126, %s142
      %p144 = scmp.eq.s32.totalorder %s28, 0
      %p145 = por %p143, %p144
      %s146 = ssub.s32 %s29, %s41
      %p147 = scmp.eq.s32.totalorder %s146, 0
      %s149 = sadd.s32 %s148, 1
      %s150 = scalar_select %p147, %s148, %s149
      %p153 = pneg %p147
      %p154 = scmp.eq.s32.totalorder %s22, 3
      %p155 = por %p153, %p154
      %p156 = scmp.ne.s32.totalorder %s148, %s151
      %p157 = scmp.eq.s32.totalorder %s22, 0
      %p158 = por %p156, %p157
      %p159 = scmp.ne.s32.totalorder %s148, %s151
      %p160 = scmp.eq.s32.totalorder %s27, 3
      %p161 = por %p159, %p160
      %p162 = scmp.ne.s32.totalorder %s151, %s152
      %p163 = scmp.eq.s32.totalorder %s27, 0
      %p164 = por %p162, %p163
      %p165 = scmp.ne.s32.totalorder %s151, %s152
      %p166 = scmp.eq.s32.totalorder %s28, 3
      %p167 = por %p165, %p166
      %p169 = scmp.ne.s32.totalorder %s152, %s168
      %p170 = scmp.eq.s32.totalorder %s28, 0
      %p171 = por %p169, %p170
      %s172 = ssub.s32 %s29, %s41
      %p173 = scmp.eq.s32.totalorder %s172, 0
      %s175 = sadd.s32 %s174, 1
      %s176 = scalar_select %p173, %s174, %s175
      %p179 = pneg %p173
      %p180 = scmp.eq.s32.totalorder %s22, 3
      %p181 = por %p179, %p180
      %p182 = scmp.ne.s32.totalorder %s174, %s177
      %p183 = scmp.eq.s32.totalorder %s22, 0
      %p184 = por %p182, %p183
      %p185 = scmp.ne.s32.totalorder %s174, %s177
      %p186 = scmp.eq.s32.totalorder %s27, 3
      %p187 = por %p185, %p186
      %p188 = scmp.ne.s32.totalorder %s177, %s178
      %p189 = scmp.eq.s32.totalorder %s27, 0
      %p190 = por %p188, %p189
      %p191 = scmp.ne.s32.totalorder %s177, %s178
      %p192 = scmp.eq.s32.totalorder %s28, 3
      %p193 = por %p191, %p192
      %p195 = scmp.ne.s32.totalorder %s178, %s194
      %p196 = scmp.eq.s32.totalorder %s28, 0
      %p197 = por %p195, %p196
      %s198 = ssub.s32 %s29, %s41
      %p199 = scmp.eq.s32.totalorder %s198, 0
      %s201 = sadd.s32 %s200, 1
      %s202 = scalar_select %p199, %s200, %s201
      %p205 = pneg %p199
      %p206 = scmp.eq.s32.totalorder %s22, 3
      %p207 = por %p205, %p206
      %p208 = scmp.ne.s32.totalorder %s200, %s203
      %p209 = scmp.eq.s32.totalorder %s22, 0
      %p210 = por %p208, %p209
      %p211 = scmp.ne.s32.totalorder %s200, %s203
      %p212 = scmp.eq.s32.totalorder %s27, 3
      %p213 = por %p211, %p212
      %p214 = scmp.ne.s32.totalorder %s203, %s204
      %p215 = scmp.eq.s32.totalorder %s27, 0
      %p216 = por %p214, %p215
      %p217 = scmp.ne.s32.totalorder %s203, %s204
      %p218 = scmp.eq.s32.totalorder %s28, 3
      %p219 = por %p217, %p218
      %p221 = scmp.ne.s32.totalorder %s204, %s220
      %p222 = scmp.eq.s32.totalorder %s28, 0
      %p223 = por %p221, %p222
      %s224 = ssub.s32 %s29, %s41
      %p225 = scmp.eq.s32.totalorder %s224, 0
      %s227 = sadd.s32 %s226, 1
      %s228 = scalar_select %p225, %s226, %s227
      %p231 = pneg %p225
      %p232 = scmp.eq.s32.totalorder %s22, 3
      %p233 = por %p231, %p232
      %p234 = scmp.ne.s32.totalorder %s226, %s229
      %p235 = scmp.eq.s32.totalorder %s22, 0
      %p236 = por %p234, %p235
      %p237 = scmp.ne.s32.totalorder %s226, %s229
      %p238 = scmp.eq.s32.totalorder %s27, 3
      %p239 = por %p237, %p238
      %p240 = scmp.ne.s32.totalorder %s229, %s230
      %p241 = scmp.eq.s32.totalorder %s27, 0
      %p242 = por %p240, %p241
      %p243 = scmp.ne.s32.totalorder %s229, %s230
      %p244 = scmp.eq.s32.totalorder %s28, 3
      %p245 = por %p243, %p244
      %p247 = scmp.ne.s32.totalorder %s230, %s246
      %p248 = scmp.eq.s32.totalorder %s28, 0
      %p249 = por %p247, %p248
      %s250 = ssub.s32 %s29, %s41
      %p251 = scmp.eq.s32.totalorder %s250, 0
      %s253 = sadd.s32 %s252, 1
      %s254 = scalar_select %p251, %s252, %s253
      %p257 = pneg %p251
      %p258 = scmp.eq.s32.totalorder %s22, 3
      %p259 = por %p257, %p258
      %p260 = scmp.ne.s32.totalorder %s252, %s255
      %p261 = scmp.eq.s32.totalorder %s22, 0
      %p262 = por %p260, %p261
      %p263 = scmp.ne.s32.totalorder %s252, %s255
      %p264 = scmp.eq.s32.totalorder %s27, 3
      %p265 = por %p263, %p264
      %p266 = scmp.ne.s32.totalorder %s255, %s256
      %p267 = scmp.eq.s32.totalorder %s27, 0
      %p268 = por %p266, %p267
      %p269 = scmp.ne.s32.totalorder %s255, %s256
      %p270 = scmp.eq.s32.totalorder %s28, 3
      %p271 = por %p269, %p270
      %p273 = scmp.ne.s32.totalorder %s256, %s272
      %p274 = scmp.eq.s32.totalorder %s28, 0
      %p275 = por %p273, %p274
      %s276 = ssub.s32 %s29, %s41
      %p277 = scmp.eq.s32.totalorder %s276, 0
      %s279 = sadd.s32 %s278, 1
      %s280 = scalar_select %p277, %s278, %s279
      %p283 = pneg %p277
      %p284 = scmp.eq.s32.totalorder %s22, 3
      %p285 = por %p283, %p284
      %p286 = scmp.ne.s32.totalorder %s278, %s281
      %p287 = scmp.eq.s32.totalorder %s22, 0
      %p288 = por %p286, %p287
      %p289 = scmp.ne.s32.totalorder %s278, %s281
      %p290 = scmp.eq.s32.totalorder %s27, 3
      %p291 = por %p289, %p290
      %p292 = scmp.ne.s32.totalorder %s281, %s282
      %p293 = scmp.eq.s32.totalorder %s27, 0
      %p294 = por %p292, %p293
      %p295 = scmp.ne.s32.totalorder %s281, %s282
      %p296 = scmp.eq.s32.totalorder %s28, 3
      %p297 = por %p295, %p296
      %p299 = scmp.ne.s32.totalorder %s282, %s298
      %p300 = scmp.eq.s32.totalorder %s28, 0
      %p301 = por %p299, %p300
      %s302 = ssub.s32 %s29, %s41
      %p303 = scmp.eq.s32.totalorder %s302, 0
      %s305 = sadd.s32 %s304, 1
      %s306 = scalar_select %p303, %s304, %s305
      %p309 = pneg %p303
      %p310 = scmp.eq.s32.totalorder %s22, 3
      %p311 = por %p309, %p310
      %p312 = scmp.ne.s32.totalorder %s304, %s307
      %p313 = scmp.eq.s32.totalorder %s22, 0
      %p314 = por %p312, %p313
      %p315 = scmp.ne.s32.totalorder %s304, %s307
      %p316 = scmp.eq.s32.totalorder %s27, 3
      %p317 = por %p315, %p316
      %p318 = scmp.ne.s32.totalorder %s307, %s308
      %p319 = scmp.eq.s32.totalorder %s27, 0
      %p320 = por %p318, %p319
      %p321 = scmp.ne.s32.totalorder %s307, %s308
      %p322 = scmp.eq.s32.totalorder %s28, 3
      %p323 = por %p321, %p322
      %p325 = scmp.ne.s32.totalorder %s308, %s324
      %p326 = scmp.eq.s32.totalorder %s28, 0
      %p327 = por %p325, %p326
      %s328 = ssub.s32 %s29, %s41
      %p329 = scmp.eq.s32.totalorder %s328, 0
      %s331 = sadd.s32 %s330, 1
      %s332 = scalar_select %p329, %s330, %s331
      %p335 = pneg %p329
      %p336 = scmp.eq.s32.totalorder %s22, 3
      %p337 = por %p335, %p336
      %p338 = scmp.ne.s32.totalorder %s330, %s333
      %p339 = scmp.eq.s32.totalorder %s22, 0
      %p340 = por %p338, %p339
      %p341 = scmp.ne.s32.totalorder %s330, %s333
      %p342 = scmp.eq.s32.totalorder %s27, 3
      %p343 = por %p341, %p342
      %p344 = scmp.ne.s32.totalorder %s333, %s334
      %p345 = scmp.eq.s32.totalorder %s27, 0
      %p346 = por %p344, %p345
      %p347 = scmp.ne.s32.totalorder %s333, %s334
      %p348 = scmp.eq.s32.totalorder %s28, 3
      %p349 = por %p347, %p348
      %p351 = scmp.ne.s32.totalorder %s334, %s350
      %p352 = scmp.eq.s32.totalorder %s28, 0
      %p353 = por %p351, %p352
      %s354 = ssub.s32 %s29, %s41
      %p355 = scmp.eq.s32.totalorder %s354, 0
      %s357 = sadd.s32 %s356, 1
      %s358 = scalar_select %p355, %s356, %s357
      %p361 = pneg %p355
      %p362 = scmp.eq.s32.totalorder %s22, 3
      %p363 = por %p361, %p362
      %p364 = scmp.ne.s32.totalorder %s356, %s359
      %p365 = scmp.eq.s32.totalorder %s22, 0
      %p366 = por %p364, %p365
      %p367 = scmp.ne.s32.totalorder %s356, %s359
      %p368 = scmp.eq.s32.totalorder %s27, 3
      %p369 = por %p367, %p368
      %p370 = scmp.ne.s32.totalorder %s359, %s360
      %p371 = scmp.eq.s32.totalorder %s27, 0
      %p372 = por %p370, %p371
      %p373 = scmp.ne.s32.totalorder %s359, %s360
      %p374 = scmp.eq.s32.totalorder %s28, 3
      %p375 = por %p373, %p374
      %p377 = scmp.ne.s32.totalorder %s360, %s376
      %p378 = scmp.eq.s32.totalorder %s28, 0
      %p379 = por %p377, %p378
      %s380 = ssub.s32 %s30, %s37
      %p381 = scmp.eq.s32.totalorder %s380, 0
      %s383 = sadd.s32 %s382, 1
      %s384 = scalar_select %p381, %s382, %s383
      %p387 = pneg %p381
      %p388 = scmp.eq.s32.totalorder %s22, 3
      %p389 = por %p387, %p388
      %p390 = scmp.ne.s32.totalorder %s382, %s385
      %p391 = scmp.eq.s32.totalorder %s22, 0
      %p392 = por %p390, %p391
      %p393 = scmp.ne.s32.totalorder %s382, %s385
      %p394 = scmp.eq.s32.totalorder %s27, 3
      %p395 = por %p393, %p394
      %p396 = scmp.ne.s32.totalorder %s385, %s386
      %p397 = scmp.eq.s32.totalorder %s27, 0
      %p398 = por %p396, %p397
      %p399 = scmp.ne.s32.totalorder %s385, %s386
      %p400 = scmp.eq.s32.totalorder %s28, 3
      %p401 = por %p399, %p400
      %p403 = scmp.ne.s32.totalorder %s386, %s402
      %p404 = scmp.eq.s32.totalorder %s28, 0
      %p405 = por %p403, %p404
      %p406 = scmp.le.s32.totalorder 1, %s22
      %p407 = scmp.lt.s32.totalorder %s22, 5
      %p408 = pnand %p406, %p407
      %p409 = pneg %p408
      // Predicated region
      $region9: #{cxr_forward.6} parent=5 // pred_check
        _
      $region10: #{cxr_forward.6} parent=5 // pred_check_branch
        %411 = sbr.rel (%p408) target = $region12
      $region11: #{cxr_forward.6} parent=5 // pred_region
        %s412 = ssub.s32 %s22, 1
      $region12: #{cxr_forward.6} parent=5 // pred_fallthru
        _
      %p413 = scmp.lt.s32.totalorder %s22, 4
      // Predicated region
      $region13: #{cxr_forward.6} parent=5 // pred_check
        %p414 = pneg %p413
      $region14: #{cxr_forward.6} parent=5 // pred_check_branch
        %416 = sbr.rel (%p414) target = $region16
      $region15: #{cxr_forward.6} parent=5 // pred_region
        // Predicated region
        $region17: #{cxr_forward.6} parent=15 // pred_check
          %p417 = pneg %p54
        $region18: #{cxr_forward.6} parent=15 // pred_check_branch
          %419 = sbr.rel (%p417) target = $region20
        $region19: #{cxr_forward.6} parent=15 // pred_region
          %p420 = scmp.lt.s32.totalorder %s30, 1
          %s421 = scalar_select %p420, %s30, 1
          %s422 = smul.addr %s421, 8
          %s423 = scalar_lea.vmem %s0, %s422
        $region20: #{cxr_forward.6} parent=15 // pred_fallthru
          _
        // Predicated region
        $region21: #{cxr_forward.6} parent=15 // pred_check
          %p424 = pneg %p80
        $region22: #{cxr_forward.6} parent=15 // pred_check_branch
          %426 = sbr.rel (%p424) target = $region24
        $region23: #{cxr_forward.6} parent=15 // pred_region
          %p427 = scmp.lt.s32.totalorder %s29, 1
          %s428 = scalar_select %p427, %s29, 1
          %s429 = scalar_lea.vmem %s1, %s428
        $region24: #{cxr_forward.6} parent=15 // pred_fallthru
          _
        // Predicated region
        $region25: #{cxr_forward.6} parent=15 // pred_check
          %p430 = pneg %p106
        $region26: #{cxr_forward.6} parent=15 // pred_check_branch
          %432 = sbr.rel (%p430) target = $region28
        $region27: #{cxr_forward.6} parent=15 // pred_region
          %p433 = scmp.lt.s32.totalorder %s29, 1
          %s434 = scalar_select %p433, %s29, 1
          %s435 = scalar_lea.vmem %s2, %s434
        $region28: #{cxr_forward.6} parent=15 // pred_fallthru
          _
        // Predicated region
        $region29: #{cxr_forward.6} parent=15 // pred_check
          %p436 = pneg %p132
        $region30: #{cxr_forward.6} parent=15 // pred_check_branch
          %438 = sbr.rel (%p436) target = $region32
        $region31: #{cxr_forward.6} parent=15 // pred_region
          %s439 = sand.u32 %s122, 1
          %s440 = scalar_lea.sflag [#allocation4], %s439
          %s441 = sand.u32 %s122, 1
          %s442 = smul.addr %s441, 192
          %s443 = scalar_lea.vmem [#allocation3], %s442
          %445 = vsyncadd %s440, 0
          %s446 = smul.addr %s29, 48
          %s447 = smul.addr %s446, 4
          %s448 = scalar_lea.hbm %s3, %s447
          %s449 = sshll.u32 %s448, 4
          %s450 = int_to_ptr.hbm [resolvable:$true] %s449
          %s451 = sshll.u32 %s443, 4
          %s452 = int_to_ptr.vmem [resolvable:$true] %s451
          %457 = dma.hbm_to_vmem [thread:$0]  %s450, 3072, %s452, %s440, 192, 192, 12
        $region32: #{cxr_forward.6} parent=15 // pred_fallthru
          _
        // Predicated region
        $region33: #{cxr_forward.6} parent=15 // pred_check
          %p458 = pneg %p158
        $region34: #{cxr_forward.6} parent=15 // pred_check_branch
          %460 = sbr.rel (%p458) target = $region36
        $region35: #{cxr_forward.6} parent=15 // pred_region
          %p461 = scmp.lt.s32.totalorder %s29, 1
          %s462 = scalar_select %p461, %s29, 1
          %s463 = smul.addr %s462, 3
          %s464 = scalar_lea.vmem %s4, %s463
        $region36: #{cxr_forward.6} parent=15 // pred_fallthru
          _
        // Predicated region
        $region37: #{cxr_forward.6} parent=15 // pred_check
          %p465 = pneg %p184
        $region38: #{cxr_forward.6} parent=15 // pred_check_branch
          %467 = sbr.rel (%p465) target = $region40
        $region39: #{cxr_forward.6} parent=15 // pred_region
          %p468 = scmp.lt.s32.totalorder %s29, 1
          %s469 = scalar_select %p468, %s29, 1
          %s470 = smul.addr %s469, 16
          %s471 = smul.addr %s470, 4
          %s472 = scalar_lea.vmem %s5, %s471
        $region40: #{cxr_forward.6} parent=15 // pred_fallthru
          _
        // Predicated region
        $region41: #{cxr_forward.6} parent=15 // pred_check
          %p473 = pneg %p210
        $region42: #{cxr_forward.6} parent=15 // pred_check_branch
          %475 = sbr.rel (%p473) target = $region44
        $region43: #{cxr_forward.6} parent=15 // pred_region
          %p476 = scmp.lt.s32.totalorder %s29, 1
          %s477 = scalar_select %p476, %s29, 1
          %s478 = scalar_lea.vmem %s6, %s477
        $region44: #{cxr_forward.6} parent=15 // pred_fallthru
          _
        // Predicated region
        $region45: #{cxr_forward.6} parent=15 // pred_check
          %p479 = pneg %p236
        $region46: #{cxr_forward.6} parent=15 // pred_check_branch
          %481 = sbr.rel (%p479) target = $region48
        $region47: #{cxr_forward.6} parent=15 // pred_region
          %p482 = scmp.lt.s32.totalorder %s29, 1
          %s483 = scalar_select %p482, %s29, 1
          %s484 = scalar_lea.vmem %s7, %s483
        $region48: #{cxr_forward.6} parent=15 // pred_fallthru
          _
        // Predicated region
        $region49: #{cxr_forward.6} parent=15 // pred_check
          %p485 = pneg %p262
        $region50: #{cxr_forward.6} parent=15 // pred_check_branch
          %487 = sbr.rel (%p485) target = $region52
        $region51: #{cxr_forward.6} parent=15 // pred_region
          %p488 = scmp.lt.s32.totalorder %s29, 1
          %s489 = scalar_select %p488, %s29, 1
          %s490 = scalar_lea.vmem %s8, %s489
        $region52: #{cxr_forward.6} parent=15 // pred_fallthru
          _
        // Predicated region
        $region53: #{cxr_forward.6} parent=15 // pred_check
          %p491 = pneg %p288
        $region54: #{cxr_forward.6} parent=15 // pred_check_branch
          %493 = sbr.rel (%p491) target = $region56
        $region55: #{cxr_forward.6} parent=15 // pred_region
          %p494 = scmp.lt.s32.totalorder %s29, 1
          %s495 = scalar_select %p494, %s29, 1
          %s496 = smul.addr %s495, 64
          %s497 = smul.addr %s496, 4
          %s498 = scalar_lea.vmem %s9, %s497
        $region56: #{cxr_forward.6} parent=15 // pred_fallthru
          _
        // Predicated region
        $region57: #{cxr_forward.6} parent=15 // pred_check
          %p499 = pneg %p314
        $region58: #{cxr_forward.6} parent=15 // pred_check_branch
          %501 = sbr.rel (%p499) target = $region60
        $region59: #{cxr_forward.6} parent=15 // pred_region
          %p502 = scmp.lt.s32.totalorder %s29, 1
          %s503 = scalar_select %p502, %s29, 1
          %s504 = smul.addr %s503, 4
          %s505 = scalar_lea.vmem %s10, %s504
        $region60: #{cxr_forward.6} parent=15 // pred_fallthru
          _
        // Predicated region
        $region61: #{cxr_forward.6} parent=15 // pred_check
          %p506 = pneg %p340
        $region62: #{cxr_forward.6} parent=15 // pred_check_branch
          %508 = sbr.rel (%p506) target = $region64
        $region63: #{cxr_forward.6} parent=15 // pred_region
          %p509 = scmp.lt.s32.totalorder %s29, 1
          %s510 = scalar_select %p509, %s29, 1
          %s511 = smul.addr %s510, 64
          %s512 = smul.addr %s511, 4
          %s513 = scalar_lea.vmem %s11, %s512
        $region64: #{cxr_forward.6} parent=15 // pred_fallthru
          _
        // Predicated region
        $region65: #{cxr_forward.6} parent=15 // pred_check
          %p514 = pneg %p366
        $region66: #{cxr_forward.6} parent=15 // pred_check_branch
          %516 = sbr.rel (%p514) target = $region68
        $region67: #{cxr_forward.6} parent=15 // pred_region
          %p517 = scmp.lt.s32.totalorder %s29, 1
          %s518 = scalar_select %p517, %s29, 1
          %s519 = scalar_lea.vmem %s12, %s518
        $region68: #{cxr_forward.6} parent=15 // pred_fallthru
          _
      $region16: #{cxr_forward.6} parent=5 // pred_fallthru
        _
      %p520 = scmp.le.s32.totalorder 1, %s22
      %p521 = scmp.lt.s32.totalorder %s22, 5
      %p522 = pnand %p520, %p521
      %p523 = pneg %p522
      // Predicated region
      $region69: #{cxr_forward.6} parent=5 // pred_check
        _
      $region70: #{cxr_forward.6} parent=5 // pred_check_branch
        %525 = sbr.rel (%p522) target = $region72
      $region71: #{cxr_forward.6} parent=5 // pred_region
        %s526 = ssub.s32 %s22, 1
        %s527 = sand.u32 %s125, 1
        %s528 = scalar_lea.sflag [#allocation4], %s527
        %s529 = sand.u32 %s125, 1
        %s530 = smul.addr %s529, 192
        %s531 = scalar_lea.vmem [#allocation3], %s530
        // Predicated region
        $region73: #{cxr_forward.6} parent=71 // pred_check
          %p532 = pneg %p138
        $region74: #{cxr_forward.6} parent=71 // pred_check_branch
          %534 = sbr.rel (%p532) target = $region76
        $region75: #{cxr_forward.6} parent=71 // pred_region
          %536 = dma.done %s528, 3072
        $region76: #{cxr_forward.6} parent=71 // pred_fallthru
          _
        %p537 = scmp.lt.s32.totalorder %s32, 1
        %s538 = scalar_select %p537, %s32, 1
        %s539 = smul.addr %s538, 8
        %s540 = scalar_lea.vmem %s0, %s539
        %p541 = pneg %p60
        %p542 = pneg %p57
        %p543 = scmp.lt.s32.totalorder %s31, 1
        %s544 = scalar_select %p543, %s31, 1
        %s545 = scalar_lea.vmem %s1, %s544
        %p546 = pneg %p86
        %p547 = pneg %p83
        %p548 = scmp.lt.s32.totalorder %s31, 1
        %s549 = scalar_select %p548, %s31, 1
        %s550 = scalar_lea.vmem %s2, %s549
        %p551 = pneg %p112
        %p552 = pneg %p109
        %s553 = sand.u32 %s125, 1
        %s554 = scalar_lea.sflag [#allocation4], %s553
        %s555 = sand.u32 %s125, 1
        %s556 = smul.addr %s555, 192
        %s557 = scalar_lea.vmem [#allocation3], %s556
        %p558 = pneg %p138
        %p559 = pneg %p135
        %p560 = scmp.lt.s32.totalorder %s31, 1
        %s561 = scalar_select %p560, %s31, 1
        %s562 = smul.addr %s561, 3
        %s563 = scalar_lea.vmem %s4, %s562
        %p564 = pneg %p164
        %p565 = pneg %p161
        %p566 = scmp.lt.s32.totalorder %s31, 1
        %s567 = scalar_select %p566, %s31, 1
        %s568 = smul.addr %s567, 16
        %s569 = smul.addr %s568, 4
        %s570 = scalar_lea.vmem %s5, %s569
        %p571 = pneg %p190
        %p572 = pneg %p187
        %p573 = scmp.lt.s32.totalorder %s31, 1
        %s574 = scalar_select %p573, %s31, 1
        %s575 = scalar_lea.vmem %s6, %s574
        %p576 = pneg %p216
        %p577 = pneg %p213
        %p578 = scmp.lt.s32.totalorder %s31, 1
        %s579 = scalar_select %p578, %s31, 1
        %s580 = scalar_lea.vmem %s7, %s579
        %p581 = pneg %p242
        %p582 = pneg %p239
        %p583 = scmp.lt.s32.totalorder %s31, 1
        %s584 = scalar_select %p583, %s31, 1
        %s585 = scalar_lea.vmem %s8, %s584
        %p586 = pneg %p268
        %p587 = pneg %p265
        %p588 = scmp.lt.s32.totalorder %s31, 1
        %s589 = scalar_select %p588, %s31, 1
        %s590 = smul.addr %s589, 64
        %s591 = smul.addr %s590, 4
        %s592 = scalar_lea.vmem %s9, %s591
        %p593 = pneg %p294
        %p594 = pneg %p291
        %p595 = scmp.lt.s32.totalorder %s31, 1
        %s596 = scalar_select %p595, %s31, 1
        %s597 = smul.addr %s596, 4
        %s598 = scalar_lea.vmem %s10, %s597
        %p599 = pneg %p320
        %p600 = pneg %p317
        %p601 = scmp.lt.s32.totalorder %s31, 1
        %s602 = scalar_select %p601, %s31, 1
        %s603 = smul.addr %s602, 64
        %s604 = smul.addr %s603, 4
        %s605 = scalar_lea.vmem %s11, %s604
        %p606 = pneg %p346
        %p607 = pneg %p343
        %p608 = scmp.lt.s32.totalorder %s31, 1
        %s609 = scalar_select %p608, %s31, 1
        %s610 = scalar_lea.vmem %s12, %s609
        %p611 = pneg %p372
        %p612 = pneg %p369
        %p613 = pneg %p398
        %p614 = pneg %p395
        %p615 = scmp.lt.s32.totalorder %s32, 1
        %s616 = scalar_select %p615, %s32, 1
        %s617 = smul.addr %s616, 8
        %s618 = scalar_lea.vmem %s13, %s617
        %p619 = scmp.lt.s32.totalorder %s32, 1
        %s620 = scalar_select %p619, %s32, 1
        %s621 = smul.addr %s620, 8
        %s622 = scalar_lea.vmem %s0, %s621
        %p623 = scmp.lt.s32.totalorder %s31, 1
        %s624 = scalar_select %p623, %s31, 1
        %s625 = scalar_lea.vmem %s1, %s624
        %p626 = scmp.lt.s32.totalorder %s31, 1
        %s627 = scalar_select %p626, %s31, 1
        %s628 = scalar_lea.vmem %s2, %s627
        %p629 = scmp.lt.s32.totalorder %s31, 1
        %s630 = scalar_select %p629, %s31, 1
        %s631 = smul.addr %s630, 3
        %s632 = scalar_lea.vmem %s4, %s631
        %p633 = scmp.lt.s32.totalorder %s31, 1
        %s634 = scalar_select %p633, %s31, 1
        %s635 = smul.addr %s634, 16
        %s636 = smul.addr %s635, 4
        %s637 = scalar_lea.vmem %s5, %s636
        %p638 = scmp.lt.s32.totalorder %s31, 1
        %s639 = scalar_select %p638, %s31, 1
        %s640 = scalar_lea.vmem %s6, %s639
        %p641 = scmp.lt.s32.totalorder %s31, 1
        %s642 = scalar_select %p641, %s31, 1
        %s643 = scalar_lea.vmem %s7, %s642
        %p644 = scmp.lt.s32.totalorder %s31, 1
        %s645 = scalar_select %p644, %s31, 1
        %s646 = scalar_lea.vmem %s8, %s645
        %p647 = scmp.lt.s32.totalorder %s31, 1
        %s648 = scalar_select %p647, %s31, 1
        %s649 = smul.addr %s648, 64
        %s650 = smul.addr %s649, 4
        %s651 = scalar_lea.vmem %s9, %s650
        %p652 = scmp.lt.s32.totalorder %s31, 1
        %s653 = scalar_select %p652, %s31, 1
        %s654 = smul.addr %s653, 4
        %s655 = scalar_lea.vmem %s10, %s654
        %p656 = scmp.lt.s32.totalorder %s31, 1
        %s657 = scalar_select %p656, %s31, 1
        %s658 = smul.addr %s657, 64
        %s659 = smul.addr %s658, 4
        %s660 = scalar_lea.vmem %s11, %s659
        %p661 = scmp.lt.s32.totalorder %s31, 1
        %s662 = scalar_select %p661, %s31, 1
        %s663 = scalar_lea.vmem %s12, %s662
        %p664 = scmp.lt.s32.totalorder %s32, 1
        %s665 = scalar_select %p664, %s32, 1
        %s666 = smul.addr %s665, 8
        %s667 = scalar_lea.vmem %s13, %s666
        %p669 = scmp.eq.s32.totalorder %s31, 0
        // Predicated region
        $region77: #{cxr_forward.6} parent=71 // pred_check
          %p670 = pneg %p669
        $region78: #{cxr_forward.6} parent=71 // pred_check_branch
          %672 = sbr.rel (%p670) target = $region80
        $region79: #{cxr_forward.6} parent=71 // pred_region
          %v673 = vld [vmem:[%s622] sm:$0xff]
          %s674 = smul.u32 %s32, 8
          %s675 = scalar_lea.vmem [#allocation2], %s674
          %676 = vst [vmem:[%s675] sm:$0xff] %v673
        $region80: #{cxr_forward.6} parent=71 // pred_fallthru
          _
        %s677 = smul.u32 %s32, 8
        %s678 = scalar_lea.vmem [#allocation2], %s677
        %v679 = vld [vmem:[%s678] sm:$0xff]
        %v680 = vld [vmem:[%s625] sm:$0x1]
        %v681 = vld [vmem:[%s628] sm:$0x1]
        %682 = vadd.xlane.f32.xlu0 %v679
        %v683 = vpop.xlane.xlu0 %682
        %v684 = vrcp.pop 128.0
        %v685 = vmul.f32 128.0, %v684
        %v686 = vsub.f32 1.0, %v685
        %v687 = vmul.f32 %v684, %v686
        %v688 = vadd.f32 %v684, %v687
        %vm689 = vweird.f32 %v684
        %v690 = vsel %vm689, %v684, %v688
        %v691 = vmul.f32 %v683, %v690
        %v692 = vsub.f32 %v679, %v691
        %v693 = vmul.f32 %v692, %v692
        %694 = vadd.xlane.f32.xlu0 %v693
        %v695 = vpop.xlane.xlu0 %694
        %v696 = vmul.f32 %v695, %v690
        %v697 = vadd.f32 %v696, 1e-05
        %v698 = vrsqrt.pop %v697
        %v699 = vmul.f32 %v698, %v697
        %v700 = vmul.f32 %v699, %v698
        %v701 = vmul.f32 0.5, %v700
        %v702 = vsub.f32 1.5, %v701
        %v703 = vmul.f32 %v698, %v702
        %vm704 = vweird.f32 %v697
        %vm705 = vweird.f32 %v698
        %vm706 = vmor %vm704, %vm705
        %v707 = vsel %vm706, %v698, %v703
        %v708 = vmul.f32 %v692, %v707
        %v710 = vperm.slane %v680, 0
        %v712 = vmul.f32 %v708, %v710
        %v714 = vperm.slane %v681, 0
        %v716 = vadd.f32 %v712, %v714
        %v717 = vpack.c.bf16 %v716, %v716
        %v718 = vld [vmem:[%s531] sm:$0xff]
        %v719 = vld [vmem:[%s531 + $0x8] sm:$0xf]
        %v720 = vld [vmem:[%s531 + $0xc] sm:$0xff]
        %v721 = vld [vmem:[%s531 + $0x14] sm:$0xf]
        %v722 = vld [vmem:[%s531 + $0x18] sm:$0xff]
        %v723 = vld [vmem:[%s531 + $0x20] sm:$0xf]
        %v724 = vld [vmem:[%s531 + $0x24] sm:$0xff]
        %v725 = vld [vmem:[%s531 + $0x2c] sm:$0xf]
        %v726 = vld [vmem:[%s531 + $0x30] sm:$0xff]
        %v727 = vld [vmem:[%s531 + $0x38] sm:$0xf]
        %v728 = vld [vmem:[%s531 + $0x3c] sm:$0xff]
        %v729 = vld [vmem:[%s531 + $0x44] sm:$0xf]
        %v730 = vld [vmem:[%s531 + $0x48] sm:$0xff]
        %v731 = vld [vmem:[%s531 + $0x50] sm:$0xf]
        %v732 = vld [vmem:[%s531 + $0x54] sm:$0xff]
        %v733 = vld [vmem:[%s531 + $0x5c] sm:$0xf]
        %v734 = vld [vmem:[%s531 + $0x60] sm:$0xff]
        %v735 = vld [vmem:[%s531 + $0x68] sm:$0xf]
        %v736 = vld [vmem:[%s531 + $0x6c] sm:$0xff]
        %v737 = vld [vmem:[%s531 + $0x74] sm:$0xf]
        %v738 = vld [vmem:[%s531 + $0x78] sm:$0xff]
        %v739 = vld [vmem:[%s531 + $0x80] sm:$0xf]
        %v740 = vld [vmem:[%s531 + $0x84] sm:$0xff]
        %v741 = vld [vmem:[%s531 + $0x8c] sm:$0xf]
        %v742 = vld [vmem:[%s531 + $0x90] sm:$0xff]
        %v743 = vld [vmem:[%s531 + $0x98] sm:$0xf]
        %v744 = vld [vmem:[%s531 + $0x9c] sm:$0xff]
        %v745 = vld [vmem:[%s531 + $0xa4] sm:$0xf]
        %v746 = vld [vmem:[%s531 + $0xa8] sm:$0xff]
        %v747 = vld [vmem:[%s531 + $0xb0] sm:$0xf]
        %v748 = vld [vmem:[%s531 + $0xb4] sm:$0xff]
        %v749 = vld [vmem:[%s531 + $0xbc] sm:$0xf]
        %v750 = vld [vmem:[%s632] sm:$0x7]
        %v752 = vperm.slane %v750, 0
        %v753 = vperm.slane %v750, 1
        %v754 = vperm.slane %v750, 2
        %v790 = vunpack.c.l.b16 %v718
        %v791 = vunpack.c.h.b16 %v718
        %v792 = vunpack.c.l.b16 %v719
        %v793 = vunpack.c.l.b16 %v720
        %v794 = vunpack.c.h.b16 %v720
        %v795 = vunpack.c.l.b16 %v721
        %v796 = vunpack.c.l.b16 %v722
        %v797 = vunpack.c.h.b16 %v722
        %v798 = vunpack.c.l.b16 %v723
        %v799 = vunpack.c.l.b16 %v724
        %v800 = vunpack.c.h.b16 %v724
        %v801 = vunpack.c.l.b16 %v725
        %v802 = vunpack.c.l.b16 %v726
        %v803 = vunpack.c.h.b16 %v726
        %v804 = vunpack.c.l.b16 %v727
        %v805 = vunpack.c.l.b16 %v728
        %v806 = vunpack.c.h.b16 %v728
        %v807 = vunpack.c.l.b16 %v729
        %v808 = vunpack.c.l.b16 %v730
        %v809 = vunpack.c.h.b16 %v730
        %v810 = vunpack.c.l.b16 %v731
        %v811 = vunpack.c.l.b16 %v732
        %v812 = vunpack.c.h.b16 %v732
        %v813 = vunpack.c.l.b16 %v733
        %v814 = vunpack.c.l.b16 %v734
        %v815 = vunpack.c.h.b16 %v734
        %v816 = vunpack.c.l.b16 %v735
        %v817 = vunpack.c.l.b16 %v736
        %v818 = vunpack.c.h.b16 %v736
        %v819 = vunpack.c.l.b16 %v737
        %v820 = vunpack.c.l.b16 %v738
        %v821 = vunpack.c.h.b16 %v738
        %v822 = vunpack.c.l.b16 %v739
        %v823 = vunpack.c.l.b16 %v740
        %v824 = vunpack.c.h.b16 %v740
        %v825 = vunpack.c.l.b16 %v741
        %v826 = vunpack.c.l.b16 %v742
        %v827 = vunpack.c.h.b16 %v742
        %v828 = vunpack.c.l.b16 %v743
        %v829 = vunpack.c.l.b16 %v744
        %v830 = vunpack.c.h.b16 %v744
        %v831 = vunpack.c.l.b16 %v745
        %v832 = vunpack.c.l.b16 %v746
        %v833 = vunpack.c.h.b16 %v746
        %v834 = vunpack.c.l.b16 %v747
        %v835 = vunpack.c.l.b16 %v748
        %v836 = vunpack.c.h.b16 %v748
        %v837 = vunpack.c.l.b16 %v749
        %v838 = vpack.c.b16 %v793, %v790
        %v839 = vpack.c.b16 %v794, %v791
        %v840 = vpack.c.b16 %v795, %v792
        %v841 = vpack.c.b16 %v799, %v796
        %v842 = vpack.c.b16 %v800, %v797
        %v843 = vpack.c.b16 %v801, %v798
        %v844 = vpack.c.b16 %v805, %v802
        %v845 = vpack.c.b16 %v806, %v803
        %v846 = vpack.c.b16 %v807, %v804
        %v847 = vpack.c.b16 %v811, %v808
        %v848 = vpack.c.b16 %v812, %v809
        %v849 = vpack.c.b16 %v813, %v810
        %v850 = vpack.c.b16 %v817, %v814
        %v851 = vpack.c.b16 %v818, %v815
        %v852 = vpack.c.b16 %v819, %v816
        %v853 = vpack.c.b16 %v823, %v820
        %v854 = vpack.c.b16 %v824, %v821
        %v855 = vpack.c.b16 %v825, %v822
        %v856 = vpack.c.b16 %v829, %v826
        %v857 = vpack.c.b16 %v830, %v827
        %v858 = vpack.c.b16 %v831, %v828
        %v859 = vpack.c.b16 %v835, %v832
        %v860 = vpack.c.b16 %v836, %v833
        %v861 = vpack.c.b16 %v837, %v834
        %886 = vmatpush.bf16.msra.mxu0 %v859
        %887 = vmatpush.bf16.msra.mxu0 %v856
        %888 = vmatpush.bf16.msra.mxu0 %v853
        %889 = vmatpush.bf16.msra.mxu0 %v850
        %890 = vmatpush.bf16.msra.mxu0 %v847
        %891 = vmatpush.bf16.msra.mxu0 %v844
        %892 = vmatpush.bf16.msra.mxu0 %v841
        %893 = vmatpush.bf16.msra.mxu0 %v838
        %894 = vmatmul.bf16.gmra.mxu0 %v717
        %v895 = vpop.f32.mrf.mxu0
        %v896 = vadd.f32 %v752, %v895
        %v897 = vpop.f32.mrf.mxu0
        %898 = vdwg.mxu0
        %899 = vmatpush.bf16.msra.mxu0 %v860
        %900 = vmatpush.bf16.msra.mxu0 %v857
        %901 = vmatpush.bf16.msra.mxu0 %v854
        %902 = vmatpush.bf16.msra.mxu0 %v851
        %903 = vmatpush.bf16.msra.mxu0 %v848
        %904 = vmatpush.bf16.msra.mxu0 %v845
        %905 = vmatpush.bf16.msra.mxu0 %v842
        %906 = vmatpush.bf16.msra.mxu0 %v839
        %907 = vmatmul.bf16.gmra.mxu0 %v717
        %v908 = vpop.f32.mrf.mxu0
        %v909 = vadd.f32 %v753, %v908
        %v910 = vpop.f32.mrf.mxu0
        %911 = vdwg.mxu0
        %912 = vmatpush.bf16.msra.mxu0 %v861
        %913 = vmatpush.bf16.msra.mxu0 %v858
        %914 = vmatpush.bf16.msra.mxu0 %v855
        %915 = vmatpush.bf16.msra.mxu0 %v852
        %916 = vmatpush.bf16.msra.mxu0 %v849
        %917 = vmatpush.bf16.msra.mxu0 %v846
        %918 = vmatpush.bf16.msra.mxu0 %v843
        %919 = vmatpush.bf16.msra.mxu0 %v840
        %920 = vmatmul.bf16.gmra.mxu0 %v717
        %v921 = vpop.f32.mrf.mxu0
        %v922 = vadd.f32 %v754, %v921
        %v923 = vpop.f32.mrf.mxu0
        %924 = vdwg.mxu0
        %v925 = vlaneseq
        %v926 = vshrl.u32 %v925, 7
        %v927 = vlaneseq
        %v928 = vand.u32 %v927, 127
        %vm929 = vcmp.le.s32.totalorder %v928, %v926
        %v930 = vsel %vm929, 0.0, -1e+30
        %v931 = vpack.c.bf16 %v896, %v896
        %v932 = vpack.c.bf16 %v909, %v909
        %v933 = vpack.c.bf16 %v922, %v922
        %vm934 = vcmask 261120
        %v936 = vsel %vm934, %v931, 0
        %v939 = vsel %vm934, %v932, 0
        %941 = vmatpush.bf16.xpose.msra.mxu0 0
        %942 = vmatpush.bf16.xpose.msra.mxu0 0
        %943 = vmatpush.bf16.xpose.msra.mxu0 0
        %944 = vmatpush.bf16.xpose.msra.mxu0 0
        %945 = vmatpush.bf16.xpose.msra.mxu0 0
        %946 = vmatpush.bf16.xpose.msra.mxu0 0
        %947 = vmatpush.bf16.xpose.msra.mxu0 0
        %948 = vmatpush.bf16.xpose.msra.mxu0 %v939
        %949 = vmatmul.bf16.gmra.mxu0 %v936
        %v950 = vpop.f32.mrf.mxu0
        %v951 = vadd.f32 0.0, %v950
        %v952 = vpop.f32.mrf.mxu0
        %953 = vdwg.mxu0
        %v954 = vmul.f32 %v951, 0.17677669
        %v955 = vadd.f32 %v954, %v930
        %vm956 = vcmask 64512
        %v957 = vsel %vm956, %v955, -inf
        %958 = vmax.xlane.f32.xlu0 %v957
        %v959 = vpop.xlane.xlu0 %958
        %v960 = vsub.f32 %v955, %v959
        %v961 = vmul.f32 %v960, 1.442695
        %v962 = vpow.pop %v961
        %v963 = vsel %vm956, %v962, 0.0
        %964 = vadd.xlane.f32.xlu0 %v963
        %v965 = vpop.xlane.xlu0 %964
        %v966 = vrcp.pop %v965
        %v967 = vmul.f32 %v965, %v966
        %v968 = vsub.f32 1.0, %v967
        %v969 = vmul.f32 %v966, %v968
        %v970 = vadd.f32 %v966, %v969
        %vm971 = vweird.f32 %v965
        %vm972 = vweird.f32 %v966
        %vm973 = vmor %vm971, %vm972
        %v974 = vsel %vm973, %v966, %v970
        %v975 = vand.u32 2147483647, %v965
        %vm976 = vcmp.eq.f32.partialorder %v975, 8.507059e+37
        %v977 = vand.u32 %v965, 2147483648
        %v978 = vor.u32 1.1754944e-38, %v977
        %v979 = vsel %vm976, %v978, %v974
        %v980 = vmul.f32 %v962, %v979
        %v981 = vpack.c.bf16 %v980, %v980
        %v983 = vsel %vm956, %v981, 0
        %vm985 = vcmask 1043456
        %v987 = vsel %vm985, %v933, 0
        %989 = vmatpush.bf16.msra.mxu0 0
        %990 = vmatpush.bf16.msra.mxu0 0
        %991 = vmatpush.bf16.msra.mxu0 0
        %992 = vmatpush.bf16.msra.mxu0 0
        %993 = vmatpush.bf16.msra.mxu0 0
        %994 = vmatpush.bf16.msra.mxu0 0
        %995 = vmatpush.bf16.msra.mxu0 0
        %996 = vmatpush.bf16.msra.mxu0 %v987
        %997 = vmatmul.bf16.gmra.mxu0 %v983
        %v998 = vpop.f32.mrf.mxu0
        %v999 = vadd.f32 0.0, %v998
        %v1000 = vpop.f32.mrf.mxu0
        %1001 = vdwg.mxu0
        %1003 = vrot.lane.b32.xlu0 %v931, 96
        %v1004 = vpop.permute.xlu0 %1003
        %1006 = vrot.lane.b32.xlu0 %v932, 96
        %v1007 = vpop.permute.xlu0 %1006
        %v1009 = vsel %vm934, %v1004, 0
        %v1012 = vsel %vm934, %v1007, 0
        %1014 = vmatpush.bf16.xpose.msra.mxu0 0
        %1015 = vmatpush.bf16.xpose.msra.mxu0 0
        %1016 = vmatpush.bf16.xpose.msra.mxu0 0
        %1017 = vmatpush.bf16.xpose.msra.mxu0 0
        %1018 = vmatpush.bf16.xpose.msra.mxu0 0
        %1019 = vmatpush.bf16.xpose.msra.mxu0 0
        %1020 = vmatpush.bf16.xpose.msra.mxu0 0
        %1021 = vmatpush.bf16.xpose.msra.mxu0 %v1012
        %1022 = vmatmul.bf16.gmra.mxu0 %v1009
        %v1023 = vpop.f32.mrf.mxu0
        %v1024 = vadd.f32 0.0, %v1023
        %v1025 = vpop.f32.mrf.mxu0
        %1026 = vdwg.mxu0
        %v1027 = vmul.f32 %v1024, 0.17677669
        %v1028 = vadd.f32 %v1027, %v930
        %v1029 = vsel %vm956, %v1028, -inf
        %1030 = vmax.xlane.f32.xlu0 %v1029
        %v1031 = vpop.xlane.xlu0 %1030
        %v1032 = vsub.f32 %v1028, %v1031
        %v1033 = vmul.f32 %v1032, 1.442695
        %v1034 = vpow.pop %v1033
        %v1035 = vsel %vm956, %v1034, 0.0
        %1036 = vadd.xlane.f32.xlu0 %v1035
        %v1037 = vpop.xlane.xlu0 %1036
        %v1038 = vrcp.pop %v1037
        %v1039 = vmul.f32 %v1037, %v1038
        %v1040 = vsub.f32 1.0, %v1039
        %v1041 = vmul.f32 %v1038, %v1040
        %v1042 = vadd.f32 %v1038, %v1041
        %vm1043 = vweird.f32 %v1037
        %vm1044 = vweird.f32 %v1038
        %vm1045 = vmor %vm1043, %vm1044
        %v1046 = vsel %vm1045, %v1038, %v1042
        %v1047 = vand.u32 2147483647, %v1037
        %vm1048 = vcmp.eq.f32.partialorder %v1047, 8.507059e+37
        %v1049 = vand.u32 %v1037, 2147483648
        %v1050 = vor.u32 1.1754944e-38, %v1049
        %v1051 = vsel %vm1048, %v1050, %v1046
        %v1052 = vmul.f32 %v1034, %v1051
        %v1053 = vpack.c.bf16 %v1052, %v1052
        %1055 = vrot.lane.b32.xlu0 %v933, 96
        %v1056 = vpop.permute.xlu0 %1055
        %v1058 = vsel %vm956, %v1053, 0
        %v1061 = vsel %vm985, %v1056, 0
        %1063 = vmatpush.bf16.msra.mxu0 0
        %1064 = vmatpush.bf16.msra.mxu0 0
        %1065 = vmatpush.bf16.msra.mxu0 0
        %1066 = vmatpush.bf16.msra.mxu0 0
        %1067 = vmatpush.bf16.msra.mxu0 0
        %1068 = vmatpush.bf16.msra.mxu0 0
        %1069 = vmatpush.bf16.msra.mxu0 0
        %1070 = vmatpush.bf16.msra.mxu0 %v1061
        %1071 = vmatmul.bf16.gmra.mxu0 %v1058
        %v1072 = vpop.f32.mrf.mxu0
        %v1073 = vadd.f32 0.0, %v1072
        %v1074 = vpop.f32.mrf.mxu0
        %1075 = vdwg.mxu0
        %1076 = vrot.lane.b32.xlu0 %v931, 64
        %v1077 = vpop.permute.xlu0 %1076
        %1078 = vrot.lane.b32.xlu0 %v932, 64
        %v1079 = vpop.permute.xlu0 %1078
        %v1081 = vsel %vm934, %v1077, 0
        %v1084 = vsel %vm934, %v1079, 0
        %1086 = vmatpush.bf16.xpose.msra.mxu0 0
        %1087 = vmatpush.bf16.xpose.msra.mxu0 0
        %1088 = vmatpush.bf16.xpose.msra.mxu0 0
        %1089 = vmatpush.bf16.xpose.msra.mxu0 0
        %1090 = vmatpush.bf16.xpose.msra.mxu0 0
        %1091 = vmatpush.bf16.xpose.msra.mxu0 0
        %1092 = vmatpush.bf16.xpose.msra.mxu0 0
        %1093 = vmatpush.bf16.xpose.msra.mxu0 %v1084
        %1094 = vmatmul.bf16.gmra.mxu0 %v1081
        %v1095 = vpop.f32.mrf.mxu0
        %v1096 = vadd.f32 0.0, %v1095
        %v1097 = vpop.f32.mrf.mxu0
        %1098 = vdwg.mxu0
        %v1099 = vmul.f32 %v1096, 0.17677669
        %v1100 = vadd.f32 %v1099, %v930
        %v1101 = vsel %vm956, %v1100, -inf
        %1102 = vmax.xlane.f32.xlu0 %v1101
        %v1103 = vpop.xlane.xlu0 %1102
        %v1104 = vsub.f32 %v1100, %v1103
        %v1105 = vmul.f32 %v1104, 1.442695
        %v1106 = vpow.pop %v1105
        %v1107 = vsel %vm956, %v1106, 0.0
        %1108 = vadd.xlane.f32.xlu0 %v1107
        %v1109 = vpop.xlane.xlu0 %1108
        %v1110 = vrcp.pop %v1109
        %v1111 = vmul.f32 %v1109, %v1110
        %v1112 = vsub.f32 1.0, %v1111
        %v1113 = vmul.f32 %v1110, %v1112
        %v1114 = vadd.f32 %v1110, %v1113
        %vm1115 = vweird.f32 %v1109
        %vm1116 = vweird.f32 %v1110
        %vm1117 = vmor %vm1115, %vm1116
        %v1118 = vsel %vm1117, %v1110, %v1114
        %v1119 = vand.u32 2147483647, %v1109
        %vm1120 = vcmp.eq.f32.partialorder %v1119, 8.507059e+37
        %v1121 = vand.u32 %v1109, 2147483648
        %v1122 = vor.u32 1.1754944e-38, %v1121
        %v1123 = vsel %vm1120, %v1122, %v1118
        %v1124 = vmul.f32 %v1106, %v1123
        %v1125 = vpack.c.bf16 %v1124, %v1124
        %1126 = vrot.lane.b32.xlu0 %v933, 64
        %v1127 = vpop.permute.xlu0 %1126
        %v1129 = vsel %vm956, %v1125, 0
        %v1132 = vsel %vm985, %v1127, 0
        %1134 = vmatpush.bf16.msra.mxu0 0
        %1135 = vmatpush.bf16.msra.mxu0 0
        %1136 = vmatpush.bf16.msra.mxu0 0
        %1137 = vmatpush.bf16.msra.mxu0 0
        %1138 = vmatpush.bf16.msra.mxu0 0
        %1139 = vmatpush.bf16.msra.mxu0 0
        %1140 = vmatpush.bf16.msra.mxu0 0
        %1141 = vmatpush.bf16.msra.mxu0 %v1132
        %1142 = vmatmul.bf16.gmra.mxu0 %v1129
        %v1143 = vpop.f32.mrf.mxu0
        %v1144 = vadd.f32 0.0, %v1143
        %v1145 = vpop.f32.mrf.mxu0
        %1146 = vdwg.mxu0
        %1147 = vrot.lane.b32.xlu0 %v931, 32
        %v1148 = vpop.permute.xlu0 %1147
        %1149 = vrot.lane.b32.xlu0 %v932, 32
        %v1150 = vpop.permute.xlu0 %1149
        %v1152 = vsel %vm934, %v1148, 0
        %v1155 = vsel %vm934, %v1150, 0
        %1157 = vmatpush.bf16.xpose.msra.mxu0 0
        %1158 = vmatpush.bf16.xpose.msra.mxu0 0
        %1159 = vmatpush.bf16.xpose.msra.mxu0 0
        %1160 = vmatpush.bf16.xpose.msra.mxu0 0
        %1161 = vmatpush.bf16.xpose.msra.mxu0 0
        %1162 = vmatpush.bf16.xpose.msra.mxu0 0
        %1163 = vmatpush.bf16.xpose.msra.mxu0 0
        %1164 = vmatpush.bf16.xpose.msra.mxu0 %v1155
        %1165 = vmatmul.bf16.gmra.mxu0 %v1152
        %v1166 = vpop.f32.mrf.mxu0
        %v1167 = vadd.f32 0.0, %v1166
        %v1168 = vpop.f32.mrf.mxu0
        %1169 = vdwg.mxu0
        %v1170 = vmul.f32 %v1167, 0.17677669
        %v1171 = vadd.f32 %v1170, %v930
        %v1172 = vsel %vm956, %v1171, -inf
        %1173 = vmax.xlane.f32.xlu0 %v1172
        %v1174 = vpop.xlane.xlu0 %1173
        %v1175 = vsub.f32 %v1171, %v1174
        %v1176 = vmul.f32 %v1175, 1.442695
        %v1177 = vpow.pop %v1176
        %v1178 = vsel %vm956, %v1177, 0.0
        %1179 = vadd.xlane.f32.xlu0 %v1178
        %v1180 = vpop.xlane.xlu0 %1179
        %v1181 = vrcp.pop %v1180
        %v1182 = vmul.f32 %v1180, %v1181
        %v1183 = vsub.f32 1.0, %v1182
        %v1184 = vmul.f32 %v1181, %v1183
        %v1185 = vadd.f32 %v1181, %v1184
        %vm1186 = vweird.f32 %v1180
        %vm1187 = vweird.f32 %v1181
        %vm1188 = vmor %vm1186, %vm1187
        %v1189 = vsel %vm1188, %v1181, %v1185
        %v1190 = vand.u32 2147483647, %v1180
        %vm1191 = vcmp.eq.f32.partialorder %v1190, 8.507059e+37
        %v1192 = vand.u32 %v1180, 2147483648
        %v1193 = vor.u32 1.1754944e-38, %v1192
        %v1194 = vsel %vm1191, %v1193, %v1189
        %v1195 = vmul.f32 %v1177, %v1194
        %v1196 = vpack.c.bf16 %v1195, %v1195
        %1197 = vrot.lane.b32.xlu0 %v933, 32
        %v1198 = vpop.permute.xlu0 %1197
        %v1200 = vsel %vm956, %v1196, 0
        %v1203 = vsel %vm985, %v1198, 0
        %1205 = vmatpush.bf16.msra.mxu0 0
        %1206 = vmatpush.bf16.msra.mxu0 0
        %1207 = vmatpush.bf16.msra.mxu0 0
        %1208 = vmatpush.bf16.msra.mxu0 0
        %1209 = vmatpush.bf16.msra.mxu0 0
        %1210 = vmatpush.bf16.msra.mxu0 0
        %1211 = vmatpush.bf16.msra.mxu0 0
        %1212 = vmatpush.bf16.msra.mxu0 %v1203
        %1213 = vmatmul.bf16.gmra.mxu0 %v1200
        %v1214 = vpop.f32.mrf.mxu0
        %v1215 = vadd.f32 0.0, %v1214
        %v1216 = vpop.f32.mrf.mxu0
        %1217 = vdwg.mxu0
        %1219 = vrot.lane.b32.xlu0 %v1073, 32
        %v1220 = vpop.permute.xlu0 %1219
        %1223 = vrot.lane.b32.xlu0 %v1144, 64
        %v1224 = vpop.permute.xlu0 %1223
        %1227 = vrot.lane.b32.xlu0 %v1215, 96
        %v1228 = vpop.permute.xlu0 %1227
        %v1230 = vsel %vm934, %v999, %v1220
        %vm1231 = vcmask 523264
        %v1232 = vsel %vm1231, %v1230, %v1224
        %vm1233 = vcmask 785408
        %v1234 = vsel %vm1233, %v1232, %v1228
        %v1235 = vpack.c.bf16 %v1234, %v1234
        %v1236 = vld [vmem:[%s637] sm:$0xf]
        %v1237 = vld [vmem:[%s637 + $0x4] sm:$0xf]
        %v1238 = vld [vmem:[%s637 + $0x8] sm:$0xf]
        %v1239 = vld [vmem:[%s637 + $0xc] sm:$0xf]
        %v1240 = vld [vmem:[%s637 + $0x10] sm:$0xf]
        %v1241 = vld [vmem:[%s637 + $0x14] sm:$0xf]
        %v1242 = vld [vmem:[%s637 + $0x18] sm:$0xf]
        %v1243 = vld [vmem:[%s637 + $0x1c] sm:$0xf]
        %v1244 = vld [vmem:[%s637 + $0x20] sm:$0xf]
        %v1245 = vld [vmem:[%s637 + $0x24] sm:$0xf]
        %v1246 = vld [vmem:[%s637 + $0x28] sm:$0xf]
        %v1247 = vld [vmem:[%s637 + $0x2c] sm:$0xf]
        %v1248 = vld [vmem:[%s637 + $0x30] sm:$0xf]
        %v1249 = vld [vmem:[%s637 + $0x34] sm:$0xf]
        %v1250 = vld [vmem:[%s637 + $0x38] sm:$0xf]
        %v1251 = vld [vmem:[%s637 + $0x3c] sm:$0xf]
        %v1252 = vld [vmem:[%s640] sm:$0x1]
        %v1254 = vperm.slane %v1252, 0
        %v1272 = vunpack.c.l.b16 %v1236
        %v1273 = vunpack.c.l.b16 %v1237
        %v1274 = vunpack.c.l.b16 %v1238
        %v1275 = vunpack.c.l.b16 %v1239
        %v1276 = vunpack.c.l.b16 %v1240
        %v1277 = vunpack.c.l.b16 %v1241
        %v1278 = vunpack.c.l.b16 %v1242
        %v1279 = vunpack.c.l.b16 %v1243
        %v1280 = vunpack.c.l.b16 %v1244
        %v1281 = vunpack.c.l.b16 %v1245
        %v1282 = vunpack.c.l.b16 %v1246
        %v1283 = vunpack.c.l.b16 %v1247
        %v1284 = vunpack.c.l.b16 %v1248
        %v1285 = vunpack.c.l.b16 %v1249
        %v1286 = vunpack.c.l.b16 %v1250
        %v1287 = vunpack.c.l.b16 %v1251
        %v1288 = vpack.c.b16 %v1273, %v1272
        %v1289 = vpack.c.b16 %v1275, %v1274
        %v1290 = vpack.c.b16 %v1277, %v1276
        %v1291 = vpack.c.b16 %v1279, %v1278
        %v1292 = vpack.c.b16 %v1281, %v1280
        %v1293 = vpack.c.b16 %v1283, %v1282
        %v1294 = vpack.c.b16 %v1285, %v1284
        %v1295 = vpack.c.b16 %v1287, %v1286
        %1304 = vmatpush.bf16.msra.mxu0 %v1295
        %1305 = vmatpush.bf16.msra.mxu0 %v1294
        %1306 = vmatpush.bf16.msra.mxu0 %v1293
        %1307 = vmatpush.bf16.msra.mxu0 %v1292
        %1308 = vmatpush.bf16.msra.mxu0 %v1291
        %1309 = vmatpush.bf16.msra.mxu0 %v1290
        %1310 = vmatpush.bf16.msra.mxu0 %v1289
        %1311 = vmatpush.bf16.msra.mxu0 %v1288
        %1312 = vmatmul.bf16.gmra.mxu0 %v1235
        %v1313 = vpop.f32.mrf.mxu0
        %v1314 = vadd.f32 %v1254, %v1313
        %v1315 = vpop.f32.mrf.mxu0
        %1316 = vdwg.mxu0
        %v1317 = vadd.f32 %v679, %v1314
        %v1318 = vld [vmem:[%s643] sm:$0x1]
        %v1319 = vld [vmem:[%s646] sm:$0x1]
        %1320 = vadd.xlane.f32.xlu0 %v1317
        %v1321 = vpop.xlane.xlu0 %1320
        %v1322 = vmul.f32 %v1321, %v690
        %v1323 = vsub.f32 %v1317, %v1322
        %v1324 = vmul.f32 %v1323, %v1323
        %1325 = vadd.xlane.f32.xlu0 %v1324
        %v1326 = vpop.xlane.xlu0 %1325
        %v1327 = vmul.f32 %v1326, %v690
        %v1328 = vadd.f32 %v1327, 1e-05
        %v1329 = vrsqrt.pop %v1328
        %v1330 = vmul.f32 %v1329, %v1328
        %v1331 = vmul.f32 %v1330, %v1329
        %v1332 = vmul.f32 0.5, %v1331
        %v1333 = vsub.f32 1.5, %v1332
        %v1334 = vmul.f32 %v1329, %v1333
        %vm1335 = vweird.f32 %v1328
        %vm1336 = vweird.f32 %v1329
        %vm1337 = vmor %vm1335, %vm1336
        %v1338 = vsel %vm1337, %v1329, %v1334
        %v1339 = vmul.f32 %v1323, %v1338
        %v1341 = vperm.slane %v1318, 0
        %v1343 = vmul.f32 %v1339, %v1341
        %v1345 = vperm.slane %v1319, 0
        %v1347 = vadd.f32 %v1343, %v1345
        %v1348 = vpack.c.bf16 %v1347, %v1347
        %v1349 = vld [vmem:[%s651] sm:$0xff]
        %v1350 = vld [vmem:[%s651 + $0x8] sm:$0xff]
        %v1351 = vld [vmem:[%s651 + $0x10] sm:$0xff]
        %v1352 = vld [vmem:[%s651 + $0x18] sm:$0xff]
        %v1353 = vld [vmem:[%s651 + $0x20] sm:$0xff]
        %v1354 = vld [vmem:[%s651 + $0x28] sm:$0xff]
        %v1355 = vld [vmem:[%s651 + $0x30] sm:$0xff]
        %v1356 = vld [vmem:[%s651 + $0x38] sm:$0xff]
        %v1357 = vld [vmem:[%s651 + $0x40] sm:$0xff]
        %v1358 = vld [vmem:[%s651 + $0x48] sm:$0xff]
        %v1359 = vld [vmem:[%s651 + $0x50] sm:$0xff]
        %v1360 = vld [vmem:[%s651 + $0x58] sm:$0xff]
        %v1361 = vld [vmem:[%s651 + $0x60] sm:$0xff]
        %v1362 = vld [vmem:[%s651 + $0x68] sm:$0xff]
        %v1363 = vld [vmem:[%s651 + $0x70] sm:$0xff]
        %v1364 = vld [vmem:[%s651 + $0x78] sm:$0xff]
        %v1365 = vld [vmem:[%s651 + $0x80] sm:$0xff]
        %v1366 = vld [vmem:[%s651 + $0x88] sm:$0xff]
        %v1367 = vld [vmem:[%s651 + $0x90] sm:$0xff]
        %v1368 = vld [vmem:[%s651 + $0x98] sm:$0xff]
        %v1369 = vld [vmem:[%s651 + $0xa0] sm:$0xff]
        %v1370 = vld [vmem:[%s651 + $0xa8] sm:$0xff]
        %v1371 = vld [vmem:[%s651 + $0xb0] sm:$0xff]
        %v1372 = vld [vmem:[%s651 + $0xb8] sm:$0xff]
        %v1373 = vld [vmem:[%s651 + $0xc0] sm:$0xff]
        %v1374 = vld [vmem:[%s651 + $0xc8] sm:$0xff]
        %v1375 = vld [vmem:[%s651 + $0xd0] sm:$0xff]
        %v1376 = vld [vmem:[%s651 + $0xd8] sm:$0xff]
        %v1377 = vld [vmem:[%s651 + $0xe0] sm:$0xff]
        %v1378 = vld [vmem:[%s651 + $0xe8] sm:$0xff]
        %v1379 = vld [vmem:[%s651 + $0xf0] sm:$0xff]
        %v1380 = vld [vmem:[%s651 + $0xf8] sm:$0xff]
        %v1381 = vld [vmem:[%s655] sm:$0xf]
        %v1383 = vperm.slane %v1381, 0
        %v1384 = vperm.slane %v1381, 1
        %v1385 = vperm.slane %v1381, 2
        %v1386 = vperm.slane %v1381, 3
        %v1423 = vunpack.c.l.b16 %v1349
        %v1424 = vunpack.c.h.b16 %v1349
        %v1425 = vunpack.c.l.b16 %v1350
        %v1426 = vunpack.c.h.b16 %v1350
        %v1427 = vunpack.c.l.b16 %v1351
        %v1428 = vunpack.c.h.b16 %v1351
        %v1429 = vunpack.c.l.b16 %v1352
        %v1430 = vunpack.c.h.b16 %v1352
        %v1431 = vunpack.c.l.b16 %v1353
        %v1432 = vunpack.c.h.b16 %v1353
        %v1433 = vunpack.c.l.b16 %v1354
        %v1434 = vunpack.c.h.b16 %v1354
        %v1435 = vunpack.c.l.b16 %v1355
        %v1436 = vunpack.c.h.b16 %v1355
        %v1437 = vunpack.c.l.b16 %v1356
        %v1438 = vunpack.c.h.b16 %v1356
        %v1439 = vunpack.c.l.b16 %v1357
        %v1440 = vunpack.c.h.b16 %v1357
        %v1441 = vunpack.c.l.b16 %v1358
        %v1442 = vunpack.c.h.b16 %v1358
        %v1443 = vunpack.c.l.b16 %v1359
        %v1444 = vunpack.c.h.b16 %v1359
        %v1445 = vunpack.c.l.b16 %v1360
        %v1446 = vunpack.c.h.b16 %v1360
        %v1447 = vunpack.c.l.b16 %v1361
        %v1448 = vunpack.c.h.b16 %v1361
        %v1449 = vunpack.c.l.b16 %v1362
        %v1450 = vunpack.c.h.b16 %v1362
        %v1451 = vunpack.c.l.b16 %v1363
        %v1452 = vunpack.c.h.b16 %v1363
        %v1453 = vunpack.c.l.b16 %v1364
        %v1454 = vunpack.c.h.b16 %v1364
        %v1455 = vunpack.c.l.b16 %v1365
        %v1456 = vunpack.c.h.b16 %v1365
        %v1457 = vunpack.c.l.b16 %v1366
        %v1458 = vunpack.c.h.b16 %v1366
        %v1459 = vunpack.c.l.b16 %v1367
        %v1460 = vunpack.c.h.b16 %v1367
        %v1461 = vunpack.c.l.b16 %v1368
        %v1462 = vunpack.c.h.b16 %v1368
        %v1463 = vunpack.c.l.b16 %v1369
        %v1464 = vunpack.c.h.b16 %v1369
        %v1465 = vunpack.c.l.b16 %v1370
        %v1466 = vunpack.c.h.b16 %v1370
        %v1467 = vunpack.c.l.b16 %v1371
        %v1468 = vunpack.c.h.b16 %v1371
        %v1469 = vunpack.c.l.b16 %v1372
        %v1470 = vunpack.c.h.b16 %v1372
        %v1471 = vunpack.c.l.b16 %v1373
        %v1472 = vunpack.c.h.b16 %v1373
        %v1473 = vunpack.c.l.b16 %v1374
        %v1474 = vunpack.c.h.b16 %v1374
        %v1475 = vunpack.c.l.b16 %v1375
        %v1476 = vunpack.c.h.b16 %v1375
        %v1477 = vunpack.c.l.b16 %v1376
        %v1478 = vunpack.c.h.b16 %v1376
        %v1479 = vunpack.c.l.b16 %v1377
        %v1480 = vunpack.c.h.b16 %v1377
        %v1481 = vunpack.c.l.b16 %v1378
        %v1482 = vunpack.c.h.b16 %v1378
        %v1483 = vunpack.c.l.b16 %v1379
        %v1484 = vunpack.c.h.b16 %v1379
        %v1485 = vunpack.c.l.b16 %v1380
        %v1486 = vunpack.c.h.b16 %v1380
        %v1487 = vpack.c.b16 %v1427, %v1423
        %v1488 = vpack.c.b16 %v1428, %v1424
        %v1489 = vpack.c.b16 %v1429, %v1425
        %v1490 = vpack.c.b16 %v1430, %v1426
        %v1491 = vpack.c.b16 %v1435, %v1431
        %v1492 = vpack.c.b16 %v1436, %v1432
        %v1493 = vpack.c.b16 %v1437, %v1433
        %v1494 = vpack.c.b16 %v1438, %v1434
        %v1495 = vpack.c.b16 %v1443, %v1439
        %v1496 = vpack.c.b16 %v1444, %v1440
        %v1497 = vpack.c.b16 %v1445, %v1441
        %v1498 = vpack.c.b16 %v1446, %v1442
        %v1499 = vpack.c.b16 %v1451, %v1447
        %v1500 = vpack.c.b16 %v1452, %v1448
        %v1501 = vpack.c.b16 %v1453, %v1449
        %v1502 = vpack.c.b16 %v1454, %v1450
        %v1503 = vpack.c.b16 %v1459, %v1455
        %v1504 = vpack.c.b16 %v1460, %v1456
        %v1505 = vpack.c.b16 %v1461, %v1457
        %v1506 = vpack.c.b16 %v1462, %v1458
        %v1507 = vpack.c.b16 %v1467, %v1463
        %v1508 = vpack.c.b16 %v1468, %v1464
        %v1509 = vpack.c.b16 %v1469, %v1465
        %v1510 = vpack.c.b16 %v1470, %v1466
        %v1511 = vpack.c.b16 %v1475, %v1471
        %v1512 = vpack.c.b16 %v1476, %v1472
        %v1513 = vpack.c.b16 %v1477, %v1473
        %v1514 = vpack.c.b16 %v1478, %v1474
        %v1515 = vpack.c.b16 %v1483, %v1479
        %v1516 = vpack.c.b16 %v1484, %v1480
        %v1517 = vpack.c.b16 %v1485, %v1481
        %v1518 = vpack.c.b16 %v1486, %v1482
        %1551 = vmatpush.bf16.msra.mxu0 %v1515
        %1552 = vmatpush.bf16.msra.mxu0 %v1511
        %1553 = vmatpush.bf16.msra.mxu0 %v1507
        %1554 = vmatpush.bf16.msra.mxu0 %v1503
        %1555 = vmatpush.bf16.msra.mxu0 %v1499
        %1556 = vmatpush.bf16.msra.mxu0 %v1495
        %1557 = vmatpush.bf16.msra.mxu0 %v1491
        %1558 = vmatpush.bf16.msra.mxu0 %v1487
        %1559 = vmatmul.bf16.gmra.mxu0 %v1348
        %v1560 = vpop.f32.mrf.mxu0
        %v1561 = vadd.f32 %v1383, %v1560
        %v1562 = vpop.f32.mrf.mxu0
        %1563 = vdwg.mxu0
        %1564 = vmatpush.bf16.msra.mxu0 %v1516
        %1565 = vmatpush.bf16.msra.mxu0 %v1512
        %1566 = vmatpush.bf16.msra.mxu0 %v1508
        %1567 = vmatpush.bf16.msra.mxu0 %v1504
        %1568 = vmatpush.bf16.msra.mxu0 %v1500
        %1569 = vmatpush.bf16.msra.mxu0 %v1496
        %1570 = vmatpush.bf16.msra.mxu0 %v1492
        %1571 = vmatpush.bf16.msra.mxu0 %v1488
        %1572 = vmatmul.bf16.gmra.mxu0 %v1348
        %v1573 = vpop.f32.mrf.mxu0
        %v1574 = vadd.f32 %v1384, %v1573
        %v1575 = vpop.f32.mrf.mxu0
        %1576 = vdwg.mxu0
        %1577 = vmatpush.bf16.msra.mxu0 %v1517
        %1578 = vmatpush.bf16.msra.mxu0 %v1513
        %1579 = vmatpush.bf16.msra.mxu0 %v1509
        %1580 = vmatpush.bf16.msra.mxu0 %v1505
        %1581 = vmatpush.bf16.msra.mxu0 %v1501
        %1582 = vmatpush.bf16.msra.mxu0 %v1497
        %1583 = vmatpush.bf16.msra.mxu0 %v1493
        %1584 = vmatpush.bf16.msra.mxu0 %v1489
        %1585 = vmatmul.bf16.gmra.mxu0 %v1348
        %v1586 = vpop.f32.mrf.mxu0
        %v1587 = vadd.f32 %v1385, %v1586
        %v1588 = vpop.f32.mrf.mxu0
        %1589 = vdwg.mxu0
        %1590 = vmatpush.bf16.msra.mxu0 %v1518
        %1591 = vmatpush.bf16.msra.mxu0 %v1514
        %1592 = vmatpush.bf16.msra.mxu0 %v1510
        %1593 = vmatpush.bf16.msra.mxu0 %v1506
        %1594 = vmatpush.bf16.msra.mxu0 %v1502
        %1595 = vmatpush.bf16.msra.mxu0 %v1498
        %1596 = vmatpush.bf16.msra.mxu0 %v1494
        %1597 = vmatpush.bf16.msra.mxu0 %v1490
        %1598 = vmatmul.bf16.gmra.mxu0 %v1348
        %v1599 = vpop.f32.mrf.mxu0
        %v1600 = vadd.f32 %v1386, %v1599
        %v1601 = vpop.f32.mrf.mxu0
        %1602 = vdwg.mxu0
        %v1603 = vmul.f32 %v1561, %v1561
        %v1604 = vmul.f32 %v1574, %v1574
        %v1605 = vmul.f32 %v1587, %v1587
        %v1606 = vmul.f32 %v1600, %v1600
        %v1607 = vmul.f32 %v1561, %v1603
        %v1608 = vmul.f32 %v1574, %v1604
        %v1609 = vmul.f32 %v1587, %v1605
        %v1610 = vmul.f32 %v1600, %v1606
        %v1611 = vmul.f32 %v1607, 0.044715
        %v1612 = vmul.f32 %v1608, 0.044715
        %v1613 = vmul.f32 %v1609, 0.044715
        %v1614 = vmul.f32 %v1610, 0.044715
        %v1615 = vadd.f32 %v1561, %v1611
        %v1616 = vadd.f32 %v1574, %v1612
        %v1617 = vadd.f32 %v1587, %v1613
        %v1618 = vadd.f32 %v1600, %v1614
        %v1619 = vmul.f32 %v1615, 0.7978846
        %v1620 = vmul.f32 %v1616, 0.7978846
        %v1621 = vmul.f32 %v1617, 0.7978846
        %v1622 = vmul.f32 %v1618, 0.7978846
        %v1623 = vtanh.pop %v1619
        %v1624 = vtanh.pop %v1620
        %v1625 = vtanh.pop %v1621
        %v1626 = vtanh.pop %v1622
        %v1627 = vadd.f32 %v1623, 1.0
        %v1628 = vadd.f32 %v1624, 1.0
        %v1629 = vadd.f32 %v1625, 1.0
        %v1630 = vadd.f32 %v1626, 1.0
        %v1631 = vmul.f32 %v1627, 0.5
        %v1632 = vmul.f32 %v1628, 0.5
        %v1633 = vmul.f32 %v1629, 0.5
        %v1634 = vmul.f32 %v1630, 0.5
        %v1635 = vmul.f32 %v1561, %v1631
        %v1636 = vmul.f32 %v1574, %v1632
        %v1637 = vmul.f32 %v1587, %v1633
        %v1638 = vmul.f32 %v1600, %v1634
        %v1639 = vpack.c.bf16 %v1635, %v1635
        %v1640 = vpack.c.bf16 %v1636, %v1636
        %v1641 = vpack.c.bf16 %v1637, %v1637
        %v1642 = vpack.c.bf16 %v1638, %v1638
        %v1643 = vld [vmem:[%s660] sm:$0xf]
        %v1644 = vld [vmem:[%s660 + $0x4] sm:$0xf]
        %v1645 = vld [vmem:[%s660 + $0x8] sm:$0xf]
        %v1646 = vld [vmem:[%s660 + $0xc] sm:$0xf]
        %v1647 = vld [vmem:[%s660 + $0x10] sm:$0xf]
        %v1648 = vld [vmem:[%s660 + $0x14] sm:$0xf]
        %v1649 = vld [vmem:[%s660 + $0x18] sm:$0xf]
        %v1650 = vld [vmem:[%s660 + $0x1c] sm:$0xf]
        %v1651 = vld [vmem:[%s660 + $0x20] sm:$0xf]
        %v1652 = vld [vmem:[%s660 + $0x24] sm:$0xf]
        %v1653 = vld [vmem:[%s660 + $0x28] sm:$0xf]
        %v1654 = vld [vmem:[%s660 + $0x2c] sm:$0xf]
        %v1655 = vld [vmem:[%s660 + $0x30] sm:$0xf]
        %v1656 = vld [vmem:[%s660 + $0x34] sm:$0xf]
        %v1657 = vld [vmem:[%s660 + $0x38] sm:$0xf]
        %v1658 = vld [vmem:[%s660 + $0x3c] sm:$0xf]
        %v1659 = vld [vmem:[%s660 + $0x40] sm:$0xf]
        %v1660 = vld [vmem:[%s660 + $0x44] sm:$0xf]
        %v1661 = vld [vmem:[%s660 + $0x48] sm:$0xf]
        %v1662 = vld [vmem:[%s660 + $0x4c] sm:$0xf]
        %v1663 = vld [vmem:[%s660 + $0x50] sm:$0xf]
        %v1664 = vld [vmem:[%s660 + $0x54] sm:$0xf]
        %v1665 = vld [vmem:[%s660 + $0x58] sm:$0xf]
        %v1666 = vld [vmem:[%s660 + $0x5c] sm:$0xf]
        %v1667 = vld [vmem:[%s660 + $0x60] sm:$0xf]
        %v1668 = vld [vmem:[%s660 + $0x64] sm:$0xf]
        %v1669 = vld [vmem:[%s660 + $0x68] sm:$0xf]
        %v1670 = vld [vmem:[%s660 + $0x6c] sm:$0xf]
        %v1671 = vld [vmem:[%s660 + $0x70] sm:$0xf]
        %v1672 = vld [vmem:[%s660 + $0x74] sm:$0xf]
        %v1673 = vld [vmem:[%s660 + $0x78] sm:$0xf]
        %v1674 = vld [vmem:[%s660 + $0x7c] sm:$0xf]
        %v1675 = vld [vmem:[%s660 + $0x80] sm:$0xf]
        %v1676 = vld [vmem:[%s660 + $0x84] sm:$0xf]
        %v1677 = vld [vmem:[%s660 + $0x88] sm:$0xf]
        %v1678 = vld [vmem:[%s660 + $0x8c] sm:$0xf]
        %v1679 = vld [vmem:[%s660 + $0x90] sm:$0xf]
        %v1680 = vld [vmem:[%s660 + $0x94] sm:$0xf]
        %v1681 = vld [vmem:[%s660 + $0x98] sm:$0xf]
        %v1682 = vld [vmem:[%s660 + $0x9c] sm:$0xf]
        %v1683 = vld [vmem:[%s660 + $0xa0] sm:$0xf]
        %v1684 = vld [vmem:[%s660 + $0xa4] sm:$0xf]
        %v1685 = vld [vmem:[%s660 + $0xa8] sm:$0xf]
        %v1686 = vld [vmem:[%s660 + $0xac] sm:$0xf]
        %v1687 = vld [vmem:[%s660 + $0xb0] sm:$0xf]
        %v1688 = vld [vmem:[%s660 + $0xb4] sm:$0xf]
        %v1689 = vld [vmem:[%s660 + $0xb8] sm:$0xf]
        %v1690 = vld [vmem:[%s660 + $0xbc] sm:$0xf]
        %v1691 = vld [vmem:[%s660 + $0xc0] sm:$0xf]
        %v1692 = vld [vmem:[%s660 + $0xc4] sm:$0xf]
        %v1693 = vld [vmem:[%s660 + $0xc8] sm:$0xf]
        %v1694 = vld [vmem:[%s660 + $0xcc] sm:$0xf]
        %v1695 = vld [vmem:[%s660 + $0xd0] sm:$0xf]
        %v1696 = vld [vmem:[%s660 + $0xd4] sm:$0xf]
        %v1697 = vld [vmem:[%s660 + $0xd8] sm:$0xf]
        %v1698 = vld [vmem:[%s660 + $0xdc] sm:$0xf]
        %v1699 = vld [vmem:[%s660 + $0xe0] sm:$0xf]
        %v1700 = vld [vmem:[%s660 + $0xe4] sm:$0xf]
        %v1701 = vld [vmem:[%s660 + $0xe8] sm:$0xf]
        %v1702 = vld [vmem:[%s660 + $0xec] sm:$0xf]
        %v1703 = vld [vmem:[%s660 + $0xf0] sm:$0xf]
        %v1704 = vld [vmem:[%s660 + $0xf4] sm:$0xf]
        %v1705 = vld [vmem:[%s660 + $0xf8] sm:$0xf]
        %v1706 = vld [vmem:[%s660 + $0xfc] sm:$0xf]
        %v1707 = vld [vmem:[%s663] sm:$0x1]
        %v1709 = vperm.slane %v1707, 0
        %v1775 = vunpack.c.l.b16 %v1643
        %v1776 = vunpack.c.l.b16 %v1644
        %v1777 = vunpack.c.l.b16 %v1645
        %v1778 = vunpack.c.l.b16 %v1646
        %v1779 = vunpack.c.l.b16 %v1647
        %v1780 = vunpack.c.l.b16 %v1648
        %v1781 = vunpack.c.l.b16 %v1649
        %v1782 = vunpack.c.l.b16 %v1650
        %v1783 = vunpack.c.l.b16 %v1651
        %v1784 = vunpack.c.l.b16 %v1652
        %v1785 = vunpack.c.l.b16 %v1653
        %v1786 = vunpack.c.l.b16 %v1654
        %v1787 = vunpack.c.l.b16 %v1655
        %v1788 = vunpack.c.l.b16 %v1656
        %v1789 = vunpack.c.l.b16 %v1657
        %v1790 = vunpack.c.l.b16 %v1658
        %v1791 = vunpack.c.l.b16 %v1659
        %v1792 = vunpack.c.l.b16 %v1660
        %v1793 = vunpack.c.l.b16 %v1661
        %v1794 = vunpack.c.l.b16 %v1662
        %v1795 = vunpack.c.l.b16 %v1663
        %v1796 = vunpack.c.l.b16 %v1664
        %v1797 = vunpack.c.l.b16 %v1665
        %v1798 = vunpack.c.l.b16 %v1666
        %v1799 = vunpack.c.l.b16 %v1667
        %v1800 = vunpack.c.l.b16 %v1668
        %v1801 = vunpack.c.l.b16 %v1669
        %v1802 = vunpack.c.l.b16 %v1670
        %v1803 = vunpack.c.l.b16 %v1671
        %v1804 = vunpack.c.l.b16 %v1672
        %v1805 = vunpack.c.l.b16 %v1673
        %v1806 = vunpack.c.l.b16 %v1674
        %v1807 = vunpack.c.l.b16 %v1675
        %v1808 = vunpack.c.l.b16 %v1676
        %v1809 = vunpack.c.l.b16 %v1677
        %v1810 = vunpack.c.l.b16 %v1678
        %v1811 = vunpack.c.l.b16 %v1679
        %v1812 = vunpack.c.l.b16 %v1680
        %v1813 = vunpack.c.l.b16 %v1681
        %v1814 = vunpack.c.l.b16 %v1682
        %v1815 = vunpack.c.l.b16 %v1683
        %v1816 = vunpack.c.l.b16 %v1684
        %v1817 = vunpack.c.l.b16 %v1685
        %v1818 = vunpack.c.l.b16 %v1686
        %v1819 = vunpack.c.l.b16 %v1687
        %v1820 = vunpack.c.l.b16 %v1688
        %v1821 = vunpack.c.l.b16 %v1689
        %v1822 = vunpack.c.l.b16 %v1690
        %v1823 = vunpack.c.l.b16 %v1691
        %v1824 = vunpack.c.l.b16 %v1692
        %v1825 = vunpack.c.l.b16 %v1693
        %v1826 = vunpack.c.l.b16 %v1694
        %v1827 = vunpack.c.l.b16 %v1695
        %v1828 = vunpack.c.l.b16 %v1696
        %v1829 = vunpack.c.l.b16 %v1697
        %v1830 = vunpack.c.l.b16 %v1698
        %v1831 = vunpack.c.l.b16 %v1699
        %v1832 = vunpack.c.l.b16 %v1700
        %v1833 = vunpack.c.l.b16 %v1701
        %v1834 = vunpack.c.l.b16 %v1702
        %v1835 = vunpack.c.l.b16 %v1703
        %v1836 = vunpack.c.l.b16 %v1704
        %v1837 = vunpack.c.l.b16 %v1705
        %v1838 = vunpack.c.l.b16 %v1706
        %v1839 = vpack.c.b16 %v1776, %v1775
        %v1840 = vpack.c.b16 %v1778, %v1777
        %v1841 = vpack.c.b16 %v1780, %v1779
        %v1842 = vpack.c.b16 %v1782, %v1781
        %v1843 = vpack.c.b16 %v1784, %v1783
        %v1844 = vpack.c.b16 %v1786, %v1785
        %v1845 = vpack.c.b16 %v1788, %v1787
        %v1846 = vpack.c.b16 %v1790, %v1789
        %v1847 = vpack.c.b16 %v1792, %v1791
        %v1848 = vpack.c.b16 %v1794, %v1793
        %v1849 = vpack.c.b16 %v1796, %v1795
        %v1850 = vpack.c.b16 %v1798, %v1797
        %v1851 = vpack.c.b16 %v1800, %v1799
        %v1852 = vpack.c.b16 %v1802, %v1801
        %v1853 = vpack.c.b16 %v1804, %v1803
        %v1854 = vpack.c.b16 %v1806, %v1805
        %v1855 = vpack.c.b16 %v1808, %v1807
        %v1856 = vpack.c.b16 %v1810, %v1809
        %v1857 = vpack.c.b16 %v1812, %v1811
        %v1858 = vpack.c.b16 %v1814, %v1813
        %v1859 = vpack.c.b16 %v1816, %v1815
        %v1860 = vpack.c.b16 %v1818, %v1817
        %v1861 = vpack.c.b16 %v1820, %v1819
        %v1862 = vpack.c.b16 %v1822, %v1821
        %v1863 = vpack.c.b16 %v1824, %v1823
        %v1864 = vpack.c.b16 %v1826, %v1825
        %v1865 = vpack.c.b16 %v1828, %v1827
        %v1866 = vpack.c.b16 %v1830, %v1829
        %v1867 = vpack.c.b16 %v1832, %v1831
        %v1868 = vpack.c.b16 %v1834, %v1833
        %v1869 = vpack.c.b16 %v1836, %v1835
        %v1870 = vpack.c.b16 %v1838, %v1837
        %1903 = vmatpush.bf16.msra.mxu0 %v1846
        %1904 = vmatpush.bf16.msra.mxu0 %v1845
        %1905 = vmatpush.bf16.msra.mxu0 %v1844
        %1906 = vmatpush.bf16.msra.mxu0 %v1843
        %1907 = vmatpush.bf16.msra.mxu0 %v1842
        %1908 = vmatpush.bf16.msra.mxu0 %v1841
        %1909 = vmatpush.bf16.msra.mxu0 %v1840
        %1910 = vmatpush.bf16.msra.mxu0 %v1839
        %1911 = vmatmul.bf16.gmra.mxu0 %v1639
        %v1912 = vpop.f32.mrf.mxu0
        %v1913 = vadd.f32 %v1709, %v1912
        %v1914 = vpop.f32.mrf.mxu0
        %1915 = vdwg.mxu0
        %1916 = vmatpush.bf16.msra.mxu0 %v1854
        %1917 = vmatpush.bf16.msra.mxu0 %v1853
        %1918 = vmatpush.bf16.msra.mxu0 %v1852
        %1919 = vmatpush.bf16.msra.mxu0 %v1851
        %1920 = vmatpush.bf16.msra.mxu0 %v1850
        %1921 = vmatpush.bf16.msra.mxu0 %v1849
        %1922 = vmatpush.bf16.msra.mxu0 %v1848
        %1923 = vmatpush.bf16.msra.mxu0 %v1847
        %1924 = vmatmul.bf16.gmra.mxu0 %v1640
        %v1925 = vpop.f32.mrf.mxu0
        %v1926 = vadd.f32 %v1913, %v1925
        %v1927 = vpop.f32.mrf.mxu0
        %1928 = vdwg.mxu0
        %1929 = vmatpush.bf16.msra.mxu0 %v1862
        %1930 = vmatpush.bf16.msra.mxu0 %v1861
        %1931 = vmatpush.bf16.msra.mxu0 %v1860
        %1932 = vmatpush.bf16.msra.mxu0 %v1859
        %1933 = vmatpush.bf16.msra.mxu0 %v1858
        %1934 = vmatpush.bf16.msra.mxu0 %v1857
        %1935 = vmatpush.bf16.msra.mxu0 %v1856
        %1936 = vmatpush.bf16.msra.mxu0 %v1855
        %1937 = vmatmul.bf16.gmra.mxu0 %v1641
        %v1938 = vpop.f32.mrf.mxu0
        %v1939 = vadd.f32 %v1926, %v1938
        %v1940 = vpop.f32.mrf.mxu0
        %1941 = vdwg.mxu0
        %1942 = vmatpush.bf16.msra.mxu0 %v1870
        %1943 = vmatpush.bf16.msra.mxu0 %v1869
        %1944 = vmatpush.bf16.msra.mxu0 %v1868
        %1945 = vmatpush.bf16.msra.mxu0 %v1867
        %1946 = vmatpush.bf16.msra.mxu0 %v1866
        %1947 = vmatpush.bf16.msra.mxu0 %v1865
        %1948 = vmatpush.bf16.msra.mxu0 %v1864
        %1949 = vmatpush.bf16.msra.mxu0 %v1863
        %1950 = vmatmul.bf16.gmra.mxu0 %v1642
        %v1951 = vpop.f32.mrf.mxu0
        %v1952 = vadd.f32 %v1939, %v1951
        %v1953 = vpop.f32.mrf.mxu0
        %1954 = vdwg.mxu0
        %v1955 = vadd.f32 %v1317, %v1952
        %1956 = vst [vmem:[%s678] sm:$0xff] %v1955
        %1957 = vst [vmem:[%s667] sm:$0xff] %v1955
        %p1958 = scmp.lt.s32.totalorder %s32, 1
        %s1959 = scalar_select %p1958, %s32, 1
        %s1960 = smul.addr %s1959, 8
        %s1961 = scalar_lea.vmem %s13, %s1960
        // Predicated region
        $region81: #{cxr_forward.6} parent=71 // pred_check
          %p1962 = pneg %p395
        $region82: #{cxr_forward.6} parent=71 // pred_check_branch
          %1964 = sbr.rel (%p1962) target = $region84
        $region83: #{cxr_forward.6} parent=71 // pred_region
          _
        $region84: #{cxr_forward.6} parent=71 // pred_fallthru
          _
      $region72: #{cxr_forward.6} parent=5 // pred_fallthru
        _
      %p1965 = scmp.le.s32.totalorder 2, %s22
      // Predicated region
      $region85: #{cxr_forward.6} parent=5 // pred_check
        %p1966 = pneg %p1965
      $region86: #{cxr_forward.6} parent=5 // pred_check_branch
        %1968 = sbr.rel (%p1966) target = $region88
      $region87: #{cxr_forward.6} parent=5 // pred_region
        %s1969 = ssub.s32 %s22, 2
        // Predicated region
        $region89: #{cxr_forward.6} parent=87 // pred_check
          %p1970 = pneg %p401
        $region90: #{cxr_forward.6} parent=87 // pred_check_branch
          %1972 = sbr.rel (%p1970) target = $region92
        $region91: #{cxr_forward.6} parent=87 // pred_region
          %p1973 = scmp.lt.s32.totalorder %s34, 1
          %s1974 = scalar_select %p1973, %s34, 1
          %s1975 = smul.addr %s1974, 8
          %s1976 = scalar_lea.vmem %s13, %s1975
        $region92: #{cxr_forward.6} parent=87 // pred_fallthru
          _
      $region88: #{cxr_forward.6} parent=5 // pred_fallthru
        _
    $region6: #{cxr_forward.6} parent=1 // loop_footer
      %s26 = sadd.s32 1, %s22
    $region7: #{cxr_forward.6} parent=1 // loop_footer_branch
      %21 = sbr.rel target = $region3
    $region8: #{cxr_forward.6} parent=1 // loop_exit
      _
    %1977 = vsyncpa [#allocation4], 1
    %s1978 = scalar_lea.sflag [#allocation4], 1
    %1979 = vsyncpa %s1978, 1

</llo_original>
